<compile_context>
chip_gen: v7x
topology: tpu7x:2x2x1
jax: 0.10.0
libtpu: 0.0.40
codegen_flags: <defaults>
</compile_context>

<pallas_src>
import jax
import jax.numpy as jnp
from jax import lax
from jax.experimental import pallas as pl
from jax.experimental.pallas import tpu as pltpu


# ----------------------------------------------------------------------------
# Fused Pallas kernel:
#   pot = Re( Wx_big @ ((K .* X) @ Wy) )
# where K already contains the fftshift phase and the 1/(SX*SY) normalisation.
# ----------------------------------------------------------------------------
def _wall_fused_kernel(k_ref, wy_ref, wxb_ref, x_ref, o_ref):
    # k_ref  : (2, NR, SY)  kernel FFT planes, pre-tiled over B*C channels
    # wy_ref : (2, SY, SY)  inverse-DFT matrix along SY (right multiply)
    # wxb_ref: (2, NR, NR)  block-diag inverse-DFT matrix along SX (left multiply)
    # x_ref  : (2, NR, SY)  input FFT planes (real / imag), NR = B*C*SX
    # o_ref  : (NR, SY)     real potential
    kr, ki = k_ref[0], k_ref[1]
    xr, xi = x_ref[0], x_ref[1]

    # pot_fft = K * X  (elementwise complex multiply; pure VPU, same-shape operands)
    pr = kr * xr - ki * xi
    pi = kr * xi + ki * xr

    # f32 MXU matmuls with full-precision accumulation (keeps 1e-4 tolerance).
    dot = lambda a, b: jnp.dot(a, b, preferred_element_type=jnp.float32,
                               precision=lax.Precision.HIGHEST)

    # inverse DFT along the last (SY) axis:  T = P @ Wy
    wyr, wyi = wy_ref[0], wy_ref[1]
    tr = dot(pr, wyr) - dot(pi, wyi)
    ti = dot(pr, wyi) + dot(pi, wyr)

    # inverse DFT along SX (block-diag over channels) + real part:
    #   pot = Re(Wx_big @ T) = Wxr @ Tr - Wxi @ Ti
    wxr, wxi = wxb_ref[0], wxb_ref[1]
    o_ref[...] = dot(wxr, tr) - dot(wxi, ti)


# ----------------------------------------------------------------------------
# Deterministic parameter construction (mirror of Kernel_wall.compute_kernel())
# ----------------------------------------------------------------------------
def build_wall_kernel(SX, SY):
    x = jnp.arange(SX)
    y = jnp.arange(SY)
    xx = jnp.tile(x[:, None], (1, SY))
    yy = jnp.tile(y[None, :], (SX, 1))
    X = (xx - SX // 2).astype(jnp.float32)
    Y = (yy - SY // 2).astype(jnp.float32)
    D = jnp.sqrt(X ** 2 + Y ** 2) / 4.0

    # ker_c(D, a=[0,0,0], w=[0.5,0.1,0.1], b=[1,0,0])
    a = jnp.array([0.0, 0.0, 0.0], jnp.float32)
    w = jnp.array([0.5, 0.1, 0.1], jnp.float32)
    b = jnp.array([1.0, 0.0, 0.0], jnp.float32)
    kc = (b * jnp.exp(-(((D[..., None] - a) / w) ** 2) / 2.0)).sum(-1)

    kern = jax.nn.sigmoid(-(D - 1.0) * 10.0) * kc
    kern = kern / jnp.sum(kern)
    return kern  # (SX, SY)


def prepare_wall_constants(kern, C, B=1):
    """One-time precompute (== the torch module __init__).

    Returns:
      kri : (2, B*C*SX, SY)  kernel FFT planes, channel-tiled, with the two
                             post-irfft roll_n shifts (shift theorem, valid for
                             any SX/SY) and the 1/(SX*SY) irfft normalisation
                             folded in.
      wy  : (2, SY, SY)      Wy[v, n]       = exp(2*pi*i*v*n/SY)  (real, imag)
      wxb : (2, NR, NR)      kron(I_{B*C}, Wx), Wx[m, u] = exp(2*pi*i*u*m/SX)
    """
    SX, SY = kern.shape
    NR = B * C * SX

    # TODO(synk): the one-time torch.rfft of the constant kernel has no Pallas
    #             primitive; it stays as jnp.fft glue at init (not in forward).
    Kc = jnp.fft.fft2(kern)
    u = jnp.arange(SX)[:, None].astype(jnp.float32)
    v = jnp.arange(SY)[None, :].astype(jnp.float32)
    phase = jnp.exp(2j * jnp.pi * (u * (SX // 2) / SX + v * (SY // 2) / SY))
    Kc = Kc * phase / float(SX * SY)          # fold fftshift + irfft normalisation
    kr = jnp.tile(Kc.real.astype(jnp.float32), (B * C, 1))   # (NR, SY)
    ki = jnp.tile(Kc.imag.astype(jnp.float32), (B * C, 1))
    kri = jnp.stack([kr, ki], axis=0)                        # (2, NR, SY)

    # Un-normalised inverse-DFT matrices (normalisation already in K).
    mx = jnp.arange(SX, dtype=jnp.float32)
    my = jnp.arange(SY, dtype=jnp.float32)
    ang_x = 2.0 * jnp.pi * jnp.outer(mx, mx) / SX            # Wx[m, u]
    ang_y = 2.0 * jnp.pi * jnp.outer(my, my) / SY            # Wy[v, n]
    wy = jnp.stack([jnp.cos(ang_y), jnp.sin(ang_y)], axis=0).astype(jnp.float32)
    eye = jnp.eye(B * C, dtype=jnp.float32)
    wxb = jnp.stack([jnp.kron(eye, jnp.cos(ang_x)),
                     jnp.kron(eye, jnp.sin(ang_x))], axis=0).astype(jnp.float32)
    assert wxb.shape == (2, NR, NR)
    return kri, wy, wxb


# ----------------------------------------------------------------------------
# forward(X_fft) — matches Kernel_wall.forward semantics
#   X_fft: (B, C, SX, SY, 2) float32 in the old torch.rfft(onesided=False) layout
#   returns pot of shape (C, SX, SY)  (B == 1, squeezed like the torch module)
# ----------------------------------------------------------------------------
def kernel_wall_forward(kri, wy, wxb, x_fft_ri):
    B, C, SX, SY, _ = x_fft_ri.shape
    NR = B * C * SX

    # Single deinterleave of the (..., 2) layout into one stacked planar array:
    # one XLA copy, one input DMA into the pallas_call.
    x = jnp.moveaxis(x_fft_ri, -1, 0).reshape(2, NR, SY)

    vmem = pl.BlockSpec(memory_space=pltpu.MemorySpace.VMEM)
    pot = pl.pallas_call(
        _wall_fused_kernel,
        out_shape=jax.ShapeDtypeStruct((NR, SY), jnp.float32),
        in_specs=[vmem, vmem, vmem, vmem],
        out_specs=vmem,
    )(kri, wy, wxb, x)

    # (B*C*SX, SY) -> (C, SX, SY); roll_n shifts are pre-baked, B == 1 squeezed.
    return pot.reshape(B, C, SX, SY)[0]


if __name__ == "__main__":
    SX, SY = 16, 16
    B, C = 1, 4

    key = jax.random.PRNGKey(0)
    X = jax.random.normal(key, (B, C, SX, SY), dtype=jnp.float32)

    # X_fft in the old torch.rfft(onesided=False) layout: (B, C, SX, SY, 2)
    Xc = jnp.fft.fft2(X, axes=(-2, -1))
    X_fft = jnp.stack([Xc.real, Xc.imag], axis=-1).astype(jnp.float32)

    # Module "init": wall kernel + fused constants (shift-folded, channel-tiled).
    kern = build_wall_kernel(SX, SY)
    kri, wy, wxb = prepare_wall_constants(kern, C, B)

    fwd = jax.jit(kernel_wall_forward)
    out = jax.block_until_ready(fwd(kri, wy, wxb, X_fft))

    # Faithful pure-JAX reference of the torch module (unshifted K, explicit rolls).
    Kc = jnp.fft.fft2(kern)
    ref = jnp.fft.ifft2(Kc[None, None] * Xc, axes=(-2, -1)).real
    ref = jnp.roll(jnp.roll(ref, -(SX // 2), axis=2), -(SY // 2), axis=3)[0]
    ref = ref.astype(jnp.float32)

    assert out.shape == (C, SX, SY), out.shape
    assert jnp.allclose(out, ref, atol=1e-4, rtol=1e-4), \
        float(jnp.max(jnp.abs(out - ref)))
    print("KERNEL_OK")
</pallas_src>

<mosaic_0001>
module attributes {stable_mosaic.version = 11 : i64} {
  func.func @_wall_fused_kernel(%arg0: memref<2x64x16xf32, #tpu.memory_space<vmem>>, %arg1: memref<2x16x16xf32, #tpu.memory_space<vmem>>, %arg2: memref<2x64x64xf32, #tpu.memory_space<vmem>>, %arg3: memref<2x64x16xf32, #tpu.memory_space<vmem>>, %arg4: memref<64x16xf32, #tpu.memory_space<vmem>>) attributes {dimension_semantics = [], scalar_prefetch = 0 : i64, scratch_operands = 0 : i64, tpu.core_type = #tpu.core_type<tc>} {
    %c0 = arith.constant 0 : index
    %c0_0 = arith.constant 0 : index
    %c0_1 = arith.constant 0 : index
    %0 = vector.load %arg0[%c0, %c0_0, %c0_1] : memref<2x64x16xf32, #tpu.memory_space<vmem>>, vector<1x64x16xf32>
    %1 = vector.shape_cast %0 : vector<1x64x16xf32> to vector<64x16xf32>
    %c1 = arith.constant 1 : index
    %c0_2 = arith.constant 0 : index
    %c0_3 = arith.constant 0 : index
    %2 = vector.load %arg0[%c1, %c0_2, %c0_3] : memref<2x64x16xf32, #tpu.memory_space<vmem>>, vector<1x64x16xf32>
    %3 = vector.shape_cast %2 : vector<1x64x16xf32> to vector<64x16xf32>
    %c0_4 = arith.constant 0 : index
    %c0_5 = arith.constant 0 : index
    %c0_6 = arith.constant 0 : index
    %4 = vector.load %arg3[%c0_4, %c0_5, %c0_6] : memref<2x64x16xf32, #tpu.memory_space<vmem>>, vector<1x64x16xf32>
    %5 = vector.shape_cast %4 : vector<1x64x16xf32> to vector<64x16xf32>
    %c1_7 = arith.constant 1 : index
    %c0_8 = arith.constant 0 : index
    %c0_9 = arith.constant 0 : index
    %6 = vector.load %arg3[%c1_7, %c0_8, %c0_9] : memref<2x64x16xf32, #tpu.memory_space<vmem>>, vector<1x64x16xf32>
    %7 = vector.shape_cast %6 : vector<1x64x16xf32> to vector<64x16xf32>
    %8 = arith.mulf %1, %5 : vector<64x16xf32>
    %9 = arith.mulf %3, %7 : vector<64x16xf32>
    %10 = arith.subf %8, %9 : vector<64x16xf32>
    %11 = arith.mulf %1, %7 : vector<64x16xf32>
    %12 = arith.mulf %3, %5 : vector<64x16xf32>
    %13 = arith.addf %11, %12 : vector<64x16xf32>
    %c0_10 = arith.constant 0 : index
    %c0_11 = arith.constant 0 : index
    %c0_12 = arith.constant 0 : index
    %14 = vector.load %arg1[%c0_10, %c0_11, %c0_12] : memref<2x16x16xf32, #tpu.memory_space<vmem>>, vector<1x16x16xf32>
    %15 = vector.shape_cast %14 : vector<1x16x16xf32> to vector<16x16xf32>
    %c1_13 = arith.constant 1 : index
    %c0_14 = arith.constant 0 : index
    %c0_15 = arith.constant 0 : index
    %16 = vector.load %arg1[%c1_13, %c0_14, %c0_15] : memref<2x16x16xf32, #tpu.memory_space<vmem>>, vector<1x16x16xf32>
    %17 = vector.shape_cast %16 : vector<1x16x16xf32> to vector<16x16xf32>
    %cst = arith.constant dense<0.000000e+00> : vector<64x16xf32>
    %18 = tpu.matmul %10, %15, %cst {dimension_numbers = #tpu.dot_dimension_numbers<[1], [0], [0], [1], [0, 0, 1, 1], [], []>, precision = #tpu.contract_precision<fp32>} : vector<64x16xf32>, vector<16x16xf32>, vector<64x16xf32> -> vector<64x16xf32>
    %cst_16 = arith.constant dense<0.000000e+00> : vector<64x16xf32>
    %19 = tpu.matmul %13, %17, %cst_16 {dimension_numbers = #tpu.dot_dimension_numbers<[1], [0], [0], [1], [0, 0, 1, 1], [], []>, precision = #tpu.contract_precision<fp32>} : vector<64x16xf32>, vector<16x16xf32>, vector<64x16xf32> -> vector<64x16xf32>
    %20 = arith.subf %18, %19 : vector<64x16xf32>
    %cst_17 = arith.constant dense<0.000000e+00> : vector<64x16xf32>
    %21 = tpu.matmul %10, %17, %cst_17 {dimension_numbers = #tpu.dot_dimension_numbers<[1], [0], [0], [1], [0, 0, 1, 1], [], []>, precision = #tpu.contract_precision<fp32>} : vector<64x16xf32>, vector<16x16xf32>, vector<64x16xf32> -> vector<64x16xf32>
    %cst_18 = arith.constant dense<0.000000e+00> : vector<64x16xf32>
    %22 = tpu.matmul %13, %15, %cst_18 {dimension_numbers = #tpu.dot_dimension_numbers<[1], [0], [0], [1], [0, 0, 1, 1], [], []>, precision = #tpu.contract_precision<fp32>} : vector<64x16xf32>, vector<16x16xf32>, vector<64x16xf32> -> vector<64x16xf32>
    %23 = arith.addf %21, %22 : vector<64x16xf32>
    %c0_19 = arith.constant 0 : index
    %c0_20 = arith.constant 0 : index
    %c0_21 = arith.constant 0 : index
    %24 = vector.load %arg2[%c0_19, %c0_20, %c0_21] : memref<2x64x64xf32, #tpu.memory_space<vmem>>, vector<1x64x64xf32>
    %25 = vector.shape_cast %24 : vector<1x64x64xf32> to vector<64x64xf32>
    %c1_22 = arith.constant 1 : index
    %c0_23 = arith.constant 0 : index
    %c0_24 = arith.constant 0 : index
    %26 = vector.load %arg2[%c1_22, %c0_23, %c0_24] : memref<2x64x64xf32, #tpu.memory_space<vmem>>, vector<1x64x64xf32>
    %27 = vector.shape_cast %26 : vector<1x64x64xf32> to vector<64x64xf32>
    %cst_25 = arith.constant dense<0.000000e+00> : vector<64x16xf32>
    %28 = tpu.matmul %25, %20, %cst_25 {dimension_numbers = #tpu.dot_dimension_numbers<[1], [0], [0], [1], [0, 0, 1, 1], [], []>, precision = #tpu.contract_precision<fp32>} : vector<64x64xf32>, vector<64x16xf32>, vector<64x16xf32> -> vector<64x16xf32>
    %cst_26 = arith.constant dense<0.000000e+00> : vector<64x16xf32>
    %29 = tpu.matmul %27, %23, %cst_26 {dimension_numbers = #tpu.dot_dimension_numbers<[1], [0], [0], [1], [0, 0, 1, 1], [], []>, precision = #tpu.contract_precision<fp32>} : vector<64x64xf32>, vector<64x16xf32>, vector<64x16xf32> -> vector<64x16xf32>
    %30 = arith.subf %28, %29 : vector<64x16xf32>
    %c0_27 = arith.constant 0 : index
    %c0_28 = arith.constant 0 : index
    %31 = vector.load %arg4[%c0_27, %c0_28] : memref<64x16xf32, #tpu.memory_space<vmem>>, vector<64x16xf32>
    tpu.vector_store %arg4[%c0_27, %c0_28], %30 {strides = array<i32>} : memref<64x16xf32, #tpu.memory_space<vmem>>, vector<64x16xf32>,
    return
  }
}

</mosaic_0001>

<llo_original>
// kernel: kernel_wall_forward.1
$region0: #{kernel_wall_forward.1}
  #allocation0 [shape = 'u32[]', space=smem, size = 0x4, offset = 0x4, fixed_abs, tag = 'smem constant byte address 0x4 - core index']
  #allocation1 [shape = 'u32[144,128]{1,0:T(1,128)}', space=vmem, size = 0x12000, scoped, tag = 'internal scratch']
  %s0 = inlined_call_operand.vmem [shape: f32[2,64,16], index: 0, kind: input, shape index: {}]
  %s1 = inlined_call_operand.vmem [shape: f32[2,16,16], index: 1, kind: input, shape index: {}]
  %s2 = inlined_call_operand.vmem [shape: f32[2,64,64], index: 2, kind: input, shape index: {}]
  %s3 = inlined_call_operand.vmem [shape: f32[2,64,16], index: 3, kind: input, shape index: {}]
  %s4 = inlined_call_operand.hbm [shape: f32[64,16], index: 4, kind: output, shape index: {}]
  %s5 = sld [smem:[#allocation0]]
  $region26: #{kernel_wall_forward.1} parent=0
    _
  %s7 = ssub.s32 1, %s5
  %s8 = scalar_select 0, %s7, %s5
  $region1: #{kernel_wall_forward.1} parent=0
    #allocation2 [shape = 'u8[32768]{0}', space=vmem, size = 0x8000, scoped, tag = 'output window, operand 0, single buffered']
    #allocation3 [shape = 's32[1]{0}', space=sflag, size = 0x4, scoped, tag = 'scoped memory for kernel_wall_forward.1']
    %9 = vsyncpa [#allocation3], 0
    // Predicated region
    $region2: #{kernel_wall_forward.1} parent=1 // pred_check
      _
    $region3: #{kernel_wall_forward.1} parent=1 // pred_check_branch
      %11 = sbr.rel (0) target = $region5
    $region4: #{kernel_wall_forward.1} parent=1 // pred_region
      _
    $region5: #{kernel_wall_forward.1} parent=1 // pred_fallthru
      _
    // Predicated region
    $region6: #{kernel_wall_forward.1} parent=1 // pred_check
      _
    $region7: #{kernel_wall_forward.1} parent=1 // pred_check_branch
      %13 = sbr.rel (0) target = $region9
    $region8: #{kernel_wall_forward.1} parent=1 // pred_region
      _
    $region9: #{kernel_wall_forward.1} parent=1 // pred_fallthru
      _
    // Predicated region
    $region10: #{kernel_wall_forward.1} parent=1 // pred_check
      _
    $region11: #{kernel_wall_forward.1} parent=1 // pred_check_branch
      %15 = sbr.rel (0) target = $region13
    $region12: #{kernel_wall_forward.1} parent=1 // pred_region
      _
    $region13: #{kernel_wall_forward.1} parent=1 // pred_fallthru
      _
    // Predicated region
    $region14: #{kernel_wall_forward.1} parent=1 // pred_check
      _
    $region15: #{kernel_wall_forward.1} parent=1 // pred_check_branch
      %17 = sbr.rel (0) target = $region17
    $region16: #{kernel_wall_forward.1} parent=1 // pred_region
      _
    $region17: #{kernel_wall_forward.1} parent=1 // pred_fallthru
      _
    %v18 = vld [vmem:[%s0] sm:$0xff]
    %v19 = vld [vmem:[%s0 + $0x8] sm:$0xff]
    %v20 = vld [vmem:[%s0 + $0x10] sm:$0xff]
    %v21 = vld [vmem:[%s0 + $0x18] sm:$0xff]
    %v22 = vld [vmem:[%s0 + $0x20] sm:$0xff]
    %v23 = vld [vmem:[%s0 + $0x28] sm:$0xff]
    %v24 = vld [vmem:[%s0 + $0x30] sm:$0xff]
    %v25 = vld [vmem:[%s0 + $0x38] sm:$0xff]
    %s26 = scalar_lea.vmem %s0, 64
    %v27 = vld [vmem:[%s26] sm:$0xff]
    %v28 = vld [vmem:[%s26 + $0x8] sm:$0xff]
    %v29 = vld [vmem:[%s26 + $0x10] sm:$0xff]
    %v30 = vld [vmem:[%s26 + $0x18] sm:$0xff]
    %v31 = vld [vmem:[%s26 + $0x20] sm:$0xff]
    %v32 = vld [vmem:[%s26 + $0x28] sm:$0xff]
    %v33 = vld [vmem:[%s26 + $0x30] sm:$0xff]
    %v34 = vld [vmem:[%s26 + $0x38] sm:$0xff]
    %v35 = vld [vmem:[%s3] sm:$0xff]
    %v36 = vld [vmem:[%s3 + $0x8] sm:$0xff]
    %v37 = vld [vmem:[%s3 + $0x10] sm:$0xff]
    %v38 = vld [vmem:[%s3 + $0x18] sm:$0xff]
    %v39 = vld [vmem:[%s3 + $0x20] sm:$0xff]
    %v40 = vld [vmem:[%s3 + $0x28] sm:$0xff]
    %v41 = vld [vmem:[%s3 + $0x30] sm:$0xff]
    %v42 = vld [vmem:[%s3 + $0x38] sm:$0xff]
    %s43 = scalar_lea.vmem %s3, 64
    %v44 = vld [vmem:[%s43] sm:$0xff]
    %v45 = vld [vmem:[%s43 + $0x8] sm:$0xff]
    %v46 = vld [vmem:[%s43 + $0x10] sm:$0xff]
    %v47 = vld [vmem:[%s43 + $0x18] sm:$0xff]
    %v48 = vld [vmem:[%s43 + $0x20] sm:$0xff]
    %v49 = vld [vmem:[%s43 + $0x28] sm:$0xff]
    %v50 = vld [vmem:[%s43 + $0x30] sm:$0xff]
    %v51 = vld [vmem:[%s43 + $0x38] sm:$0xff]
    %v52 = vmul.f32 %v18, %v35
    %v53 = vmul.f32 %v19, %v36
    %v54 = vmul.f32 %v20, %v37
    %v55 = vmul.f32 %v21, %v38
    %v56 = vmul.f32 %v22, %v39
    %v57 = vmul.f32 %v23, %v40
    %v58 = vmul.f32 %v24, %v41
    %v59 = vmul.f32 %v25, %v42
    %v60 = vmul.f32 %v27, %v44
    %v61 = vmul.f32 %v28, %v45
    %v62 = vmul.f32 %v29, %v46
    %v63 = vmul.f32 %v30, %v47
    %v64 = vmul.f32 %v31, %v48
    %v65 = vmul.f32 %v32, %v49
    %v66 = vmul.f32 %v33, %v50
    %v67 = vmul.f32 %v34, %v51
    %v68 = vsub.f32 %v52, %v60
    %v69 = vsub.f32 %v53, %v61
    %v70 = vsub.f32 %v54, %v62
    %v71 = vsub.f32 %v55, %v63
    %v72 = vsub.f32 %v56, %v64
    %v73 = vsub.f32 %v57, %v65
    %v74 = vsub.f32 %v58, %v66
    %v75 = vsub.f32 %v59, %v67
    %v76 = vmul.f32 %v18, %v44
    %v77 = vmul.f32 %v19, %v45
    %v78 = vmul.f32 %v20, %v46
    %v79 = vmul.f32 %v21, %v47
    %v80 = vmul.f32 %v22, %v48
    %v81 = vmul.f32 %v23, %v49
    %v82 = vmul.f32 %v24, %v50
    %v83 = vmul.f32 %v25, %v51
    %v84 = vmul.f32 %v27, %v35
    %v85 = vmul.f32 %v28, %v36
    %v86 = vmul.f32 %v29, %v37
    %v87 = vmul.f32 %v30, %v38
    %v88 = vmul.f32 %v31, %v39
    %v89 = vmul.f32 %v32, %v40
    %v90 = vmul.f32 %v33, %v41
    %v91 = vmul.f32 %v34, %v42
    %v92 = vadd.f32 %v76, %v84
    %v93 = vadd.f32 %v77, %v85
    %v94 = vadd.f32 %v78, %v86
    %v95 = vadd.f32 %v79, %v87
    %v96 = vadd.f32 %v80, %v88
    %v97 = vadd.f32 %v81, %v89
    %v98 = vadd.f32 %v82, %v90
    %v99 = vadd.f32 %v83, %v91
    %v100 = vld [vmem:[%s1] sm:$0xff]
    %v101 = vld [vmem:[%s1 + $0x8] sm:$0xff]
    %s102 = scalar_lea.vmem %s1, 16
    %v103 = vld [vmem:[%s102] sm:$0xff]
    %v104 = vld [vmem:[%s102 + $0x8] sm:$0xff]
    %vm105 = vcmask 130048
    %v107 = vsel %vm105, %v68, 0
    %v110 = vsel %vm105, %v69, 0
    %v113 = vsel %vm105, %v70, 0
    %v116 = vsel %vm105, %v71, 0
    %v119 = vsel %vm105, %v72, 0
    %v122 = vsel %vm105, %v73, 0
    %v125 = vsel %vm105, %v74, 0
    %v128 = vsel %vm105, %v75, 0
    %130 = vmatprep.subr.mxu0 0.0
    %v131 = vand.u32 %v100, 4294901760
    %132 = vmatpush1.msra.mxu0 %v131
    %133 = vmatprep.subr.mxu0 0.0
    %v134 = vand.u32 %v101, 4294901760
    %135 = vmatpush1.msra.mxu0 %v134
    %136 = vmatprep.subr.mxu0 0.0
    %137 = vmatpush1.msra.mxu0 0.0
    %138 = vmatprep.subr.mxu0 0.0
    %139 = vmatpush1.msra.mxu0 0.0
    %140 = vmatprep.subr.mxu0 0.0
    %141 = vmatpush1.msra.mxu0 0.0
    %142 = vmatprep.subr.mxu0 0.0
    %143 = vmatpush1.msra.mxu0 0.0
    %144 = vmatprep.subr.mxu0 0.0
    %145 = vmatpush1.msra.mxu0 0.0
    %146 = vmatprep.subr.mxu0 0.0
    %147 = vmatpush1.msra.mxu0 0.0
    %148 = vmatprep.subr.mxu0 0.0
    %149 = vmatpush1.msra.mxu0 0.0
    %150 = vmatprep.subr.mxu0 0.0
    %151 = vmatpush1.msra.mxu0 0.0
    %152 = vmatprep.subr.mxu0 0.0
    %153 = vmatpush1.msra.mxu0 0.0
    %154 = vmatprep.subr.mxu0 0.0
    %155 = vmatpush1.msra.mxu0 0.0
    %156 = vmatprep.subr.mxu0 0.0
    %157 = vmatpush1.msra.mxu0 0.0
    %158 = vmatprep.subr.mxu0 0.0
    %159 = vmatpush1.msra.mxu0 0.0
    %160 = vmatprep.subr.mxu0 0.0
    %161 = vmatpush1.msra.mxu0 0.0
    %162 = vmatprep.subr.mxu0 0.0
    %163 = vmatpush1.msra.mxu0 0.0
    %164 = vmatprep.subr.mxu0 0.0
    %165 = vmatpush1.msra.mxu0 0.0
    %166 = vmatprep.subr.mxu0 0.0
    %167 = vmatpush1.msra.mxu0 0.0
    %168 = vmatprep.subr.mxu0 0.0
    %169 = vmatpush1.msra.mxu0 0.0
    %170 = vmatprep.subr.mxu0 0.0
    %171 = vmatpush1.msra.mxu0 0.0
    %172 = vmatprep.subr.mxu0 0.0
    %173 = vmatpush1.msra.mxu0 0.0
    %174 = vmatprep.subr.mxu0 0.0
    %175 = vmatpush1.msra.mxu0 0.0
    %176 = vmatprep.subr.mxu0 0.0
    %177 = vmatpush1.msra.mxu0 0.0
    %178 = vmatprep.subr.mxu0 0.0
    %179 = vmatpush1.msra.mxu0 0.0
    %180 = vmatprep.subr.mxu0 0.0
    %181 = vmatpush1.msra.mxu0 0.0
    %182 = vmatprep.subr.mxu0 0.0
    %183 = vmatpush1.msra.mxu0 0.0
    %184 = vmatprep.subr.mxu0 0.0
    %185 = vmatpush1.msra.mxu0 0.0
    %186 = vmatprep.subr.mxu0 0.0
    %187 = vmatpush1.msra.mxu0 0.0
    %188 = vmatprep.subr.mxu0 0.0
    %189 = vmatpush1.msra.mxu0 0.0
    %190 = vmatprep.subr.mxu0 0.0
    %191 = vmatpush1.msra.mxu0 0.0
    %192 = vmatprep.subr.mxu0 0.0
    %193 = vmatpush1.msra.mxu0 0.0
    %194 = vmatprep.subr.mxu0 0.0
    %195 = vmatpush1.msra.mxu0 0.0
    %196 = vmatprep.mubr.f32.mxu0 0.0
    %v197 = vand.u32 %v107, 4294901760
    %v198 = vsub.f32 %v107, %v197
    %v199 = vand.u32 %v198, 4294901760
    %v200 = vsub.f32 %v198, %v199
    %v201 = vand.u32 %v200, 4294901760
    %202 = vmatmul.mubr.f32.gmra.mrb[0].mxu0 %v201
    %v203 = vpop.f32.mrb[0].mxu0
    %v204 = vadd.f32 0.0, %v203
    %v205 = vpop.f32.mrb[0].mxu0
    %206 = vmatprep.mubr.f32.mxu0 0.0
    %v207 = vand.u32 %v110, 4294901760
    %v208 = vsub.f32 %v110, %v207
    %v209 = vand.u32 %v208, 4294901760
    %v210 = vsub.f32 %v208, %v209
    %v211 = vand.u32 %v210, 4294901760
    %212 = vmatmul.mubr.f32.gmra.mrb[0].mxu0 %v211
    %v213 = vpop.f32.mrb[0].mxu0
    %v214 = vadd.f32 0.0, %v213
    %v215 = vpop.f32.mrb[0].mxu0
    %216 = vmatprep.mubr.f32.mxu0 0.0
    %v217 = vand.u32 %v113, 4294901760
    %v218 = vsub.f32 %v113, %v217
    %v219 = vand.u32 %v218, 4294901760
    %v220 = vsub.f32 %v218, %v219
    %v221 = vand.u32 %v220, 4294901760
    %222 = vmatmul.mubr.f32.gmra.mrb[0].mxu0 %v221
    %v223 = vpop.f32.mrb[0].mxu0
    %v224 = vadd.f32 0.0, %v223
    %v225 = vpop.f32.mrb[0].mxu0
    %226 = vmatprep.mubr.f32.mxu0 0.0
    %v227 = vand.u32 %v116, 4294901760
    %v228 = vsub.f32 %v116, %v227
    %v229 = vand.u32 %v228, 4294901760
    %v230 = vsub.f32 %v228, %v229
    %v231 = vand.u32 %v230, 4294901760
    %232 = vmatmul.mubr.f32.gmra.mrb[0].mxu0 %v231
    %v233 = vpop.f32.mrb[0].mxu0
    %v234 = vadd.f32 0.0, %v233
    %v235 = vpop.f32.mrb[0].mxu0
    %236 = vmatprep.mubr.f32.mxu0 0.0
    %v237 = vand.u32 %v119, 4294901760
    %v238 = vsub.f32 %v119, %v237
    %v239 = vand.u32 %v238, 4294901760
    %v240 = vsub.f32 %v238, %v239
    %v241 = vand.u32 %v240, 4294901760
    %242 = vmatmul.mubr.f32.gmra.mrb[0].mxu0 %v241
    %v243 = vpop.f32.mrb[0].mxu0
    %v244 = vadd.f32 0.0, %v243
    %v245 = vpop.f32.mrb[0].mxu0
    %246 = vmatprep.mubr.f32.mxu0 0.0
    %v247 = vand.u32 %v122, 4294901760
    %v248 = vsub.f32 %v122, %v247
    %v249 = vand.u32 %v248, 4294901760
    %v250 = vsub.f32 %v248, %v249
    %v251 = vand.u32 %v250, 4294901760
    %252 = vmatmul.mubr.f32.gmra.mrb[0].mxu0 %v251
    %v253 = vpop.f32.mrb[0].mxu0
    %v254 = vadd.f32 0.0, %v253
    %v255 = vpop.f32.mrb[0].mxu0
    %256 = vmatprep.mubr.f32.mxu0 0.0
    %v257 = vand.u32 %v125, 4294901760
    %v258 = vsub.f32 %v125, %v257
    %v259 = vand.u32 %v258, 4294901760
    %v260 = vsub.f32 %v258, %v259
    %v261 = vand.u32 %v260, 4294901760
    %262 = vmatmul.mubr.f32.gmra.mrb[0].mxu0 %v261
    %v263 = vpop.f32.mrb[0].mxu0
    %v264 = vadd.f32 0.0, %v263
    %v265 = vpop.f32.mrb[0].mxu0
    %266 = vmatprep.mubr.f32.mxu0 0.0
    %v267 = vand.u32 %v128, 4294901760
    %v268 = vsub.f32 %v128, %v267
    %v269 = vand.u32 %v268, 4294901760
    %v270 = vsub.f32 %v268, %v269
    %v271 = vand.u32 %v270, 4294901760
    %272 = vmatmul.mubr.f32.gmra.mrb[0].mxu0 %v271
    %v273 = vpop.f32.mrb[0].mxu0
    %v274 = vadd.f32 0.0, %v273
    %v275 = vpop.f32.mrb[0].mxu0
    %276 = vdwg.mxu0
    %277 = vmatprep.subr.mxu0 0.0
    %v278 = vand.u32 %v100, 4294901760
    %v279 = vsub.f32 %v100, %v278
    %v280 = vand.u32 %v279, 4294901760
    %v281 = vsub.f32 %v279, %v280
    %v282 = vand.u32 %v281, 4294901760
    %283 = vmatpush1.msra.mxu0 %v282
    %284 = vmatprep.subr.mxu0 0.0
    %v285 = vand.u32 %v101, 4294901760
    %v286 = vsub.f32 %v101, %v285
    %v287 = vand.u32 %v286, 4294901760
    %v288 = vsub.f32 %v286, %v287
    %v289 = vand.u32 %v288, 4294901760
    %290 = vmatpush1.msra.mxu0 %v289
    %291 = vmatprep.subr.mxu0 0.0
    %292 = vmatpush1.msra.mxu0 0.0
    %293 = vmatprep.subr.mxu0 0.0
    %294 = vmatpush1.msra.mxu0 0.0
    %295 = vmatprep.subr.mxu0 0.0
    %296 = vmatpush1.msra.mxu0 0.0
    %297 = vmatprep.subr.mxu0 0.0
    %298 = vmatpush1.msra.mxu0 0.0
    %299 = vmatprep.subr.mxu0 0.0
    %300 = vmatpush1.msra.mxu0 0.0
    %301 = vmatprep.subr.mxu0 0.0
    %302 = vmatpush1.msra.mxu0 0.0
    %303 = vmatprep.subr.mxu0 0.0
    %304 = vmatpush1.msra.mxu0 0.0
    %305 = vmatprep.subr.mxu0 0.0
    %306 = vmatpush1.msra.mxu0 0.0
    %307 = vmatprep.subr.mxu0 0.0
    %308 = vmatpush1.msra.mxu0 0.0
    %309 = vmatprep.subr.mxu0 0.0
    %310 = vmatpush1.msra.mxu0 0.0
    %311 = vmatprep.subr.mxu0 0.0
    %312 = vmatpush1.msra.mxu0 0.0
    %313 = vmatprep.subr.mxu0 0.0
    %314 = vmatpush1.msra.mxu0 0.0
    %315 = vmatprep.subr.mxu0 0.0
    %316 = vmatpush1.msra.mxu0 0.0
    %317 = vmatprep.subr.mxu0 0.0
    %318 = vmatpush1.msra.mxu0 0.0
    %319 = vmatprep.subr.mxu0 0.0
    %320 = vmatpush1.msra.mxu0 0.0
    %321 = vmatprep.subr.mxu0 0.0
    %322 = vmatpush1.msra.mxu0 0.0
    %323 = vmatprep.subr.mxu0 0.0
    %324 = vmatpush1.msra.mxu0 0.0
    %325 = vmatprep.subr.mxu0 0.0
    %326 = vmatpush1.msra.mxu0 0.0
    %327 = vmatprep.subr.mxu0 0.0
    %328 = vmatpush1.msra.mxu0 0.0
    %329 = vmatprep.subr.mxu0 0.0
    %330 = vmatpush1.msra.mxu0 0.0
    %331 = vmatprep.subr.mxu0 0.0
    %332 = vmatpush1.msra.mxu0 0.0
    %333 = vmatprep.subr.mxu0 0.0
    %334 = vmatpush1.msra.mxu0 0.0
    %335 = vmatprep.subr.mxu0 0.0
    %336 = vmatpush1.msra.mxu0 0.0
    %337 = vmatprep.subr.mxu0 0.0
    %338 = vmatpush1.msra.mxu0 0.0
    %339 = vmatprep.subr.mxu0 0.0
    %340 = vmatpush1.msra.mxu0 0.0
    %341 = vmatprep.subr.mxu0 0.0
    %342 = vmatpush1.msra.mxu0 0.0
    %343 = vmatprep.subr.mxu0 0.0
    %344 = vmatpush1.msra.mxu0 0.0
    %345 = vmatprep.subr.mxu0 0.0
    %346 = vmatpush1.msra.mxu0 0.0
    %347 = vmatprep.subr.mxu0 0.0
    %348 = vmatpush1.msra.mxu0 0.0
    %349 = vmatprep.subr.mxu0 0.0
    %350 = vmatpush1.msra.mxu0 0.0
    %351 = vmatprep.mubr.f32.mxu0 0.0
    %v352 = vand.u32 %v107, 4294901760
    %353 = vmatmul.mubr.f32.gmra.mrb[0].mxu0 %v352
    %v354 = vpop.f32.mrb[0].mxu0
    %v355 = vadd.f32 %v204, %v354
    %v356 = vpop.f32.mrb[0].mxu0
    %357 = vmatprep.mubr.f32.mxu0 0.0
    %v358 = vand.u32 %v110, 4294901760
    %359 = vmatmul.mubr.f32.gmra.mrb[0].mxu0 %v358
    %v360 = vpop.f32.mrb[0].mxu0
    %v361 = vadd.f32 %v214, %v360
    %v362 = vpop.f32.mrb[0].mxu0
    %363 = vmatprep.mubr.f32.mxu0 0.0
    %v364 = vand.u32 %v113, 4294901760
    %365 = vmatmul.mubr.f32.gmra.mrb[0].mxu0 %v364
    %v366 = vpop.f32.mrb[0].mxu0
    %v367 = vadd.f32 %v224, %v366
    %v368 = vpop.f32.mrb[0].mxu0
    %369 = vmatprep.mubr.f32.mxu0 0.0
    %v370 = vand.u32 %v116, 4294901760
    %371 = vmatmul.mubr.f32.gmra.mrb[0].mxu0 %v370
    %v372 = vpop.f32.mrb[0].mxu0
    %v373 = vadd.f32 %v234, %v372
    %v374 = vpop.f32.mrb[0].mxu0
    %375 = vmatprep.mubr.f32.mxu0 0.0
    %v376 = vand.u32 %v119, 4294901760
    %377 = vmatmul.mubr.f32.gmra.mrb[0].mxu0 %v376
    %v378 = vpop.f32.mrb[0].mxu0
    %v379 = vadd.f32 %v244, %v378
    %v380 = vpop.f32.mrb[0].mxu0
    %381 = vmatprep.mubr.f32.mxu0 0.0
    %v382 = vand.u32 %v122, 4294901760
    %383 = vmatmul.mubr.f32.gmra.mrb[0].mxu0 %v382
    %v384 = vpop.f32.mrb[0].mxu0
    %v385 = vadd.f32 %v254, %v384
    %v386 = vpop.f32.mrb[0].mxu0
    %387 = vmatprep.mubr.f32.mxu0 0.0
    %v388 = vand.u32 %v125, 4294901760
    %389 = vmatmul.mubr.f32.gmra.mrb[0].mxu0 %v388
    %v390 = vpop.f32.mrb[0].mxu0
    %v391 = vadd.f32 %v264, %v390
    %v392 = vpop.f32.mrb[0].mxu0
    %393 = vmatprep.mubr.f32.mxu0 0.0
    %v394 = vand.u32 %v128, 4294901760
    %395 = vmatmul.mubr.f32.gmra.mrb[0].mxu0 %v394
    %v396 = vpop.f32.mrb[0].mxu0
    %v397 = vadd.f32 %v274, %v396
    %v398 = vpop.f32.mrb[0].mxu0
    %399 = vdwg.mxu0
    %400 = vmatprep.subr.mxu0 0.0
    %v401 = vand.u32 %v100, 4294901760
    %v402 = vsub.f32 %v100, %v401
    %403 = vmatpush1.msra.mxu0 %v402
    %404 = vmatprep.subr.mxu0 0.0
    %v405 = vand.u32 %v101, 4294901760
    %v406 = vsub.f32 %v101, %v405
    %407 = vmatpush1.msra.mxu0 %v406
    %408 = vmatprep.subr.mxu0 0.0
    %409 = vmatpush1.msra.mxu0 0.0
    %410 = vmatprep.subr.mxu0 0.0
    %411 = vmatpush1.msra.mxu0 0.0
    %412 = vmatprep.subr.mxu0 0.0
    %413 = vmatpush1.msra.mxu0 0.0
    %414 = vmatprep.subr.mxu0 0.0
    %415 = vmatpush1.msra.mxu0 0.0
    %416 = vmatprep.subr.mxu0 0.0
    %417 = vmatpush1.msra.mxu0 0.0
    %418 = vmatprep.subr.mxu0 0.0
    %419 = vmatpush1.msra.mxu0 0.0
    %420 = vmatprep.subr.mxu0 0.0
    %421 = vmatpush1.msra.mxu0 0.0
    %422 = vmatprep.subr.mxu0 0.0
    %423 = vmatpush1.msra.mxu0 0.0
    %424 = vmatprep.subr.mxu0 0.0
    %425 = vmatpush1.msra.mxu0 0.0
    %426 = vmatprep.subr.mxu0 0.0
    %427 = vmatpush1.msra.mxu0 0.0
    %428 = vmatprep.subr.mxu0 0.0
    %429 = vmatpush1.msra.mxu0 0.0
    %430 = vmatprep.subr.mxu0 0.0
    %431 = vmatpush1.msra.mxu0 0.0
    %432 = vmatprep.subr.mxu0 0.0
    %433 = vmatpush1.msra.mxu0 0.0
    %434 = vmatprep.subr.mxu0 0.0
    %435 = vmatpush1.msra.mxu0 0.0
    %436 = vmatprep.subr.mxu0 0.0
    %437 = vmatpush1.msra.mxu0 0.0
    %438 = vmatprep.subr.mxu0 0.0
    %439 = vmatpush1.msra.mxu0 0.0
    %440 = vmatprep.subr.mxu0 0.0
    %441 = vmatpush1.msra.mxu0 0.0
    %442 = vmatprep.subr.mxu0 0.0
    %443 = vmatpush1.msra.mxu0 0.0
    %444 = vmatprep.subr.mxu0 0.0
    %445 = vmatpush1.msra.mxu0 0.0
    %446 = vmatprep.subr.mxu0 0.0
    %447 = vmatpush1.msra.mxu0 0.0
    %448 = vmatprep.subr.mxu0 0.0
    %449 = vmatpush1.msra.mxu0 0.0
    %450 = vmatprep.subr.mxu0 0.0
    %451 = vmatpush1.msra.mxu0 0.0
    %452 = vmatprep.subr.mxu0 0.0
    %453 = vmatpush1.msra.mxu0 0.0
    %454 = vmatprep.subr.mxu0 0.0
    %455 = vmatpush1.msra.mxu0 0.0
    %456 = vmatprep.subr.mxu0 0.0
    %457 = vmatpush1.msra.mxu0 0.0
    %458 = vmatprep.subr.mxu0 0.0
    %459 = vmatpush1.msra.mxu0 0.0
    %460 = vmatprep.subr.mxu0 0.0
    %461 = vmatpush1.msra.mxu0 0.0
    %462 = vmatprep.subr.mxu0 0.0
    %463 = vmatpush1.msra.mxu0 0.0
    %464 = vmatprep.subr.mxu0 0.0
    %465 = vmatpush1.msra.mxu0 0.0
    %466 = vmatprep.subr.mxu0 0.0
    %467 = vmatpush1.msra.mxu0 0.0
    %468 = vmatprep.mubr.f32.mxu0 0.0
    %v469 = vand.u32 %v107, 4294901760
    %v470 = vsub.f32 %v107, %v469
    %471 = vmatmul.mubr.f32.gmra.mrb[0].mxu0 %v470
    %v472 = vpop.f32.mrb[0].mxu0
    %v473 = vadd.f32 %v355, %v472
    %v474 = vpop.f32.mrb[0].mxu0
    %475 = vmatprep.mubr.f32.mxu0 0.0
    %v476 = vand.u32 %v110, 4294901760
    %v477 = vsub.f32 %v110, %v476
    %478 = vmatmul.mubr.f32.gmra.mrb[0].mxu0 %v477
    %v479 = vpop.f32.mrb[0].mxu0
    %v480 = vadd.f32 %v361, %v479
    %v481 = vpop.f32.mrb[0].mxu0
    %482 = vmatprep.mubr.f32.mxu0 0.0
    %v483 = vand.u32 %v113, 4294901760
    %v484 = vsub.f32 %v113, %v483
    %485 = vmatmul.mubr.f32.gmra.mrb[0].mxu0 %v484
    %v486 = vpop.f32.mrb[0].mxu0
    %v487 = vadd.f32 %v367, %v486
    %v488 = vpop.f32.mrb[0].mxu0
    %489 = vmatprep.mubr.f32.mxu0 0.0
    %v490 = vand.u32 %v116, 4294901760
    %v491 = vsub.f32 %v116, %v490
    %492 = vmatmul.mubr.f32.gmra.mrb[0].mxu0 %v491
    %v493 = vpop.f32.mrb[0].mxu0
    %v494 = vadd.f32 %v373, %v493
    %v495 = vpop.f32.mrb[0].mxu0
    %496 = vmatprep.mubr.f32.mxu0 0.0
    %v497 = vand.u32 %v119, 4294901760
    %v498 = vsub.f32 %v119, %v497
    %499 = vmatmul.mubr.f32.gmra.mrb[0].mxu0 %v498
    %v500 = vpop.f32.mrb[0].mxu0
    %v501 = vadd.f32 %v379, %v500
    %v502 = vpop.f32.mrb[0].mxu0
    %503 = vmatprep.mubr.f32.mxu0 0.0
    %v504 = vand.u32 %v122, 4294901760
    %v505 = vsub.f32 %v122, %v504
    %506 = vmatmul.mubr.f32.gmra.mrb[0].mxu0 %v505
    %v507 = vpop.f32.mrb[0].mxu0
    %v508 = vadd.f32 %v385, %v507
    %v509 = vpop.f32.mrb[0].mxu0
    %510 = vmatprep.mubr.f32.mxu0 0.0
    %v511 = vand.u32 %v125, 4294901760
    %v512 = vsub.f32 %v125, %v511
    %513 = vmatmul.mubr.f32.gmra.mrb[0].mxu0 %v512
    %v514 = vpop.f32.mrb[0].mxu0
    %v515 = vadd.f32 %v391, %v514
    %v516 = vpop.f32.mrb[0].mxu0
    %517 = vmatprep.mubr.f32.mxu0 0.0
    %v518 = vand.u32 %v128, 4294901760
    %v519 = vsub.f32 %v128, %v518
    %520 = vmatmul.mubr.f32.gmra.mrb[0].mxu0 %v519
    %v521 = vpop.f32.mrb[0].mxu0
    %v522 = vadd.f32 %v397, %v521
    %v523 = vpop.f32.mrb[0].mxu0
    %524 = vdwg.mxu0
    %525 = vmatprep.subr.mxu0 0.0
    %v526 = vand.u32 %v100, 4294901760
    %527 = vmatpush1.msra.mxu0 %v526
    %528 = vmatprep.subr.mxu0 0.0
    %v529 = vand.u32 %v101, 4294901760
    %530 = vmatpush1.msra.mxu0 %v529
    %531 = vmatprep.subr.mxu0 0.0
    %532 = vmatpush1.msra.mxu0 0.0
    %533 = vmatprep.subr.mxu0 0.0
    %534 = vmatpush1.msra.mxu0 0.0
    %535 = vmatprep.subr.mxu0 0.0
    %536 = vmatpush1.msra.mxu0 0.0
    %537 = vmatprep.subr.mxu0 0.0
    %538 = vmatpush1.msra.mxu0 0.0
    %539 = vmatprep.subr.mxu0 0.0
    %540 = vmatpush1.msra.mxu0 0.0
    %541 = vmatprep.subr.mxu0 0.0
    %542 = vmatpush1.msra.mxu0 0.0
    %543 = vmatprep.subr.mxu0 0.0
    %544 = vmatpush1.msra.mxu0 0.0
    %545 = vmatprep.subr.mxu0 0.0
    %546 = vmatpush1.msra.mxu0 0.0
    %547 = vmatprep.subr.mxu0 0.0
    %548 = vmatpush1.msra.mxu0 0.0
    %549 = vmatprep.subr.mxu0 0.0
    %550 = vmatpush1.msra.mxu0 0.0
    %551 = vmatprep.subr.mxu0 0.0
    %552 = vmatpush1.msra.mxu0 0.0
    %553 = vmatprep.subr.mxu0 0.0
    %554 = vmatpush1.msra.mxu0 0.0
    %555 = vmatprep.subr.mxu0 0.0
    %556 = vmatpush1.msra.mxu0 0.0
    %557 = vmatprep.subr.mxu0 0.0
    %558 = vmatpush1.msra.mxu0 0.0
    %559 = vmatprep.subr.mxu0 0.0
    %560 = vmatpush1.msra.mxu0 0.0
    %561 = vmatprep.subr.mxu0 0.0
    %562 = vmatpush1.msra.mxu0 0.0
    %563 = vmatprep.subr.mxu0 0.0
    %564 = vmatpush1.msra.mxu0 0.0
    %565 = vmatprep.subr.mxu0 0.0
    %566 = vmatpush1.msra.mxu0 0.0
    %567 = vmatprep.subr.mxu0 0.0
    %568 = vmatpush1.msra.mxu0 0.0
    %569 = vmatprep.subr.mxu0 0.0
    %570 = vmatpush1.msra.mxu0 0.0
    %571 = vmatprep.subr.mxu0 0.0
    %572 = vmatpush1.msra.mxu0 0.0
    %573 = vmatprep.subr.mxu0 0.0
    %574 = vmatpush1.msra.mxu0 0.0
    %575 = vmatprep.subr.mxu0 0.0
    %576 = vmatpush1.msra.mxu0 0.0
    %577 = vmatprep.subr.mxu0 0.0
    %578 = vmatpush1.msra.mxu0 0.0
    %579 = vmatprep.subr.mxu0 0.0
    %580 = vmatpush1.msra.mxu0 0.0
    %581 = vmatprep.subr.mxu0 0.0
    %582 = vmatpush1.msra.mxu0 0.0
    %583 = vmatprep.subr.mxu0 0.0
    %584 = vmatpush1.msra.mxu0 0.0
    %585 = vmatprep.subr.mxu0 0.0
    %586 = vmatpush1.msra.mxu0 0.0
    %587 = vmatprep.subr.mxu0 0.0
    %588 = vmatpush1.msra.mxu0 0.0
    %589 = vmatprep.subr.mxu0 0.0
    %590 = vmatpush1.msra.mxu0 0.0
    %591 = vmatprep.mubr.f32.mxu0 0.0
    %v592 = vand.u32 %v107, 4294901760
    %v593 = vsub.f32 %v107, %v592
    %v594 = vand.u32 %v593, 4294901760
    %595 = vmatmul.mubr.f32.gmra.mrb[0].mxu0 %v594
    %v596 = vpop.f32.mrb[0].mxu0
    %v597 = vadd.f32 %v473, %v596
    %v598 = vpop.f32.mrb[0].mxu0
    %599 = vmatprep.mubr.f32.mxu0 0.0
    %v600 = vand.u32 %v110, 4294901760
    %v601 = vsub.f32 %v110, %v600
    %v602 = vand.u32 %v601, 4294901760
    %603 = vmatmul.mubr.f32.gmra.mrb[0].mxu0 %v602
    %v604 = vpop.f32.mrb[0].mxu0
    %v605 = vadd.f32 %v480, %v604
    %v606 = vpop.f32.mrb[0].mxu0
    %607 = vmatprep.mubr.f32.mxu0 0.0
    %v608 = vand.u32 %v113, 4294901760
    %v609 = vsub.f32 %v113, %v608
    %v610 = vand.u32 %v609, 4294901760
    %611 = vmatmul.mubr.f32.gmra.mrb[0].mxu0 %v610
    %v612 = vpop.f32.mrb[0].mxu0
    %v613 = vadd.f32 %v487, %v612
    %v614 = vpop.f32.mrb[0].mxu0
    %615 = vmatprep.mubr.f32.mxu0 0.0
    %v616 = vand.u32 %v116, 4294901760
    %v617 = vsub.f32 %v116, %v616
    %v618 = vand.u32 %v617, 4294901760
    %619 = vmatmul.mubr.f32.gmra.mrb[0].mxu0 %v618
    %v620 = vpop.f32.mrb[0].mxu0
    %v621 = vadd.f32 %v494, %v620
    %v622 = vpop.f32.mrb[0].mxu0
    %623 = vmatprep.mubr.f32.mxu0 0.0
    %v624 = vand.u32 %v119, 4294901760
    %v625 = vsub.f32 %v119, %v624
    %v626 = vand.u32 %v625, 4294901760
    %627 = vmatmul.mubr.f32.gmra.mrb[0].mxu0 %v626
    %v628 = vpop.f32.mrb[0].mxu0
    %v629 = vadd.f32 %v501, %v628
    %v630 = vpop.f32.mrb[0].mxu0
    %631 = vmatprep.mubr.f32.mxu0 0.0
    %v632 = vand.u32 %v122, 4294901760
    %v633 = vsub.f32 %v122, %v632
    %v634 = vand.u32 %v633, 4294901760
    %635 = vmatmul.mubr.f32.gmra.mrb[0].mxu0 %v634
    %v636 = vpop.f32.mrb[0].mxu0
    %v637 = vadd.f32 %v508, %v636
    %v638 = vpop.f32.mrb[0].mxu0
    %639 = vmatprep.mubr.f32.mxu0 0.0
    %v640 = vand.u32 %v125, 4294901760
    %v641 = vsub.f32 %v125, %v640
    %v642 = vand.u32 %v641, 4294901760
    %643 = vmatmul.mubr.f32.gmra.mrb[0].mxu0 %v642
    %v644 = vpop.f32.mrb[0].mxu0
    %v645 = vadd.f32 %v515, %v644
    %v646 = vpop.f32.mrb[0].mxu0
    %647 = vmatprep.mubr.f32.mxu0 0.0
    %v648 = vand.u32 %v128, 4294901760
    %v649 = vsub.f32 %v128, %v648
    %v650 = vand.u32 %v649, 4294901760
    %651 = vmatmul.mubr.f32.gmra.mrb[0].mxu0 %v650
    %v652 = vpop.f32.mrb[0].mxu0
    %v653 = vadd.f32 %v522, %v652
    %v654 = vpop.f32.mrb[0].mxu0
    %655 = vdwg.mxu0
    %656 = vmatprep.subr.mxu0 0.0
    %v657 = vand.u32 %v100, 4294901760
    %v658 = vsub.f32 %v100, %v657
    %v659 = vand.u32 %v658, 4294901760
    %660 = vmatpush1.msra.mxu0 %v659
    %661 = vmatprep.subr.mxu0 0.0
    %v662 = vand.u32 %v101, 4294901760
    %v663 = vsub.f32 %v101, %v662
    %v664 = vand.u32 %v663, 4294901760
    %665 = vmatpush1.msra.mxu0 %v664
    %666 = vmatprep.subr.mxu0 0.0
    %667 = vmatpush1.msra.mxu0 0.0
    %668 = vmatprep.subr.mxu0 0.0
    %669 = vmatpush1.msra.mxu0 0.0
    %670 = vmatprep.subr.mxu0 0.0
    %671 = vmatpush1.msra.mxu0 0.0
    %672 = vmatprep.subr.mxu0 0.0
    %673 = vmatpush1.msra.mxu0 0.0
    %674 = vmatprep.subr.mxu0 0.0
    %675 = vmatpush1.msra.mxu0 0.0
    %676 = vmatprep.subr.mxu0 0.0
    %677 = vmatpush1.msra.mxu0 0.0
    %678 = vmatprep.subr.mxu0 0.0
    %679 = vmatpush1.msra.mxu0 0.0
    %680 = vmatprep.subr.mxu0 0.0
    %681 = vmatpush1.msra.mxu0 0.0
    %682 = vmatprep.subr.mxu0 0.0
    %683 = vmatpush1.msra.mxu0 0.0
    %684 = vmatprep.subr.mxu0 0.0
    %685 = vmatpush1.msra.mxu0 0.0
    %686 = vmatprep.subr.mxu0 0.0
    %687 = vmatpush1.msra.mxu0 0.0
    %688 = vmatprep.subr.mxu0 0.0
    %689 = vmatpush1.msra.mxu0 0.0
    %690 = vmatprep.subr.mxu0 0.0
    %691 = vmatpush1.msra.mxu0 0.0
    %692 = vmatprep.subr.mxu0 0.0
    %693 = vmatpush1.msra.mxu0 0.0
    %694 = vmatprep.subr.mxu0 0.0
    %695 = vmatpush1.msra.mxu0 0.0
    %696 = vmatprep.subr.mxu0 0.0
    %697 = vmatpush1.msra.mxu0 0.0
    %698 = vmatprep.subr.mxu0 0.0
    %699 = vmatpush1.msra.mxu0 0.0
    %700 = vmatprep.subr.mxu0 0.0
    %701 = vmatpush1.msra.mxu0 0.0
    %702 = vmatprep.subr.mxu0 0.0
    %703 = vmatpush1.msra.mxu0 0.0
    %704 = vmatprep.subr.mxu0 0.0
    %705 = vmatpush1.msra.mxu0 0.0
    %706 = vmatprep.subr.mxu0 0.0
    %707 = vmatpush1.msra.mxu0 0.0
    %708 = vmatprep.subr.mxu0 0.0
    %709 = vmatpush1.msra.mxu0 0.0
    %710 = vmatprep.subr.mxu0 0.0
    %711 = vmatpush1.msra.mxu0 0.0
    %712 = vmatprep.subr.mxu0 0.0
    %713 = vmatpush1.msra.mxu0 0.0
    %714 = vmatprep.subr.mxu0 0.0
    %715 = vmatpush1.msra.mxu0 0.0
    %716 = vmatprep.subr.mxu0 0.0
    %717 = vmatpush1.msra.mxu0 0.0
    %718 = vmatprep.subr.mxu0 0.0
    %719 = vmatpush1.msra.mxu0 0.0
    %720 = vmatprep.subr.mxu0 0.0
    %721 = vmatpush1.msra.mxu0 0.0
    %722 = vmatprep.subr.mxu0 0.0
    %723 = vmatpush1.msra.mxu0 0.0
    %724 = vmatprep.subr.mxu0 0.0
    %725 = vmatpush1.msra.mxu0 0.0
    %726 = vmatprep.mubr.f32.mxu0 0.0
    %v727 = vand.u32 %v107, 4294901760
    %728 = vmatmul.mubr.f32.gmra.mrb[0].mxu0 %v727
    %v729 = vpop.f32.mrb[0].mxu0
    %v730 = vadd.f32 %v597, %v729
    %v731 = vpop.f32.mrb[0].mxu0
    %732 = vmatprep.mubr.f32.mxu0 0.0
    %v733 = vand.u32 %v110, 4294901760
    %734 = vmatmul.mubr.f32.gmra.mrb[0].mxu0 %v733
    %v735 = vpop.f32.mrb[0].mxu0
    %v736 = vadd.f32 %v605, %v735
    %v737 = vpop.f32.mrb[0].mxu0
    %738 = vmatprep.mubr.f32.mxu0 0.0
    %v739 = vand.u32 %v113, 4294901760
    %740 = vmatmul.mubr.f32.gmra.mrb[0].mxu0 %v739
    %v741 = vpop.f32.mrb[0].mxu0
    %v742 = vadd.f32 %v613, %v741
    %v743 = vpop.f32.mrb[0].mxu0
    %744 = vmatprep.mubr.f32.mxu0 0.0
    %v745 = vand.u32 %v116, 4294901760
    %746 = vmatmul.mubr.f32.gmra.mrb[0].mxu0 %v745
    %v747 = vpop.f32.mrb[0].mxu0
    %v748 = vadd.f32 %v621, %v747
    %v749 = vpop.f32.mrb[0].mxu0
    %750 = vmatprep.mubr.f32.mxu0 0.0
    %v751 = vand.u32 %v119, 4294901760
    %752 = vmatmul.mubr.f32.gmra.mrb[0].mxu0 %v751
    %v753 = vpop.f32.mrb[0].mxu0
    %v754 = vadd.f32 %v629, %v753
    %v755 = vpop.f32.mrb[0].mxu0
    %756 = vmatprep.mubr.f32.mxu0 0.0
    %v757 = vand.u32 %v122, 4294901760
    %758 = vmatmul.mubr.f32.gmra.mrb[0].mxu0 %v757
    %v759 = vpop.f32.mrb[0].mxu0
    %v760 = vadd.f32 %v637, %v759
    %v761 = vpop.f32.mrb[0].mxu0
    %762 = vmatprep.mubr.f32.mxu0 0.0
    %v763 = vand.u32 %v125, 4294901760
    %764 = vmatmul.mubr.f32.gmra.mrb[0].mxu0 %v763
    %v765 = vpop.f32.mrb[0].mxu0
    %v766 = vadd.f32 %v645, %v765
    %v767 = vpop.f32.mrb[0].mxu0
    %768 = vmatprep.mubr.f32.mxu0 0.0
    %v769 = vand.u32 %v128, 4294901760
    %770 = vmatmul.mubr.f32.gmra.mrb[0].mxu0 %v769
    %v771 = vpop.f32.mrb[0].mxu0
    %v772 = vadd.f32 %v653, %v771
    %v773 = vpop.f32.mrb[0].mxu0
    %774 = vdwg.mxu0
    %775 = vmatprep.subr.mxu0 0.0
    %v776 = vand.u32 %v100, 4294901760
    %777 = vmatpush1.msra.mxu0 %v776
    %778 = vmatprep.subr.mxu0 0.0
    %v779 = vand.u32 %v101, 4294901760
    %780 = vmatpush1.msra.mxu0 %v779
    %781 = vmatprep.subr.mxu0 0.0
    %782 = vmatpush1.msra.mxu0 0.0
    %783 = vmatprep.subr.mxu0 0.0
    %784 = vmatpush1.msra.mxu0 0.0
    %785 = vmatprep.subr.mxu0 0.0
    %786 = vmatpush1.msra.mxu0 0.0
    %787 = vmatprep.subr.mxu0 0.0
    %788 = vmatpush1.msra.mxu0 0.0
    %789 = vmatprep.subr.mxu0 0.0
    %790 = vmatpush1.msra.mxu0 0.0
    %791 = vmatprep.subr.mxu0 0.0
    %792 = vmatpush1.msra.mxu0 0.0
    %793 = vmatprep.subr.mxu0 0.0
    %794 = vmatpush1.msra.mxu0 0.0
    %795 = vmatprep.subr.mxu0 0.0
    %796 = vmatpush1.msra.mxu0 0.0
    %797 = vmatprep.subr.mxu0 0.0
    %798 = vmatpush1.msra.mxu0 0.0
    %799 = vmatprep.subr.mxu0 0.0
    %800 = vmatpush1.msra.mxu0 0.0
    %801 = vmatprep.subr.mxu0 0.0
    %802 = vmatpush1.msra.mxu0 0.0
    %803 = vmatprep.subr.mxu0 0.0
    %804 = vmatpush1.msra.mxu0 0.0
    %805 = vmatprep.subr.mxu0 0.0
    %806 = vmatpush1.msra.mxu0 0.0
    %807 = vmatprep.subr.mxu0 0.0
    %808 = vmatpush1.msra.mxu0 0.0
    %809 = vmatprep.subr.mxu0 0.0
    %810 = vmatpush1.msra.mxu0 0.0
    %811 = vmatprep.subr.mxu0 0.0
    %812 = vmatpush1.msra.mxu0 0.0
    %813 = vmatprep.subr.mxu0 0.0
    %814 = vmatpush1.msra.mxu0 0.0
    %815 = vmatprep.subr.mxu0 0.0
    %816 = vmatpush1.msra.mxu0 0.0
    %817 = vmatprep.subr.mxu0 0.0
    %818 = vmatpush1.msra.mxu0 0.0
    %819 = vmatprep.subr.mxu0 0.0
    %820 = vmatpush1.msra.mxu0 0.0
    %821 = vmatprep.subr.mxu0 0.0
    %822 = vmatpush1.msra.mxu0 0.0
    %823 = vmatprep.subr.mxu0 0.0
    %824 = vmatpush1.msra.mxu0 0.0
    %825 = vmatprep.subr.mxu0 0.0
    %826 = vmatpush1.msra.mxu0 0.0
    %827 = vmatprep.subr.mxu0 0.0
    %828 = vmatpush1.msra.mxu0 0.0
    %829 = vmatprep.subr.mxu0 0.0
    %830 = vmatpush1.msra.mxu0 0.0
    %831 = vmatprep.subr.mxu0 0.0
    %832 = vmatpush1.msra.mxu0 0.0
    %833 = vmatprep.subr.mxu0 0.0
    %834 = vmatpush1.msra.mxu0 0.0
    %835 = vmatprep.subr.mxu0 0.0
    %836 = vmatpush1.msra.mxu0 0.0
    %837 = vmatprep.subr.mxu0 0.0
    %838 = vmatpush1.msra.mxu0 0.0
    %839 = vmatprep.subr.mxu0 0.0
    %840 = vmatpush1.msra.mxu0 0.0
    %841 = vmatprep.mubr.f32.mxu0 0.0
    %v842 = vand.u32 %v107, 4294901760
    %843 = vmatmul.mubr.f32.gmra.mrb[0].mxu0 %v842
    %v844 = vpop.f32.mrb[0].mxu0
    %v845 = vadd.f32 %v730, %v844
    %v846 = vpop.f32.mrb[0].mxu0
    %847 = vmatprep.mubr.f32.mxu0 0.0
    %v848 = vand.u32 %v110, 4294901760
    %849 = vmatmul.mubr.f32.gmra.mrb[0].mxu0 %v848
    %v850 = vpop.f32.mrb[0].mxu0
    %v851 = vadd.f32 %v736, %v850
    %v852 = vpop.f32.mrb[0].mxu0
    %853 = vmatprep.mubr.f32.mxu0 0.0
    %v854 = vand.u32 %v113, 4294901760
    %855 = vmatmul.mubr.f32.gmra.mrb[0].mxu0 %v854
    %v856 = vpop.f32.mrb[0].mxu0
    %v857 = vadd.f32 %v742, %v856
    %v858 = vpop.f32.mrb[0].mxu0
    %859 = vmatprep.mubr.f32.mxu0 0.0
    %v860 = vand.u32 %v116, 4294901760
    %861 = vmatmul.mubr.f32.gmra.mrb[0].mxu0 %v860
    %v862 = vpop.f32.mrb[0].mxu0
    %v863 = vadd.f32 %v748, %v862
    %v864 = vpop.f32.mrb[0].mxu0
    %865 = vmatprep.mubr.f32.mxu0 0.0
    %v866 = vand.u32 %v119, 4294901760
    %867 = vmatmul.mubr.f32.gmra.mrb[0].mxu0 %v866
    %v868 = vpop.f32.mrb[0].mxu0
    %v869 = vadd.f32 %v754, %v868
    %v870 = vpop.f32.mrb[0].mxu0
    %871 = vmatprep.mubr.f32.mxu0 0.0
    %v872 = vand.u32 %v122, 4294901760
    %873 = vmatmul.mubr.f32.gmra.mrb[0].mxu0 %v872
    %v874 = vpop.f32.mrb[0].mxu0
    %v875 = vadd.f32 %v760, %v874
    %v876 = vpop.f32.mrb[0].mxu0
    %877 = vmatprep.mubr.f32.mxu0 0.0
    %v878 = vand.u32 %v125, 4294901760
    %879 = vmatmul.mubr.f32.gmra.mrb[0].mxu0 %v878
    %v880 = vpop.f32.mrb[0].mxu0
    %v881 = vadd.f32 %v766, %v880
    %v882 = vpop.f32.mrb[0].mxu0
    %883 = vmatprep.mubr.f32.mxu0 0.0
    %v884 = vand.u32 %v128, 4294901760
    %885 = vmatmul.mubr.f32.gmra.mrb[0].mxu0 %v884
    %v886 = vpop.f32.mrb[0].mxu0
    %v887 = vadd.f32 %v772, %v886
    %v888 = vpop.f32.mrb[0].mxu0
    %889 = vdwg.mxu0
    %v891 = vsel %vm105, %v92, 0
    %v894 = vsel %vm105, %v93, 0
    %v897 = vsel %vm105, %v94, 0
    %v900 = vsel %vm105, %v95, 0
    %v903 = vsel %vm105, %v96, 0
    %v906 = vsel %vm105, %v97, 0
    %v909 = vsel %vm105, %v98, 0
    %v912 = vsel %vm105, %v99, 0
    %914 = vmatprep.subr.mxu0 0.0
    %v915 = vand.u32 %v103, 4294901760
    %916 = vmatpush1.msra.mxu0 %v915
    %917 = vmatprep.subr.mxu0 0.0
    %v918 = vand.u32 %v104, 4294901760
    %919 = vmatpush1.msra.mxu0 %v918
    %920 = vmatprep.subr.mxu0 0.0
    %921 = vmatpush1.msra.mxu0 0.0
    %922 = vmatprep.subr.mxu0 0.0
    %923 = vmatpush1.msra.mxu0 0.0
    %924 = vmatprep.subr.mxu0 0.0
    %925 = vmatpush1.msra.mxu0 0.0
    %926 = vmatprep.subr.mxu0 0.0
    %927 = vmatpush1.msra.mxu0 0.0
    %928 = vmatprep.subr.mxu0 0.0
    %929 = vmatpush1.msra.mxu0 0.0
    %930 = vmatprep.subr.mxu0 0.0
    %931 = vmatpush1.msra.mxu0 0.0
    %932 = vmatprep.subr.mxu0 0.0
    %933 = vmatpush1.msra.mxu0 0.0
    %934 = vmatprep.subr.mxu0 0.0
    %935 = vmatpush1.msra.mxu0 0.0
    %936 = vmatprep.subr.mxu0 0.0
    %937 = vmatpush1.msra.mxu0 0.0
    %938 = vmatprep.subr.mxu0 0.0
    %939 = vmatpush1.msra.mxu0 0.0
    %940 = vmatprep.subr.mxu0 0.0
    %941 = vmatpush1.msra.mxu0 0.0
    %942 = vmatprep.subr.mxu0 0.0
    %943 = vmatpush1.msra.mxu0 0.0
    %944 = vmatprep.subr.mxu0 0.0
    %945 = vmatpush1.msra.mxu0 0.0
    %946 = vmatprep.subr.mxu0 0.0
    %947 = vmatpush1.msra.mxu0 0.0
    %948 = vmatprep.subr.mxu0 0.0
    %949 = vmatpush1.msra.mxu0 0.0
    %950 = vmatprep.subr.mxu0 0.0
    %951 = vmatpush1.msra.mxu0 0.0
    %952 = vmatprep.subr.mxu0 0.0
    %953 = vmatpush1.msra.mxu0 0.0
    %954 = vmatprep.subr.mxu0 0.0
    %955 = vmatpush1.msra.mxu0 0.0
    %956 = vmatprep.subr.mxu0 0.0
    %957 = vmatpush1.msra.mxu0 0.0
    %958 = vmatprep.subr.mxu0 0.0
    %959 = vmatpush1.msra.mxu0 0.0
    %960 = vmatprep.subr.mxu0 0.0
    %961 = vmatpush1.msra.mxu0 0.0
    %962 = vmatprep.subr.mxu0 0.0
    %963 = vmatpush1.msra.mxu0 0.0
    %964 = vmatprep.subr.mxu0 0.0
    %965 = vmatpush1.msra.mxu0 0.0
    %966 = vmatprep.subr.mxu0 0.0
    %967 = vmatpush1.msra.mxu0 0.0
    %968 = vmatprep.subr.mxu0 0.0
    %969 = vmatpush1.msra.mxu0 0.0
    %970 = vmatprep.subr.mxu0 0.0
    %971 = vmatpush1.msra.mxu0 0.0
    %972 = vmatprep.subr.mxu0 0.0
    %973 = vmatpush1.msra.mxu0 0.0
    %974 = vmatprep.subr.mxu0 0.0
    %975 = vmatpush1.msra.mxu0 0.0
    %976 = vmatprep.subr.mxu0 0.0
    %977 = vmatpush1.msra.mxu0 0.0
    %978 = vmatprep.subr.mxu0 0.0
    %979 = vmatpush1.msra.mxu0 0.0
    %980 = vmatprep.mubr.f32.mxu0 0.0
    %v981 = vand.u32 %v891, 4294901760
    %v982 = vsub.f32 %v891, %v981
    %v983 = vand.u32 %v982, 4294901760
    %v984 = vsub.f32 %v982, %v983
    %v985 = vand.u32 %v984, 4294901760
    %986 = vmatmul.mubr.f32.gmra.mrb[0].mxu0 %v985
    %v987 = vpop.f32.mrb[0].mxu0
    %v988 = vadd.f32 0.0, %v987
    %v989 = vpop.f32.mrb[0].mxu0
    %990 = vmatprep.mubr.f32.mxu0 0.0
    %v991 = vand.u32 %v894, 4294901760
    %v992 = vsub.f32 %v894, %v991
    %v993 = vand.u32 %v992, 4294901760
    %v994 = vsub.f32 %v992, %v993
    %v995 = vand.u32 %v994, 4294901760
    %996 = vmatmul.mubr.f32.gmra.mrb[0].mxu0 %v995
    %v997 = vpop.f32.mrb[0].mxu0
    %v998 = vadd.f32 0.0, %v997
    %v999 = vpop.f32.mrb[0].mxu0
    %1000 = vmatprep.mubr.f32.mxu0 0.0
    %v1001 = vand.u32 %v897, 4294901760
    %v1002 = vsub.f32 %v897, %v1001
    %v1003 = vand.u32 %v1002, 4294901760
    %v1004 = vsub.f32 %v1002, %v1003
    %v1005 = vand.u32 %v1004, 4294901760
    %1006 = vmatmul.mubr.f32.gmra.mrb[0].mxu0 %v1005
    %v1007 = vpop.f32.mrb[0].mxu0
    %v1008 = vadd.f32 0.0, %v1007
    %v1009 = vpop.f32.mrb[0].mxu0
    %1010 = vmatprep.mubr.f32.mxu0 0.0
    %v1011 = vand.u32 %v900, 4294901760
    %v1012 = vsub.f32 %v900, %v1011
    %v1013 = vand.u32 %v1012, 4294901760
    %v1014 = vsub.f32 %v1012, %v1013
    %v1015 = vand.u32 %v1014, 4294901760
    %1016 = vmatmul.mubr.f32.gmra.mrb[0].mxu0 %v1015
    %v1017 = vpop.f32.mrb[0].mxu0
    %v1018 = vadd.f32 0.0, %v1017
    %v1019 = vpop.f32.mrb[0].mxu0
    %1020 = vmatprep.mubr.f32.mxu0 0.0
    %v1021 = vand.u32 %v903, 4294901760
    %v1022 = vsub.f32 %v903, %v1021
    %v1023 = vand.u32 %v1022, 4294901760
    %v1024 = vsub.f32 %v1022, %v1023
    %v1025 = vand.u32 %v1024, 4294901760
    %1026 = vmatmul.mubr.f32.gmra.mrb[0].mxu0 %v1025
    %v1027 = vpop.f32.mrb[0].mxu0
    %v1028 = vadd.f32 0.0, %v1027
    %v1029 = vpop.f32.mrb[0].mxu0
    %1030 = vmatprep.mubr.f32.mxu0 0.0
    %v1031 = vand.u32 %v906, 4294901760
    %v1032 = vsub.f32 %v906, %v1031
    %v1033 = vand.u32 %v1032, 4294901760
    %v1034 = vsub.f32 %v1032, %v1033
    %v1035 = vand.u32 %v1034, 4294901760
    %1036 = vmatmul.mubr.f32.gmra.mrb[0].mxu0 %v1035
    %v1037 = vpop.f32.mrb[0].mxu0
    %v1038 = vadd.f32 0.0, %v1037
    %v1039 = vpop.f32.mrb[0].mxu0
    %1040 = vmatprep.mubr.f32.mxu0 0.0
    %v1041 = vand.u32 %v909, 4294901760
    %v1042 = vsub.f32 %v909, %v1041
    %v1043 = vand.u32 %v1042, 4294901760
    %v1044 = vsub.f32 %v1042, %v1043
    %v1045 = vand.u32 %v1044, 4294901760
    %1046 = vmatmul.mubr.f32.gmra.mrb[0].mxu0 %v1045
    %v1047 = vpop.f32.mrb[0].mxu0
    %v1048 = vadd.f32 0.0, %v1047
    %v1049 = vpop.f32.mrb[0].mxu0
    %1050 = vmatprep.mubr.f32.mxu0 0.0
    %v1051 = vand.u32 %v912, 4294901760
    %v1052 = vsub.f32 %v912, %v1051
    %v1053 = vand.u32 %v1052, 4294901760
    %v1054 = vsub.f32 %v1052, %v1053
    %v1055 = vand.u32 %v1054, 4294901760
    %1056 = vmatmul.mubr.f32.gmra.mrb[0].mxu0 %v1055
    %v1057 = vpop.f32.mrb[0].mxu0
    %v1058 = vadd.f32 0.0, %v1057
    %v1059 = vpop.f32.mrb[0].mxu0
    %1060 = vdwg.mxu0
    %1061 = vmatprep.subr.mxu0 0.0
    %v1062 = vand.u32 %v103, 4294901760
    %v1063 = vsub.f32 %v103, %v1062
    %v1064 = vand.u32 %v1063, 4294901760
    %v1065 = vsub.f32 %v1063, %v1064
    %v1066 = vand.u32 %v1065, 4294901760
    %1067 = vmatpush1.msra.mxu0 %v1066
    %1068 = vmatprep.subr.mxu0 0.0
    %v1069 = vand.u32 %v104, 4294901760
    %v1070 = vsub.f32 %v104, %v1069
    %v1071 = vand.u32 %v1070, 4294901760
    %v1072 = vsub.f32 %v1070, %v1071
    %v1073 = vand.u32 %v1072, 4294901760
    %1074 = vmatpush1.msra.mxu0 %v1073
    %1075 = vmatprep.subr.mxu0 0.0
    %1076 = vmatpush1.msra.mxu0 0.0
    %1077 = vmatprep.subr.mxu0 0.0
    %1078 = vmatpush1.msra.mxu0 0.0
    %1079 = vmatprep.subr.mxu0 0.0
    %1080 = vmatpush1.msra.mxu0 0.0
    %1081 = vmatprep.subr.mxu0 0.0
    %1082 = vmatpush1.msra.mxu0 0.0
    %1083 = vmatprep.subr.mxu0 0.0
    %1084 = vmatpush1.msra.mxu0 0.0
    %1085 = vmatprep.subr.mxu0 0.0
    %1086 = vmatpush1.msra.mxu0 0.0
    %1087 = vmatprep.subr.mxu0 0.0
    %1088 = vmatpush1.msra.mxu0 0.0
    %1089 = vmatprep.subr.mxu0 0.0
    %1090 = vmatpush1.msra.mxu0 0.0
    %1091 = vmatprep.subr.mxu0 0.0
    %1092 = vmatpush1.msra.mxu0 0.0
    %1093 = vmatprep.subr.mxu0 0.0
    %1094 = vmatpush1.msra.mxu0 0.0
    %1095 = vmatprep.subr.mxu0 0.0
    %1096 = vmatpush1.msra.mxu0 0.0
    %1097 = vmatprep.subr.mxu0 0.0
    %1098 = vmatpush1.msra.mxu0 0.0
    %1099 = vmatprep.subr.mxu0 0.0
    %1100 = vmatpush1.msra.mxu0 0.0
    %1101 = vmatprep.subr.mxu0 0.0
    %1102 = vmatpush1.msra.mxu0 0.0
    %1103 = vmatprep.subr.mxu0 0.0
    %1104 = vmatpush1.msra.mxu0 0.0
    %1105 = vmatprep.subr.mxu0 0.0
    %1106 = vmatpush1.msra.mxu0 0.0
    %1107 = vmatprep.subr.mxu0 0.0
    %1108 = vmatpush1.msra.mxu0 0.0
    %1109 = vmatprep.subr.mxu0 0.0
    %1110 = vmatpush1.msra.mxu0 0.0
    %1111 = vmatprep.subr.mxu0 0.0
    %1112 = vmatpush1.msra.mxu0 0.0
    %1113 = vmatprep.subr.mxu0 0.0
    %1114 = vmatpush1.msra.mxu0 0.0
    %1115 = vmatprep.subr.mxu0 0.0
    %1116 = vmatpush1.msra.mxu0 0.0
    %1117 = vmatprep.subr.mxu0 0.0
    %1118 = vmatpush1.msra.mxu0 0.0
    %1119 = vmatprep.subr.mxu0 0.0
    %1120 = vmatpush1.msra.mxu0 0.0
    %1121 = vmatprep.subr.mxu0 0.0
    %1122 = vmatpush1.msra.mxu0 0.0
    %1123 = vmatprep.subr.mxu0 0.0
    %1124 = vmatpush1.msra.mxu0 0.0
    %1125 = vmatprep.subr.mxu0 0.0
    %1126 = vmatpush1.msra.mxu0 0.0
    %1127 = vmatprep.subr.mxu0 0.0
    %1128 = vmatpush1.msra.mxu0 0.0
    %1129 = vmatprep.subr.mxu0 0.0
    %1130 = vmatpush1.msra.mxu0 0.0
    %1131 = vmatprep.subr.mxu0 0.0
    %1132 = vmatpush1.msra.mxu0 0.0
    %1133 = vmatprep.subr.mxu0 0.0
    %1134 = vmatpush1.msra.mxu0 0.0
    %1135 = vmatprep.mubr.f32.mxu0 0.0
    %v1136 = vand.u32 %v891, 4294901760
    %1137 = vmatmul.mubr.f32.gmra.mrb[0].mxu0 %v1136
    %v1138 = vpop.f32.mrb[0].mxu0
    %v1139 = vadd.f32 %v988, %v1138
    %v1140 = vpop.f32.mrb[0].mxu0
    %1141 = vmatprep.mubr.f32.mxu0 0.0
    %v1142 = vand.u32 %v894, 4294901760
    %1143 = vmatmul.mubr.f32.gmra.mrb[0].mxu0 %v1142
    %v1144 = vpop.f32.mrb[0].mxu0
    %v1145 = vadd.f32 %v998, %v1144
    %v1146 = vpop.f32.mrb[0].mxu0
    %1147 = vmatprep.mubr.f32.mxu0 0.0
    %v1148 = vand.u32 %v897, 4294901760
    %1149 = vmatmul.mubr.f32.gmra.mrb[0].mxu0 %v1148
    %v1150 = vpop.f32.mrb[0].mxu0
    %v1151 = vadd.f32 %v1008, %v1150
    %v1152 = vpop.f32.mrb[0].mxu0
    %1153 = vmatprep.mubr.f32.mxu0 0.0
    %v1154 = vand.u32 %v900, 4294901760
    %1155 = vmatmul.mubr.f32.gmra.mrb[0].mxu0 %v1154
    %v1156 = vpop.f32.mrb[0].mxu0
    %v1157 = vadd.f32 %v1018, %v1156
    %v1158 = vpop.f32.mrb[0].mxu0
    %1159 = vmatprep.mubr.f32.mxu0 0.0
    %v1160 = vand.u32 %v903, 4294901760
    %1161 = vmatmul.mubr.f32.gmra.mrb[0].mxu0 %v1160
    %v1162 = vpop.f32.mrb[0].mxu0
    %v1163 = vadd.f32 %v1028, %v1162
    %v1164 = vpop.f32.mrb[0].mxu0
    %1165 = vmatprep.mubr.f32.mxu0 0.0
    %v1166 = vand.u32 %v906, 4294901760
    %1167 = vmatmul.mubr.f32.gmra.mrb[0].mxu0 %v1166
    %v1168 = vpop.f32.mrb[0].mxu0
    %v1169 = vadd.f32 %v1038, %v1168
    %v1170 = vpop.f32.mrb[0].mxu0
    %1171 = vmatprep.mubr.f32.mxu0 0.0
    %v1172 = vand.u32 %v909, 4294901760
    %1173 = vmatmul.mubr.f32.gmra.mrb[0].mxu0 %v1172
    %v1174 = vpop.f32.mrb[0].mxu0
    %v1175 = vadd.f32 %v1048, %v1174
    %v1176 = vpop.f32.mrb[0].mxu0
    %1177 = vmatprep.mubr.f32.mxu0 0.0
    %v1178 = vand.u32 %v912, 4294901760
    %1179 = vmatmul.mubr.f32.gmra.mrb[0].mxu0 %v1178
    %v1180 = vpop.f32.mrb[0].mxu0
    %v1181 = vadd.f32 %v1058, %v1180
    %v1182 = vpop.f32.mrb[0].mxu0
    %1183 = vdwg.mxu0
    %1184 = vmatprep.subr.mxu0 0.0
    %v1185 = vand.u32 %v103, 4294901760
    %v1186 = vsub.f32 %v103, %v1185
    %1187 = vmatpush1.msra.mxu0 %v1186
    %1188 = vmatprep.subr.mxu0 0.0
    %v1189 = vand.u32 %v104, 4294901760
    %v1190 = vsub.f32 %v104, %v1189
    %1191 = vmatpush1.msra.mxu0 %v1190
    %1192 = vmatprep.subr.mxu0 0.0
    %1193 = vmatpush1.msra.mxu0 0.0
    %1194 = vmatprep.subr.mxu0 0.0
    %1195 = vmatpush1.msra.mxu0 0.0
    %1196 = vmatprep.subr.mxu0 0.0
    %1197 = vmatpush1.msra.mxu0 0.0
    %1198 = vmatprep.subr.mxu0 0.0
    %1199 = vmatpush1.msra.mxu0 0.0
    %1200 = vmatprep.subr.mxu0 0.0
    %1201 = vmatpush1.msra.mxu0 0.0
    %1202 = vmatprep.subr.mxu0 0.0
    %1203 = vmatpush1.msra.mxu0 0.0
    %1204 = vmatprep.subr.mxu0 0.0
    %1205 = vmatpush1.msra.mxu0 0.0
    %1206 = vmatprep.subr.mxu0 0.0
    %1207 = vmatpush1.msra.mxu0 0.0
    %1208 = vmatprep.subr.mxu0 0.0
    %1209 = vmatpush1.msra.mxu0 0.0
    %1210 = vmatprep.subr.mxu0 0.0
    %1211 = vmatpush1.msra.mxu0 0.0
    %1212 = vmatprep.subr.mxu0 0.0
    %1213 = vmatpush1.msra.mxu0 0.0
    %1214 = vmatprep.subr.mxu0 0.0
    %1215 = vmatpush1.msra.mxu0 0.0
    %1216 = vmatprep.subr.mxu0 0.0
    %1217 = vmatpush1.msra.mxu0 0.0
    %1218 = vmatprep.subr.mxu0 0.0
    %1219 = vmatpush1.msra.mxu0 0.0
    %1220 = vmatprep.subr.mxu0 0.0
    %1221 = vmatpush1.msra.mxu0 0.0
    %1222 = vmatprep.subr.mxu0 0.0
    %1223 = vmatpush1.msra.mxu0 0.0
    %1224 = vmatprep.subr.mxu0 0.0
    %1225 = vmatpush1.msra.mxu0 0.0
    %1226 = vmatprep.subr.mxu0 0.0
    %1227 = vmatpush1.msra.mxu0 0.0
    %1228 = vmatprep.subr.mxu0 0.0
    %1229 = vmatpush1.msra.mxu0 0.0
    %1230 = vmatprep.subr.mxu0 0.0
    %1231 = vmatpush1.msra.mxu0 0.0
    %1232 = vmatprep.subr.mxu0 0.0
    %1233 = vmatpush1.msra.mxu0 0.0
    %1234 = vmatprep.subr.mxu0 0.0
    %1235 = vmatpush1.msra.mxu0 0.0
    %1236 = vmatprep.subr.mxu0 0.0
    %1237 = vmatpush1.msra.mxu0 0.0
    %1238 = vmatprep.subr.mxu0 0.0
    %1239 = vmatpush1.msra.mxu0 0.0
    %1240 = vmatprep.subr.mxu0 0.0
    %1241 = vmatpush1.msra.mxu0 0.0
    %1242 = vmatprep.subr.mxu0 0.0
    %1243 = vmatpush1.msra.mxu0 0.0
    %1244 = vmatprep.subr.mxu0 0.0
    %1245 = vmatpush1.msra.mxu0 0.0
    %1246 = vmatprep.subr.mxu0 0.0
    %1247 = vmatpush1.msra.mxu0 0.0
    %1248 = vmatprep.subr.mxu0 0.0
    %1249 = vmatpush1.msra.mxu0 0.0
    %1250 = vmatprep.subr.mxu0 0.0
    %1251 = vmatpush1.msra.mxu0 0.0
    %1252 = vmatprep.mubr.f32.mxu0 0.0
    %v1253 = vand.u32 %v891, 4294901760
    %v1254 = vsub.f32 %v891, %v1253
    %1255 = vmatmul.mubr.f32.gmra.mrb[0].mxu0 %v1254
    %v1256 = vpop.f32.mrb[0].mxu0
    %v1257 = vadd.f32 %v1139, %v1256
    %v1258 = vpop.f32.mrb[0].mxu0
    %1259 = vmatprep.mubr.f32.mxu0 0.0
    %v1260 = vand.u32 %v894, 4294901760
    %v1261 = vsub.f32 %v894, %v1260
    %1262 = vmatmul.mubr.f32.gmra.mrb[0].mxu0 %v1261
    %v1263 = vpop.f32.mrb[0].mxu0
    %v1264 = vadd.f32 %v1145, %v1263
    %v1265 = vpop.f32.mrb[0].mxu0
    %1266 = vmatprep.mubr.f32.mxu0 0.0
    %v1267 = vand.u32 %v897, 4294901760
    %v1268 = vsub.f32 %v897, %v1267
    %1269 = vmatmul.mubr.f32.gmra.mrb[0].mxu0 %v1268
    %v1270 = vpop.f32.mrb[0].mxu0
    %v1271 = vadd.f32 %v1151, %v1270
    %v1272 = vpop.f32.mrb[0].mxu0
    %1273 = vmatprep.mubr.f32.mxu0 0.0
    %v1274 = vand.u32 %v900, 4294901760
    %v1275 = vsub.f32 %v900, %v1274
    %1276 = vmatmul.mubr.f32.gmra.mrb[0].mxu0 %v1275
    %v1277 = vpop.f32.mrb[0].mxu0
    %v1278 = vadd.f32 %v1157, %v1277
    %v1279 = vpop.f32.mrb[0].mxu0
    %1280 = vmatprep.mubr.f32.mxu0 0.0
    %v1281 = vand.u32 %v903, 4294901760
    %v1282 = vsub.f32 %v903, %v1281
    %1283 = vmatmul.mubr.f32.gmra.mrb[0].mxu0 %v1282
    %v1284 = vpop.f32.mrb[0].mxu0
    %v1285 = vadd.f32 %v1163, %v1284
    %v1286 = vpop.f32.mrb[0].mxu0
    %1287 = vmatprep.mubr.f32.mxu0 0.0
    %v1288 = vand.u32 %v906, 4294901760
    %v1289 = vsub.f32 %v906, %v1288
    %1290 = vmatmul.mubr.f32.gmra.mrb[0].mxu0 %v1289
    %v1291 = vpop.f32.mrb[0].mxu0
    %v1292 = vadd.f32 %v1169, %v1291
    %v1293 = vpop.f32.mrb[0].mxu0
    %1294 = vmatprep.mubr.f32.mxu0 0.0
    %v1295 = vand.u32 %v909, 4294901760
    %v1296 = vsub.f32 %v909, %v1295
    %1297 = vmatmul.mubr.f32.gmra.mrb[0].mxu0 %v1296
    %v1298 = vpop.f32.mrb[0].mxu0
    %v1299 = vadd.f32 %v1175, %v1298
    %v1300 = vpop.f32.mrb[0].mxu0
    %1301 = vmatprep.mubr.f32.mxu0 0.0
    %v1302 = vand.u32 %v912, 4294901760
    %v1303 = vsub.f32 %v912, %v1302
    %1304 = vmatmul.mubr.f32.gmra.mrb[0].mxu0 %v1303
    %v1305 = vpop.f32.mrb[0].mxu0
    %v1306 = vadd.f32 %v1181, %v1305
    %v1307 = vpop.f32.mrb[0].mxu0
    %1308 = vdwg.mxu0
    %1309 = vmatprep.subr.mxu0 0.0
    %v1310 = vand.u32 %v103, 4294901760
    %1311 = vmatpush1.msra.mxu0 %v1310
    %1312 = vmatprep.subr.mxu0 0.0
    %v1313 = vand.u32 %v104, 4294901760
    %1314 = vmatpush1.msra.mxu0 %v1313
    %1315 = vmatprep.subr.mxu0 0.0
    %1316 = vmatpush1.msra.mxu0 0.0
    %1317 = vmatprep.subr.mxu0 0.0
    %1318 = vmatpush1.msra.mxu0 0.0
    %1319 = vmatprep.subr.mxu0 0.0
    %1320 = vmatpush1.msra.mxu0 0.0
    %1321 = vmatprep.subr.mxu0 0.0
    %1322 = vmatpush1.msra.mxu0 0.0
    %1323 = vmatprep.subr.mxu0 0.0
    %1324 = vmatpush1.msra.mxu0 0.0
    %1325 = vmatprep.subr.mxu0 0.0
    %1326 = vmatpush1.msra.mxu0 0.0
    %1327 = vmatprep.subr.mxu0 0.0
    %1328 = vmatpush1.msra.mxu0 0.0
    %1329 = vmatprep.subr.mxu0 0.0
    %1330 = vmatpush1.msra.mxu0 0.0
    %1331 = vmatprep.subr.mxu0 0.0
    %1332 = vmatpush1.msra.mxu0 0.0
    %1333 = vmatprep.subr.mxu0 0.0
    %1334 = vmatpush1.msra.mxu0 0.0
    %1335 = vmatprep.subr.mxu0 0.0
    %1336 = vmatpush1.msra.mxu0 0.0
    %1337 = vmatprep.subr.mxu0 0.0
    %1338 = vmatpush1.msra.mxu0 0.0
    %1339 = vmatprep.subr.mxu0 0.0
    %1340 = vmatpush1.msra.mxu0 0.0
    %1341 = vmatprep.subr.mxu0 0.0
    %1342 = vmatpush1.msra.mxu0 0.0
    %1343 = vmatprep.subr.mxu0 0.0
    %1344 = vmatpush1.msra.mxu0 0.0
    %1345 = vmatprep.subr.mxu0 0.0
    %1346 = vmatpush1.msra.mxu0 0.0
    %1347 = vmatprep.subr.mxu0 0.0
    %1348 = vmatpush1.msra.mxu0 0.0
    %1349 = vmatprep.subr.mxu0 0.0
    %1350 = vmatpush1.msra.mxu0 0.0
    %1351 = vmatprep.subr.mxu0 0.0
    %1352 = vmatpush1.msra.mxu0 0.0
    %1353 = vmatprep.subr.mxu0 0.0
    %1354 = vmatpush1.msra.mxu0 0.0
    %1355 = vmatprep.subr.mxu0 0.0
    %1356 = vmatpush1.msra.mxu0 0.0
    %1357 = vmatprep.subr.mxu0 0.0
    %1358 = vmatpush1.msra.mxu0 0.0
    %1359 = vmatprep.subr.mxu0 0.0
    %1360 = vmatpush1.msra.mxu0 0.0
    %1361 = vmatprep.subr.mxu0 0.0
    %1362 = vmatpush1.msra.mxu0 0.0
    %1363 = vmatprep.subr.mxu0 0.0
    %1364 = vmatpush1.msra.mxu0 0.0
    %1365 = vmatprep.subr.mxu0 0.0
    %1366 = vmatpush1.msra.mxu0 0.0
    %1367 = vmatprep.subr.mxu0 0.0
    %1368 = vmatpush1.msra.mxu0 0.0
    %1369 = vmatprep.subr.mxu0 0.0
    %1370 = vmatpush1.msra.mxu0 0.0
    %1371 = vmatprep.subr.mxu0 0.0
    %1372 = vmatpush1.msra.mxu0 0.0
    %1373 = vmatprep.subr.mxu0 0.0
    %1374 = vmatpush1.msra.mxu0 0.0
    %1375 = vmatprep.mubr.f32.mxu0 0.0
    %v1376 = vand.u32 %v891, 4294901760
    %v1377 = vsub.f32 %v891, %v1376
    %v1378 = vand.u32 %v1377, 4294901760
    %1379 = vmatmul.mubr.f32.gmra.mrb[0].mxu0 %v1378
    %v1380 = vpop.f32.mrb[0].mxu0
    %v1381 = vadd.f32 %v1257, %v1380
    %v1382 = vpop.f32.mrb[0].mxu0
    %1383 = vmatprep.mubr.f32.mxu0 0.0
    %v1384 = vand.u32 %v894, 4294901760
    %v1385 = vsub.f32 %v894, %v1384
    %v1386 = vand.u32 %v1385, 4294901760
    %1387 = vmatmul.mubr.f32.gmra.mrb[0].mxu0 %v1386
    %v1388 = vpop.f32.mrb[0].mxu0
    %v1389 = vadd.f32 %v1264, %v1388
    %v1390 = vpop.f32.mrb[0].mxu0
    %1391 = vmatprep.mubr.f32.mxu0 0.0
    %v1392 = vand.u32 %v897, 4294901760
    %v1393 = vsub.f32 %v897, %v1392
    %v1394 = vand.u32 %v1393, 4294901760
    %1395 = vmatmul.mubr.f32.gmra.mrb[0].mxu0 %v1394
    %v1396 = vpop.f32.mrb[0].mxu0
    %v1397 = vadd.f32 %v1271, %v1396
    %v1398 = vpop.f32.mrb[0].mxu0
    %1399 = vmatprep.mubr.f32.mxu0 0.0
    %v1400 = vand.u32 %v900, 4294901760
    %v1401 = vsub.f32 %v900, %v1400
    %v1402 = vand.u32 %v1401, 4294901760
    %1403 = vmatmul.mubr.f32.gmra.mrb[0].mxu0 %v1402
    %v1404 = vpop.f32.mrb[0].mxu0
    %v1405 = vadd.f32 %v1278, %v1404
    %v1406 = vpop.f32.mrb[0].mxu0
    %1407 = vmatprep.mubr.f32.mxu0 0.0
    %v1408 = vand.u32 %v903, 4294901760
    %v1409 = vsub.f32 %v903, %v1408
    %v1410 = vand.u32 %v1409, 4294901760
    %1411 = vmatmul.mubr.f32.gmra.mrb[0].mxu0 %v1410
    %v1412 = vpop.f32.mrb[0].mxu0
    %v1413 = vadd.f32 %v1285, %v1412
    %v1414 = vpop.f32.mrb[0].mxu0
    %1415 = vmatprep.mubr.f32.mxu0 0.0
    %v1416 = vand.u32 %v906, 4294901760
    %v1417 = vsub.f32 %v906, %v1416
    %v1418 = vand.u32 %v1417, 4294901760
    %1419 = vmatmul.mubr.f32.gmra.mrb[0].mxu0 %v1418
    %v1420 = vpop.f32.mrb[0].mxu0
    %v1421 = vadd.f32 %v1292, %v1420
    %v1422 = vpop.f32.mrb[0].mxu0
    %1423 = vmatprep.mubr.f32.mxu0 0.0
    %v1424 = vand.u32 %v909, 4294901760
    %v1425 = vsub.f32 %v909, %v1424
    %v1426 = vand.u32 %v1425, 4294901760
    %1427 = vmatmul.mubr.f32.gmra.mrb[0].mxu0 %v1426
    %v1428 = vpop.f32.mrb[0].mxu0
    %v1429 = vadd.f32 %v1299, %v1428
    %v1430 = vpop.f32.mrb[0].mxu0
    %1431 = vmatprep.mubr.f32.mxu0 0.0
    %v1432 = vand.u32 %v912, 4294901760
    %v1433 = vsub.f32 %v912, %v1432
    %v1434 = vand.u32 %v1433, 4294901760
    %1435 = vmatmul.mubr.f32.gmra.mrb[0].mxu0 %v1434
    %v1436 = vpop.f32.mrb[0].mxu0
    %v1437 = vadd.f32 %v1306, %v1436
    %v1438 = vpop.f32.mrb[0].mxu0
    %1439 = vdwg.mxu0
    %1440 = vmatprep.subr.mxu0 0.0
    %v1441 = vand.u32 %v103, 4294901760
    %v1442 = vsub.f32 %v103, %v1441
    %v1443 = vand.u32 %v1442, 4294901760
    %1444 = vmatpush1.msra.mxu0 %v1443
    %1445 = vmatprep.subr.mxu0 0.0
    %v1446 = vand.u32 %v104, 4294901760
    %v1447 = vsub.f32 %v104, %v1446
    %v1448 = vand.u32 %v1447, 4294901760
    %1449 = vmatpush1.msra.mxu0 %v1448
    %1450 = vmatprep.subr.mxu0 0.0
    %1451 = vmatpush1.msra.mxu0 0.0
    %1452 = vmatprep.subr.mxu0 0.0
    %1453 = vmatpush1.msra.mxu0 0.0
    %1454 = vmatprep.subr.mxu0 0.0
    %1455 = vmatpush1.msra.mxu0 0.0
    %1456 = vmatprep.subr.mxu0 0.0
    %1457 = vmatpush1.msra.mxu0 0.0
    %1458 = vmatprep.subr.mxu0 0.0
    %1459 = vmatpush1.msra.mxu0 0.0
    %1460 = vmatprep.subr.mxu0 0.0
    %1461 = vmatpush1.msra.mxu0 0.0
    %1462 = vmatprep.subr.mxu0 0.0
    %1463 = vmatpush1.msra.mxu0 0.0
    %1464 = vmatprep.subr.mxu0 0.0
    %1465 = vmatpush1.msra.mxu0 0.0
    %1466 = vmatprep.subr.mxu0 0.0
    %1467 = vmatpush1.msra.mxu0 0.0
    %1468 = vmatprep.subr.mxu0 0.0
    %1469 = vmatpush1.msra.mxu0 0.0
    %1470 = vmatprep.subr.mxu0 0.0
    %1471 = vmatpush1.msra.mxu0 0.0
    %1472 = vmatprep.subr.mxu0 0.0
    %1473 = vmatpush1.msra.mxu0 0.0
    %1474 = vmatprep.subr.mxu0 0.0
    %1475 = vmatpush1.msra.mxu0 0.0
    %1476 = vmatprep.subr.mxu0 0.0
    %1477 = vmatpush1.msra.mxu0 0.0
    %1478 = vmatprep.subr.mxu0 0.0
    %1479 = vmatpush1.msra.mxu0 0.0
    %1480 = vmatprep.subr.mxu0 0.0
    %1481 = vmatpush1.msra.mxu0 0.0
    %1482 = vmatprep.subr.mxu0 0.0
    %1483 = vmatpush1.msra.mxu0 0.0
    %1484 = vmatprep.subr.mxu0 0.0
    %1485 = vmatpush1.msra.mxu0 0.0
    %1486 = vmatprep.subr.mxu0 0.0
    %1487 = vmatpush1.msra.mxu0 0.0
    %1488 = vmatprep.subr.mxu0 0.0
    %1489 = vmatpush1.msra.mxu0 0.0
    %1490 = vmatprep.subr.mxu0 0.0
    %1491 = vmatpush1.msra.mxu0 0.0
    %1492 = vmatprep.subr.mxu0 0.0
    %1493 = vmatpush1.msra.mxu0 0.0
    %1494 = vmatprep.subr.mxu0 0.0
    %1495 = vmatpush1.msra.mxu0 0.0
    %1496 = vmatprep.subr.mxu0 0.0
    %1497 = vmatpush1.msra.mxu0 0.0
    %1498 = vmatprep.subr.mxu0 0.0
    %1499 = vmatpush1.msra.mxu0 0.0
    %1500 = vmatprep.subr.mxu0 0.0
    %1501 = vmatpush1.msra.mxu0 0.0
    %1502 = vmatprep.subr.mxu0 0.0
    %1503 = vmatpush1.msra.mxu0 0.0
    %1504 = vmatprep.subr.mxu0 0.0
    %1505 = vmatpush1.msra.mxu0 0.0
    %1506 = vmatprep.subr.mxu0 0.0
    %1507 = vmatpush1.msra.mxu0 0.0
    %1508 = vmatprep.subr.mxu0 0.0
    %1509 = vmatpush1.msra.mxu0 0.0
    %1510 = vmatprep.mubr.f32.mxu0 0.0
    %v1511 = vand.u32 %v891, 4294901760
    %1512 = vmatmul.mubr.f32.gmra.mrb[0].mxu0 %v1511
    %v1513 = vpop.f32.mrb[0].mxu0
    %v1514 = vadd.f32 %v1381, %v1513
    %v1515 = vpop.f32.mrb[0].mxu0
    %1516 = vmatprep.mubr.f32.mxu0 0.0
    %v1517 = vand.u32 %v894, 4294901760
    %1518 = vmatmul.mubr.f32.gmra.mrb[0].mxu0 %v1517
    %v1519 = vpop.f32.mrb[0].mxu0
    %v1520 = vadd.f32 %v1389, %v1519
    %v1521 = vpop.f32.mrb[0].mxu0
    %1522 = vmatprep.mubr.f32.mxu0 0.0
    %v1523 = vand.u32 %v897, 4294901760
    %1524 = vmatmul.mubr.f32.gmra.mrb[0].mxu0 %v1523
    %v1525 = vpop.f32.mrb[0].mxu0
    %v1526 = vadd.f32 %v1397, %v1525
    %v1527 = vpop.f32.mrb[0].mxu0
    %1528 = vmatprep.mubr.f32.mxu0 0.0
    %v1529 = vand.u32 %v900, 4294901760
    %1530 = vmatmul.mubr.f32.gmra.mrb[0].mxu0 %v1529
    %v1531 = vpop.f32.mrb[0].mxu0
    %v1532 = vadd.f32 %v1405, %v1531
    %v1533 = vpop.f32.mrb[0].mxu0
    %1534 = vmatprep.mubr.f32.mxu0 0.0
    %v1535 = vand.u32 %v903, 4294901760
    %1536 = vmatmul.mubr.f32.gmra.mrb[0].mxu0 %v1535
    %v1537 = vpop.f32.mrb[0].mxu0
    %v1538 = vadd.f32 %v1413, %v1537
    %v1539 = vpop.f32.mrb[0].mxu0
    %1540 = vmatprep.mubr.f32.mxu0 0.0
    %v1541 = vand.u32 %v906, 4294901760
    %1542 = vmatmul.mubr.f32.gmra.mrb[0].mxu0 %v1541
    %v1543 = vpop.f32.mrb[0].mxu0
    %v1544 = vadd.f32 %v1421, %v1543
    %v1545 = vpop.f32.mrb[0].mxu0
    %1546 = vmatprep.mubr.f32.mxu0 0.0
    %v1547 = vand.u32 %v909, 4294901760
    %1548 = vmatmul.mubr.f32.gmra.mrb[0].mxu0 %v1547
    %v1549 = vpop.f32.mrb[0].mxu0
    %v1550 = vadd.f32 %v1429, %v1549
    %v1551 = vpop.f32.mrb[0].mxu0
    %1552 = vmatprep.mubr.f32.mxu0 0.0
    %v1553 = vand.u32 %v912, 4294901760
    %1554 = vmatmul.mubr.f32.gmra.mrb[0].mxu0 %v1553
    %v1555 = vpop.f32.mrb[0].mxu0
    %v1556 = vadd.f32 %v1437, %v1555
    %v1557 = vpop.f32.mrb[0].mxu0
    %1558 = vdwg.mxu0
    %1559 = vmatprep.subr.mxu0 0.0
    %v1560 = vand.u32 %v103, 4294901760
    %1561 = vmatpush1.msra.mxu0 %v1560
    %1562 = vmatprep.subr.mxu0 0.0
    %v1563 = vand.u32 %v104, 4294901760
    %1564 = vmatpush1.msra.mxu0 %v1563
    %1565 = vmatprep.subr.mxu0 0.0
    %1566 = vmatpush1.msra.mxu0 0.0
    %1567 = vmatprep.subr.mxu0 0.0
    %1568 = vmatpush1.msra.mxu0 0.0
    %1569 = vmatprep.subr.mxu0 0.0
    %1570 = vmatpush1.msra.mxu0 0.0
    %1571 = vmatprep.subr.mxu0 0.0
    %1572 = vmatpush1.msra.mxu0 0.0
    %1573 = vmatprep.subr.mxu0 0.0
    %1574 = vmatpush1.msra.mxu0 0.0
    %1575 = vmatprep.subr.mxu0 0.0
    %1576 = vmatpush1.msra.mxu0 0.0
    %1577 = vmatprep.subr.mxu0 0.0
    %1578 = vmatpush1.msra.mxu0 0.0
    %1579 = vmatprep.subr.mxu0 0.0
    %1580 = vmatpush1.msra.mxu0 0.0
    %1581 = vmatprep.subr.mxu0 0.0
    %1582 = vmatpush1.msra.mxu0 0.0
    %1583 = vmatprep.subr.mxu0 0.0
    %1584 = vmatpush1.msra.mxu0 0.0
    %1585 = vmatprep.subr.mxu0 0.0
    %1586 = vmatpush1.msra.mxu0 0.0
    %1587 = vmatprep.subr.mxu0 0.0
    %1588 = vmatpush1.msra.mxu0 0.0
    %1589 = vmatprep.subr.mxu0 0.0
    %1590 = vmatpush1.msra.mxu0 0.0
    %1591 = vmatprep.subr.mxu0 0.0
    %1592 = vmatpush1.msra.mxu0 0.0
    %1593 = vmatprep.subr.mxu0 0.0
    %1594 = vmatpush1.msra.mxu0 0.0
    %1595 = vmatprep.subr.mxu0 0.0
    %1596 = vmatpush1.msra.mxu0 0.0
    %1597 = vmatprep.subr.mxu0 0.0
    %1598 = vmatpush1.msra.mxu0 0.0
    %1599 = vmatprep.subr.mxu0 0.0
    %1600 = vmatpush1.msra.mxu0 0.0
    %1601 = vmatprep.subr.mxu0 0.0
    %1602 = vmatpush1.msra.mxu0 0.0
    %1603 = vmatprep.subr.mxu0 0.0
    %1604 = vmatpush1.msra.mxu0 0.0
    %1605 = vmatprep.subr.mxu0 0.0
    %1606 = vmatpush1.msra.mxu0 0.0
    %1607 = vmatprep.subr.mxu0 0.0
    %1608 = vmatpush1.msra.mxu0 0.0
    %1609 = vmatprep.subr.mxu0 0.0
    %1610 = vmatpush1.msra.mxu0 0.0
    %1611 = vmatprep.subr.mxu0 0.0
    %1612 = vmatpush1.msra.mxu0 0.0
    %1613 = vmatprep.subr.mxu0 0.0
    %1614 = vmatpush1.msra.mxu0 0.0
    %1615 = vmatprep.subr.mxu0 0.0
    %1616 = vmatpush1.msra.mxu0 0.0
    %1617 = vmatprep.subr.mxu0 0.0
    %1618 = vmatpush1.msra.mxu0 0.0
    %1619 = vmatprep.subr.mxu0 0.0
    %1620 = vmatpush1.msra.mxu0 0.0
    %1621 = vmatprep.subr.mxu0 0.0
    %1622 = vmatpush1.msra.mxu0 0.0
    %1623 = vmatprep.subr.mxu0 0.0
    %1624 = vmatpush1.msra.mxu0 0.0
    %1625 = vmatprep.mubr.f32.mxu0 0.0
    %v1626 = vand.u32 %v891, 4294901760
    %1627 = vmatmul.mubr.f32.gmra.mrb[0].mxu0 %v1626
    %v1628 = vpop.f32.mrb[0].mxu0
    %v1629 = vadd.f32 %v1514, %v1628
    %v1630 = vpop.f32.mrb[0].mxu0
    %1631 = vmatprep.mubr.f32.mxu0 0.0
    %v1632 = vand.u32 %v894, 4294901760
    %1633 = vmatmul.mubr.f32.gmra.mrb[0].mxu0 %v1632
    %v1634 = vpop.f32.mrb[0].mxu0
    %v1635 = vadd.f32 %v1520, %v1634
    %v1636 = vpop.f32.mrb[0].mxu0
    %1637 = vmatprep.mubr.f32.mxu0 0.0
    %v1638 = vand.u32 %v897, 4294901760
    %1639 = vmatmul.mubr.f32.gmra.mrb[0].mxu0 %v1638
    %v1640 = vpop.f32.mrb[0].mxu0
    %v1641 = vadd.f32 %v1526, %v1640
    %v1642 = vpop.f32.mrb[0].mxu0
    %1643 = vmatprep.mubr.f32.mxu0 0.0
    %v1644 = vand.u32 %v900, 4294901760
    %1645 = vmatmul.mubr.f32.gmra.mrb[0].mxu0 %v1644
    %v1646 = vpop.f32.mrb[0].mxu0
    %v1647 = vadd.f32 %v1532, %v1646
    %v1648 = vpop.f32.mrb[0].mxu0
    %1649 = vmatprep.mubr.f32.mxu0 0.0
    %v1650 = vand.u32 %v903, 4294901760
    %1651 = vmatmul.mubr.f32.gmra.mrb[0].mxu0 %v1650
    %v1652 = vpop.f32.mrb[0].mxu0
    %v1653 = vadd.f32 %v1538, %v1652
    %v1654 = vpop.f32.mrb[0].mxu0
    %1655 = vmatprep.mubr.f32.mxu0 0.0
    %v1656 = vand.u32 %v906, 4294901760
    %1657 = vmatmul.mubr.f32.gmra.mrb[0].mxu0 %v1656
    %v1658 = vpop.f32.mrb[0].mxu0
    %v1659 = vadd.f32 %v1544, %v1658
    %v1660 = vpop.f32.mrb[0].mxu0
    %1661 = vmatprep.mubr.f32.mxu0 0.0
    %v1662 = vand.u32 %v909, 4294901760
    %1663 = vmatmul.mubr.f32.gmra.mrb[0].mxu0 %v1662
    %v1664 = vpop.f32.mrb[0].mxu0
    %v1665 = vadd.f32 %v1550, %v1664
    %v1666 = vpop.f32.mrb[0].mxu0
    %1667 = vmatprep.mubr.f32.mxu0 0.0
    %v1668 = vand.u32 %v912, 4294901760
    %1669 = vmatmul.mubr.f32.gmra.mrb[0].mxu0 %v1668
    %v1670 = vpop.f32.mrb[0].mxu0
    %v1671 = vadd.f32 %v1556, %v1670
    %v1672 = vpop.f32.mrb[0].mxu0
    %1673 = vdwg.mxu0
    %v1674 = vsub.f32 %v845, %v1629
    %v1675 = vsub.f32 %v851, %v1635
    %v1676 = vsub.f32 %v857, %v1641
    %v1677 = vsub.f32 %v863, %v1647
    %v1678 = vsub.f32 %v869, %v1653
    %v1679 = vsub.f32 %v875, %v1659
    %v1680 = vsub.f32 %v881, %v1665
    %v1681 = vsub.f32 %v887, %v1671
    %1682 = vmatprep.subr.mxu0 0.0
    %v1683 = vand.u32 %v100, 4294901760
    %1684 = vmatpush1.msra.mxu0 %v1683
    %1685 = vmatprep.subr.mxu0 0.0
    %v1686 = vand.u32 %v101, 4294901760
    %1687 = vmatpush1.msra.mxu0 %v1686
    %1688 = vmatprep.subr.mxu0 0.0
    %1689 = vmatpush1.msra.mxu0 0.0
    %1690 = vmatprep.subr.mxu0 0.0
    %1691 = vmatpush1.msra.mxu0 0.0
    %1692 = vmatprep.subr.mxu0 0.0
    %1693 = vmatpush1.msra.mxu0 0.0
    %1694 = vmatprep.subr.mxu0 0.0
    %1695 = vmatpush1.msra.mxu0 0.0
    %1696 = vmatprep.subr.mxu0 0.0
    %1697 = vmatpush1.msra.mxu0 0.0
    %1698 = vmatprep.subr.mxu0 0.0
    %1699 = vmatpush1.msra.mxu0 0.0
    %1700 = vmatprep.subr.mxu0 0.0
    %1701 = vmatpush1.msra.mxu0 0.0
    %1702 = vmatprep.subr.mxu0 0.0
    %1703 = vmatpush1.msra.mxu0 0.0
    %1704 = vmatprep.subr.mxu0 0.0
    %1705 = vmatpush1.msra.mxu0 0.0
    %1706 = vmatprep.subr.mxu0 0.0
    %1707 = vmatpush1.msra.mxu0 0.0
    %1708 = vmatprep.subr.mxu0 0.0
    %1709 = vmatpush1.msra.mxu0 0.0
    %1710 = vmatprep.subr.mxu0 0.0
    %1711 = vmatpush1.msra.mxu0 0.0
    %1712 = vmatprep.subr.mxu0 0.0
    %1713 = vmatpush1.msra.mxu0 0.0
    %1714 = vmatprep.subr.mxu0 0.0
    %1715 = vmatpush1.msra.mxu0 0.0
    %1716 = vmatprep.subr.mxu0 0.0
    %1717 = vmatpush1.msra.mxu0 0.0
    %1718 = vmatprep.subr.mxu0 0.0
    %1719 = vmatpush1.msra.mxu0 0.0
    %1720 = vmatprep.subr.mxu0 0.0
    %1721 = vmatpush1.msra.mxu0 0.0
    %1722 = vmatprep.subr.mxu0 0.0
    %1723 = vmatpush1.msra.mxu0 0.0
    %1724 = vmatprep.subr.mxu0 0.0
    %1725 = vmatpush1.msra.mxu0 0.0
    %1726 = vmatprep.subr.mxu0 0.0
    %1727 = vmatpush1.msra.mxu0 0.0
    %1728 = vmatprep.subr.mxu0 0.0
    %1729 = vmatpush1.msra.mxu0 0.0
    %1730 = vmatprep.subr.mxu0 0.0
    %1731 = vmatpush1.msra.mxu0 0.0
    %1732 = vmatprep.subr.mxu0 0.0
    %1733 = vmatpush1.msra.mxu0 0.0
    %1734 = vmatprep.subr.mxu0 0.0
    %1735 = vmatpush1.msra.mxu0 0.0
    %1736 = vmatprep.subr.mxu0 0.0
    %1737 = vmatpush1.msra.mxu0 0.0
    %1738 = vmatprep.subr.mxu0 0.0
    %1739 = vmatpush1.msra.mxu0 0.0
    %1740 = vmatprep.subr.mxu0 0.0
    %1741 = vmatpush1.msra.mxu0 0.0
    %1742 = vmatprep.subr.mxu0 0.0
    %1743 = vmatpush1.msra.mxu0 0.0
    %1744 = vmatprep.subr.mxu0 0.0
    %1745 = vmatpush1.msra.mxu0 0.0
    %1746 = vmatprep.subr.mxu0 0.0
    %1747 = vmatpush1.msra.mxu0 0.0
    %1748 = vmatprep.mubr.f32.mxu0 0.0
    %v1749 = vand.u32 %v891, 4294901760
    %v1750 = vsub.f32 %v891, %v1749
    %v1751 = vand.u32 %v1750, 4294901760
    %v1752 = vsub.f32 %v1750, %v1751
    %v1753 = vand.u32 %v1752, 4294901760
    %1754 = vmatmul.mubr.f32.gmra.mrb[0].mxu0 %v1753
    %v1755 = vpop.f32.mrb[0].mxu0
    %v1756 = vadd.f32 0.0, %v1755
    %v1757 = vpop.f32.mrb[0].mxu0
    %1758 = vmatprep.mubr.f32.mxu0 0.0
    %v1759 = vand.u32 %v894, 4294901760
    %v1760 = vsub.f32 %v894, %v1759
    %v1761 = vand.u32 %v1760, 4294901760
    %v1762 = vsub.f32 %v1760, %v1761
    %v1763 = vand.u32 %v1762, 4294901760
    %1764 = vmatmul.mubr.f32.gmra.mrb[0].mxu0 %v1763
    %v1765 = vpop.f32.mrb[0].mxu0
    %v1766 = vadd.f32 0.0, %v1765
    %v1767 = vpop.f32.mrb[0].mxu0
    %1768 = vmatprep.mubr.f32.mxu0 0.0
    %v1769 = vand.u32 %v897, 4294901760
    %v1770 = vsub.f32 %v897, %v1769
    %v1771 = vand.u32 %v1770, 4294901760
    %v1772 = vsub.f32 %v1770, %v1771
    %v1773 = vand.u32 %v1772, 4294901760
    %1774 = vmatmul.mubr.f32.gmra.mrb[0].mxu0 %v1773
    %v1775 = vpop.f32.mrb[0].mxu0
    %v1776 = vadd.f32 0.0, %v1775
    %v1777 = vpop.f32.mrb[0].mxu0
    %1778 = vmatprep.mubr.f32.mxu0 0.0
    %v1779 = vand.u32 %v900, 4294901760
    %v1780 = vsub.f32 %v900, %v1779
    %v1781 = vand.u32 %v1780, 4294901760
    %v1782 = vsub.f32 %v1780, %v1781
    %v1783 = vand.u32 %v1782, 4294901760
    %1784 = vmatmul.mubr.f32.gmra.mrb[0].mxu0 %v1783
    %v1785 = vpop.f32.mrb[0].mxu0
    %v1786 = vadd.f32 0.0, %v1785
    %v1787 = vpop.f32.mrb[0].mxu0
    %1788 = vmatprep.mubr.f32.mxu0 0.0
    %v1789 = vand.u32 %v903, 4294901760
    %v1790 = vsub.f32 %v903, %v1789
    %v1791 = vand.u32 %v1790, 4294901760
    %v1792 = vsub.f32 %v1790, %v1791
    %v1793 = vand.u32 %v1792, 4294901760
    %1794 = vmatmul.mubr.f32.gmra.mrb[0].mxu0 %v1793
    %v1795 = vpop.f32.mrb[0].mxu0
    %v1796 = vadd.f32 0.0, %v1795
    %v1797 = vpop.f32.mrb[0].mxu0
    %1798 = vmatprep.mubr.f32.mxu0 0.0
    %v1799 = vand.u32 %v906, 4294901760
    %v1800 = vsub.f32 %v906, %v1799
    %v1801 = vand.u32 %v1800, 4294901760
    %v1802 = vsub.f32 %v1800, %v1801
    %v1803 = vand.u32 %v1802, 4294901760
    %1804 = vmatmul.mubr.f32.gmra.mrb[0].mxu0 %v1803
    %v1805 = vpop.f32.mrb[0].mxu0
    %v1806 = vadd.f32 0.0, %v1805
    %v1807 = vpop.f32.mrb[0].mxu0
    %1808 = vmatprep.mubr.f32.mxu0 0.0
    %v1809 = vand.u32 %v909, 4294901760
    %v1810 = vsub.f32 %v909, %v1809
    %v1811 = vand.u32 %v1810, 4294901760
    %v1812 = vsub.f32 %v1810, %v1811
    %v1813 = vand.u32 %v1812, 4294901760
    %1814 = vmatmul.mubr.f32.gmra.mrb[0].mxu0 %v1813
    %v1815 = vpop.f32.mrb[0].mxu0
    %v1816 = vadd.f32 0.0, %v1815
    %v1817 = vpop.f32.mrb[0].mxu0
    %1818 = vmatprep.mubr.f32.mxu0 0.0
    %v1819 = vand.u32 %v912, 4294901760
    %v1820 = vsub.f32 %v912, %v1819
    %v1821 = vand.u32 %v1820, 4294901760
    %v1822 = vsub.f32 %v1820, %v1821
    %v1823 = vand.u32 %v1822, 4294901760
    %1824 = vmatmul.mubr.f32.gmra.mrb[0].mxu0 %v1823
    %v1825 = vpop.f32.mrb[0].mxu0
    %v1826 = vadd.f32 0.0, %v1825
    %v1827 = vpop.f32.mrb[0].mxu0
    %1828 = vdwg.mxu0
    %1829 = vmatprep.subr.mxu0 0.0
    %v1830 = vand.u32 %v100, 4294901760
    %v1831 = vsub.f32 %v100, %v1830
    %v1832 = vand.u32 %v1831, 4294901760
    %v1833 = vsub.f32 %v1831, %v1832
    %v1834 = vand.u32 %v1833, 4294901760
    %1835 = vmatpush1.msra.mxu0 %v1834
    %1836 = vmatprep.subr.mxu0 0.0
    %v1837 = vand.u32 %v101, 4294901760
    %v1838 = vsub.f32 %v101, %v1837
    %v1839 = vand.u32 %v1838, 4294901760
    %v1840 = vsub.f32 %v1838, %v1839
    %v1841 = vand.u32 %v1840, 4294901760
    %1842 = vmatpush1.msra.mxu0 %v1841
    %1843 = vmatprep.subr.mxu0 0.0
    %1844 = vmatpush1.msra.mxu0 0.0
    %1845 = vmatprep.subr.mxu0 0.0
    %1846 = vmatpush1.msra.mxu0 0.0
    %1847 = vmatprep.subr.mxu0 0.0
    %1848 = vmatpush1.msra.mxu0 0.0
    %1849 = vmatprep.subr.mxu0 0.0
    %1850 = vmatpush1.msra.mxu0 0.0
    %1851 = vmatprep.subr.mxu0 0.0
    %1852 = vmatpush1.msra.mxu0 0.0
    %1853 = vmatprep.subr.mxu0 0.0
    %1854 = vmatpush1.msra.mxu0 0.0
    %1855 = vmatprep.subr.mxu0 0.0
    %1856 = vmatpush1.msra.mxu0 0.0
    %1857 = vmatprep.subr.mxu0 0.0
    %1858 = vmatpush1.msra.mxu0 0.0
    %1859 = vmatprep.subr.mxu0 0.0
    %1860 = vmatpush1.msra.mxu0 0.0
    %1861 = vmatprep.subr.mxu0 0.0
    %1862 = vmatpush1.msra.mxu0 0.0
    %1863 = vmatprep.subr.mxu0 0.0
    %1864 = vmatpush1.msra.mxu0 0.0
    %1865 = vmatprep.subr.mxu0 0.0
    %1866 = vmatpush1.msra.mxu0 0.0
    %1867 = vmatprep.subr.mxu0 0.0
    %1868 = vmatpush1.msra.mxu0 0.0
    %1869 = vmatprep.subr.mxu0 0.0
    %1870 = vmatpush1.msra.mxu0 0.0
    %1871 = vmatprep.subr.mxu0 0.0
    %1872 = vmatpush1.msra.mxu0 0.0
    %1873 = vmatprep.subr.mxu0 0.0
    %1874 = vmatpush1.msra.mxu0 0.0
    %1875 = vmatprep.subr.mxu0 0.0
    %1876 = vmatpush1.msra.mxu0 0.0
    %1877 = vmatprep.subr.mxu0 0.0
    %1878 = vmatpush1.msra.mxu0 0.0
    %1879 = vmatprep.subr.mxu0 0.0
    %1880 = vmatpush1.msra.mxu0 0.0
    %1881 = vmatprep.subr.mxu0 0.0
    %1882 = vmatpush1.msra.mxu0 0.0
    %1883 = vmatprep.subr.mxu0 0.0
    %1884 = vmatpush1.msra.mxu0 0.0
    %1885 = vmatprep.subr.mxu0 0.0
    %1886 = vmatpush1.msra.mxu0 0.0
    %1887 = vmatprep.subr.mxu0 0.0
    %1888 = vmatpush1.msra.mxu0 0.0
    %1889 = vmatprep.subr.mxu0 0.0
    %1890 = vmatpush1.msra.mxu0 0.0
    %1891 = vmatprep.subr.mxu0 0.0
    %1892 = vmatpush1.msra.mxu0 0.0
    %1893 = vmatprep.subr.mxu0 0.0
    %1894 = vmatpush1.msra.mxu0 0.0
    %1895 = vmatprep.subr.mxu0 0.0
    %1896 = vmatpush1.msra.mxu0 0.0
    %1897 = vmatprep.subr.mxu0 0.0
    %1898 = vmatpush1.msra.mxu0 0.0
    %1899 = vmatprep.subr.mxu0 0.0
    %1900 = vmatpush1.msra.mxu0 0.0
    %1901 = vmatprep.subr.mxu0 0.0
    %1902 = vmatpush1.msra.mxu0 0.0
    %1903 = vmatprep.mubr.f32.mxu0 0.0
    %v1904 = vand.u32 %v891, 4294901760
    %1905 = vmatmul.mubr.f32.gmra.mrb[0].mxu0 %v1904
    %v1906 = vpop.f32.mrb[0].mxu0
    %v1907 = vadd.f32 %v1756, %v1906
    %v1908 = vpop.f32.mrb[0].mxu0
    %1909 = vmatprep.mubr.f32.mxu0 0.0
    %v1910 = vand.u32 %v894, 4294901760
    %1911 = vmatmul.mubr.f32.gmra.mrb[0].mxu0 %v1910
    %v1912 = vpop.f32.mrb[0].mxu0
    %v1913 = vadd.f32 %v1766, %v1912
    %v1914 = vpop.f32.mrb[0].mxu0
    %1915 = vmatprep.mubr.f32.mxu0 0.0
    %v1916 = vand.u32 %v897, 4294901760
    %1917 = vmatmul.mubr.f32.gmra.mrb[0].mxu0 %v1916
    %v1918 = vpop.f32.mrb[0].mxu0
    %v1919 = vadd.f32 %v1776, %v1918
    %v1920 = vpop.f32.mrb[0].mxu0
    %1921 = vmatprep.mubr.f32.mxu0 0.0
    %v1922 = vand.u32 %v900, 4294901760
    %1923 = vmatmul.mubr.f32.gmra.mrb[0].mxu0 %v1922
    %v1924 = vpop.f32.mrb[0].mxu0
    %v1925 = vadd.f32 %v1786, %v1924
    %v1926 = vpop.f32.mrb[0].mxu0
    %1927 = vmatprep.mubr.f32.mxu0 0.0
    %v1928 = vand.u32 %v903, 4294901760
    %1929 = vmatmul.mubr.f32.gmra.mrb[0].mxu0 %v1928
    %v1930 = vpop.f32.mrb[0].mxu0
    %v1931 = vadd.f32 %v1796, %v1930
    %v1932 = vpop.f32.mrb[0].mxu0
    %1933 = vmatprep.mubr.f32.mxu0 0.0
    %v1934 = vand.u32 %v906, 4294901760
    %1935 = vmatmul.mubr.f32.gmra.mrb[0].mxu0 %v1934
    %v1936 = vpop.f32.mrb[0].mxu0
    %v1937 = vadd.f32 %v1806, %v1936
    %v1938 = vpop.f32.mrb[0].mxu0
    %1939 = vmatprep.mubr.f32.mxu0 0.0
    %v1940 = vand.u32 %v909, 4294901760
    %1941 = vmatmul.mubr.f32.gmra.mrb[0].mxu0 %v1940
    %v1942 = vpop.f32.mrb[0].mxu0
    %v1943 = vadd.f32 %v1816, %v1942
    %v1944 = vpop.f32.mrb[0].mxu0
    %1945 = vmatprep.mubr.f32.mxu0 0.0
    %v1946 = vand.u32 %v912, 4294901760
    %1947 = vmatmul.mubr.f32.gmra.mrb[0].mxu0 %v1946
    %v1948 = vpop.f32.mrb[0].mxu0
    %v1949 = vadd.f32 %v1826, %v1948
    %v1950 = vpop.f32.mrb[0].mxu0
    %1951 = vdwg.mxu0
    %1952 = vmatprep.subr.mxu0 0.0
    %v1953 = vand.u32 %v100, 4294901760
    %v1954 = vsub.f32 %v100, %v1953
    %1955 = vmatpush1.msra.mxu0 %v1954
    %1956 = vmatprep.subr.mxu0 0.0
    %v1957 = vand.u32 %v101, 4294901760
    %v1958 = vsub.f32 %v101, %v1957
    %1959 = vmatpush1.msra.mxu0 %v1958
    %1960 = vmatprep.subr.mxu0 0.0
    %1961 = vmatpush1.msra.mxu0 0.0
    %1962 = vmatprep.subr.mxu0 0.0
    %1963 = vmatpush1.msra.mxu0 0.0
    %1964 = vmatprep.subr.mxu0 0.0
    %1965 = vmatpush1.msra.mxu0 0.0
    %1966 = vmatprep.subr.mxu0 0.0
    %1967 = vmatpush1.msra.mxu0 0.0
    %1968 = vmatprep.subr.mxu0 0.0
    %1969 = vmatpush1.msra.mxu0 0.0
    %1970 = vmatprep.subr.mxu0 0.0
    %1971 = vmatpush1.msra.mxu0 0.0
    %1972 = vmatprep.subr.mxu0 0.0
    %1973 = vmatpush1.msra.mxu0 0.0
    %1974 = vmatprep.subr.mxu0 0.0
    %1975 = vmatpush1.msra.mxu0 0.0
    %1976 = vmatprep.subr.mxu0 0.0
    %1977 = vmatpush1.msra.mxu0 0.0
    %1978 = vmatprep.subr.mxu0 0.0
    %1979 = vmatpush1.msra.mxu0 0.0
    %1980 = vmatprep.subr.mxu0 0.0
    %1981 = vmatpush1.msra.mxu0 0.0
    %1982 = vmatprep.subr.mxu0 0.0
    %1983 = vmatpush1.msra.mxu0 0.0
    %1984 = vmatprep.subr.mxu0 0.0
    %1985 = vmatpush1.msra.mxu0 0.0
    %1986 = vmatprep.subr.mxu0 0.0
    %1987 = vmatpush1.msra.mxu0 0.0
    %1988 = vmatprep.subr.mxu0 0.0
    %1989 = vmatpush1.msra.mxu0 0.0
    %1990 = vmatprep.subr.mxu0 0.0
    %1991 = vmatpush1.msra.mxu0 0.0
    %1992 = vmatprep.subr.mxu0 0.0
    %1993 = vmatpush1.msra.mxu0 0.0
    %1994 = vmatprep.subr.mxu0 0.0
    %1995 = vmatpush1.msra.mxu0 0.0
    %1996 = vmatprep.subr.mxu0 0.0
    %1997 = vmatpush1.msra.mxu0 0.0
    %1998 = vmatprep.subr.mxu0 0.0
    %1999 = vmatpush1.msra.mxu0 0.0
    %2000 = vmatprep.subr.mxu0 0.0
    %2001 = vmatpush1.msra.mxu0 0.0
    %2002 = vmatprep.subr.mxu0 0.0
    %2003 = vmatpush1.msra.mxu0 0.0
    %2004 = vmatprep.subr.mxu0 0.0
    %2005 = vmatpush1.msra.mxu0 0.0
    %2006 = vmatprep.subr.mxu0 0.0
    %2007 = vmatpush1.msra.mxu0 0.0
    %2008 = vmatprep.subr.mxu0 0.0
    %2009 = vmatpush1.msra.mxu0 0.0
    %2010 = vmatprep.subr.mxu0 0.0
    %2011 = vmatpush1.msra.mxu0 0.0
    %2012 = vmatprep.subr.mxu0 0.0
    %2013 = vmatpush1.msra.mxu0 0.0
    %2014 = vmatprep.subr.mxu0 0.0
    %2015 = vmatpush1.msra.mxu0 0.0
    %2016 = vmatprep.subr.mxu0 0.0
    %2017 = vmatpush1.msra.mxu0 0.0
    %2018 = vmatprep.subr.mxu0 0.0
    %2019 = vmatpush1.msra.mxu0 0.0
    %2020 = vmatprep.mubr.f32.mxu0 0.0
    %v2021 = vand.u32 %v891, 4294901760
    %v2022 = vsub.f32 %v891, %v2021
    %2023 = vmatmul.mubr.f32.gmra.mrb[0].mxu0 %v2022
    %v2024 = vpop.f32.mrb[0].mxu0
    %v2025 = vadd.f32 %v1907, %v2024
    %v2026 = vpop.f32.mrb[0].mxu0
    %2027 = vmatprep.mubr.f32.mxu0 0.0
    %v2028 = vand.u32 %v894, 4294901760
    %v2029 = vsub.f32 %v894, %v2028
    %2030 = vmatmul.mubr.f32.gmra.mrb[0].mxu0 %v2029
    %v2031 = vpop.f32.mrb[0].mxu0
    %v2032 = vadd.f32 %v1913, %v2031
    %v2033 = vpop.f32.mrb[0].mxu0
    %2034 = vmatprep.mubr.f32.mxu0 0.0
    %v2035 = vand.u32 %v897, 4294901760
    %v2036 = vsub.f32 %v897, %v2035
    %2037 = vmatmul.mubr.f32.gmra.mrb[0].mxu0 %v2036
    %v2038 = vpop.f32.mrb[0].mxu0
    %v2039 = vadd.f32 %v1919, %v2038
    %v2040 = vpop.f32.mrb[0].mxu0
    %2041 = vmatprep.mubr.f32.mxu0 0.0
    %v2042 = vand.u32 %v900, 4294901760
    %v2043 = vsub.f32 %v900, %v2042
    %2044 = vmatmul.mubr.f32.gmra.mrb[0].mxu0 %v2043
    %v2045 = vpop.f32.mrb[0].mxu0
    %v2046 = vadd.f32 %v1925, %v2045
    %v2047 = vpop.f32.mrb[0].mxu0
    %2048 = vmatprep.mubr.f32.mxu0 0.0
    %v2049 = vand.u32 %v903, 4294901760
    %v2050 = vsub.f32 %v903, %v2049
    %2051 = vmatmul.mubr.f32.gmra.mrb[0].mxu0 %v2050
    %v2052 = vpop.f32.mrb[0].mxu0
    %v2053 = vadd.f32 %v1931, %v2052
    %v2054 = vpop.f32.mrb[0].mxu0
    %2055 = vmatprep.mubr.f32.mxu0 0.0
    %v2056 = vand.u32 %v906, 4294901760
    %v2057 = vsub.f32 %v906, %v2056
    %2058 = vmatmul.mubr.f32.gmra.mrb[0].mxu0 %v2057
    %v2059 = vpop.f32.mrb[0].mxu0
    %v2060 = vadd.f32 %v1937, %v2059
    %v2061 = vpop.f32.mrb[0].mxu0
    %2062 = vmatprep.mubr.f32.mxu0 0.0
    %v2063 = vand.u32 %v909, 4294901760
    %v2064 = vsub.f32 %v909, %v2063
    %2065 = vmatmul.mubr.f32.gmra.mrb[0].mxu0 %v2064
    %v2066 = vpop.f32.mrb[0].mxu0
    %v2067 = vadd.f32 %v1943, %v2066
    %v2068 = vpop.f32.mrb[0].mxu0
    %2069 = vmatprep.mubr.f32.mxu0 0.0
    %v2070 = vand.u32 %v912, 4294901760
    %v2071 = vsub.f32 %v912, %v2070
    %2072 = vmatmul.mubr.f32.gmra.mrb[0].mxu0 %v2071
    %v2073 = vpop.f32.mrb[0].mxu0
    %v2074 = vadd.f32 %v1949, %v2073
    %v2075 = vpop.f32.mrb[0].mxu0
    %2076 = vdwg.mxu0
    %2077 = vmatprep.subr.mxu0 0.0
    %v2078 = vand.u32 %v100, 4294901760
    %2079 = vmatpush1.msra.mxu0 %v2078
    %2080 = vmatprep.subr.mxu0 0.0
    %v2081 = vand.u32 %v101, 4294901760
    %2082 = vmatpush1.msra.mxu0 %v2081
    %2083 = vmatprep.subr.mxu0 0.0
    %2084 = vmatpush1.msra.mxu0 0.0
    %2085 = vmatprep.subr.mxu0 0.0
    %2086 = vmatpush1.msra.mxu0 0.0
    %2087 = vmatprep.subr.mxu0 0.0
    %2088 = vmatpush1.msra.mxu0 0.0
    %2089 = vmatprep.subr.mxu0 0.0
    %2090 = vmatpush1.msra.mxu0 0.0
    %2091 = vmatprep.subr.mxu0 0.0
    %2092 = vmatpush1.msra.mxu0 0.0
    %2093 = vmatprep.subr.mxu0 0.0
    %2094 = vmatpush1.msra.mxu0 0.0
    %2095 = vmatprep.subr.mxu0 0.0
    %2096 = vmatpush1.msra.mxu0 0.0
    %2097 = vmatprep.subr.mxu0 0.0
    %2098 = vmatpush1.msra.mxu0 0.0
    %2099 = vmatprep.subr.mxu0 0.0
    %2100 = vmatpush1.msra.mxu0 0.0
    %2101 = vmatprep.subr.mxu0 0.0
    %2102 = vmatpush1.msra.mxu0 0.0
    %2103 = vmatprep.subr.mxu0 0.0
    %2104 = vmatpush1.msra.mxu0 0.0
    %2105 = vmatprep.subr.mxu0 0.0
    %2106 = vmatpush1.msra.mxu0 0.0
    %2107 = vmatprep.subr.mxu0 0.0
    %2108 = vmatpush1.msra.mxu0 0.0
    %2109 = vmatprep.subr.mxu0 0.0
    %2110 = vmatpush1.msra.mxu0 0.0
    %2111 = vmatprep.subr.mxu0 0.0
    %2112 = vmatpush1.msra.mxu0 0.0
    %2113 = vmatprep.subr.mxu0 0.0
    %2114 = vmatpush1.msra.mxu0 0.0
    %2115 = vmatprep.subr.mxu0 0.0
    %2116 = vmatpush1.msra.mxu0 0.0
    %2117 = vmatprep.subr.mxu0 0.0
    %2118 = vmatpush1.msra.mxu0 0.0
    %2119 = vmatprep.subr.mxu0 0.0
    %2120 = vmatpush1.msra.mxu0 0.0
    %2121 = vmatprep.subr.mxu0 0.0
    %2122 = vmatpush1.msra.mxu0 0.0
    %2123 = vmatprep.subr.mxu0 0.0
    %2124 = vmatpush1.msra.mxu0 0.0
    %2125 = vmatprep.subr.mxu0 0.0
    %2126 = vmatpush1.msra.mxu0 0.0
    %2127 = vmatprep.subr.mxu0 0.0
    %2128 = vmatpush1.msra.mxu0 0.0
    %2129 = vmatprep.subr.mxu0 0.0
    %2130 = vmatpush1.msra.mxu0 0.0
    %2131 = vmatprep.subr.mxu0 0.0
    %2132 = vmatpush1.msra.mxu0 0.0
    %2133 = vmatprep.subr.mxu0 0.0
    %2134 = vmatpush1.msra.mxu0 0.0
    %2135 = vmatprep.subr.mxu0 0.0
    %2136 = vmatpush1.msra.mxu0 0.0
    %2137 = vmatprep.subr.mxu0 0.0
    %2138 = vmatpush1.msra.mxu0 0.0
    %2139 = vmatprep.subr.mxu0 0.0
    %2140 = vmatpush1.msra.mxu0 0.0
    %2141 = vmatprep.subr.mxu0 0.0
    %2142 = vmatpush1.msra.mxu0 0.0
    %2143 = vmatprep.mubr.f32.mxu0 0.0
    %v2144 = vand.u32 %v891, 4294901760
    %v2145 = vsub.f32 %v891, %v2144
    %v2146 = vand.u32 %v2145, 4294901760
    %2147 = vmatmul.mubr.f32.gmra.mrb[0].mxu0 %v2146
    %v2148 = vpop.f32.mrb[0].mxu0
    %v2149 = vadd.f32 %v2025, %v2148
    %v2150 = vpop.f32.mrb[0].mxu0
    %2151 = vmatprep.mubr.f32.mxu0 0.0
    %v2152 = vand.u32 %v894, 4294901760
    %v2153 = vsub.f32 %v894, %v2152
    %v2154 = vand.u32 %v2153, 4294901760
    %2155 = vmatmul.mubr.f32.gmra.mrb[0].mxu0 %v2154
    %v2156 = vpop.f32.mrb[0].mxu0
    %v2157 = vadd.f32 %v2032, %v2156
    %v2158 = vpop.f32.mrb[0].mxu0
    %2159 = vmatprep.mubr.f32.mxu0 0.0
    %v2160 = vand.u32 %v897, 4294901760
    %v2161 = vsub.f32 %v897, %v2160
    %v2162 = vand.u32 %v2161, 4294901760
    %2163 = vmatmul.mubr.f32.gmra.mrb[0].mxu0 %v2162
    %v2164 = vpop.f32.mrb[0].mxu0
    %v2165 = vadd.f32 %v2039, %v2164
    %v2166 = vpop.f32.mrb[0].mxu0
    %2167 = vmatprep.mubr.f32.mxu0 0.0
    %v2168 = vand.u32 %v900, 4294901760
    %v2169 = vsub.f32 %v900, %v2168
    %v2170 = vand.u32 %v2169, 4294901760
    %2171 = vmatmul.mubr.f32.gmra.mrb[0].mxu0 %v2170
    %v2172 = vpop.f32.mrb[0].mxu0
    %v2173 = vadd.f32 %v2046, %v2172
    %v2174 = vpop.f32.mrb[0].mxu0
    %2175 = vmatprep.mubr.f32.mxu0 0.0
    %v2176 = vand.u32 %v903, 4294901760
    %v2177 = vsub.f32 %v903, %v2176
    %v2178 = vand.u32 %v2177, 4294901760
    %2179 = vmatmul.mubr.f32.gmra.mrb[0].mxu0 %v2178
    %v2180 = vpop.f32.mrb[0].mxu0
    %v2181 = vadd.f32 %v2053, %v2180
    %v2182 = vpop.f32.mrb[0].mxu0
    %2183 = vmatprep.mubr.f32.mxu0 0.0
    %v2184 = vand.u32 %v906, 4294901760
    %v2185 = vsub.f32 %v906, %v2184
    %v2186 = vand.u32 %v2185, 4294901760
    %2187 = vmatmul.mubr.f32.gmra.mrb[0].mxu0 %v2186
    %v2188 = vpop.f32.mrb[0].mxu0
    %v2189 = vadd.f32 %v2060, %v2188
    %v2190 = vpop.f32.mrb[0].mxu0
    %2191 = vmatprep.mubr.f32.mxu0 0.0
    %v2192 = vand.u32 %v909, 4294901760
    %v2193 = vsub.f32 %v909, %v2192
    %v2194 = vand.u32 %v2193, 4294901760
    %2195 = vmatmul.mubr.f32.gmra.mrb[0].mxu0 %v2194
    %v2196 = vpop.f32.mrb[0].mxu0
    %v2197 = vadd.f32 %v2067, %v2196
    %v2198 = vpop.f32.mrb[0].mxu0
    %2199 = vmatprep.mubr.f32.mxu0 0.0
    %v2200 = vand.u32 %v912, 4294901760
    %v2201 = vsub.f32 %v912, %v2200
    %v2202 = vand.u32 %v2201, 4294901760
    %2203 = vmatmul.mubr.f32.gmra.mrb[0].mxu0 %v2202
    %v2204 = vpop.f32.mrb[0].mxu0
    %v2205 = vadd.f32 %v2074, %v2204
    %v2206 = vpop.f32.mrb[0].mxu0
    %2207 = vdwg.mxu0
    %2208 = vmatprep.subr.mxu0 0.0
    %v2209 = vand.u32 %v100, 4294901760
    %v2210 = vsub.f32 %v100, %v2209
    %v2211 = vand.u32 %v2210, 4294901760
    %2212 = vmatpush1.msra.mxu0 %v2211
    %2213 = vmatprep.subr.mxu0 0.0
    %v2214 = vand.u32 %v101, 4294901760
    %v2215 = vsub.f32 %v101, %v2214
    %v2216 = vand.u32 %v2215, 4294901760
    %2217 = vmatpush1.msra.mxu0 %v2216
    %2218 = vmatprep.subr.mxu0 0.0
    %2219 = vmatpush1.msra.mxu0 0.0
    %2220 = vmatprep.subr.mxu0 0.0
    %2221 = vmatpush1.msra.mxu0 0.0
    %2222 = vmatprep.subr.mxu0 0.0
    %2223 = vmatpush1.msra.mxu0 0.0
    %2224 = vmatprep.subr.mxu0 0.0
    %2225 = vmatpush1.msra.mxu0 0.0
    %2226 = vmatprep.subr.mxu0 0.0
    %2227 = vmatpush1.msra.mxu0 0.0
    %2228 = vmatprep.subr.mxu0 0.0
    %2229 = vmatpush1.msra.mxu0 0.0
    %2230 = vmatprep.subr.mxu0 0.0
    %2231 = vmatpush1.msra.mxu0 0.0
    %2232 = vmatprep.subr.mxu0 0.0
    %2233 = vmatpush1.msra.mxu0 0.0
    %2234 = vmatprep.subr.mxu0 0.0
    %2235 = vmatpush1.msra.mxu0 0.0
    %2236 = vmatprep.subr.mxu0 0.0
    %2237 = vmatpush1.msra.mxu0 0.0
    %2238 = vmatprep.subr.mxu0 0.0
    %2239 = vmatpush1.msra.mxu0 0.0
    %2240 = vmatprep.subr.mxu0 0.0
    %2241 = vmatpush1.msra.mxu0 0.0
    %2242 = vmatprep.subr.mxu0 0.0
    %2243 = vmatpush1.msra.mxu0 0.0
    %2244 = vmatprep.subr.mxu0 0.0
    %2245 = vmatpush1.msra.mxu0 0.0
    %2246 = vmatprep.subr.mxu0 0.0
    %2247 = vmatpush1.msra.mxu0 0.0
    %2248 = vmatprep.subr.mxu0 0.0
    %2249 = vmatpush1.msra.mxu0 0.0
    %2250 = vmatprep.subr.mxu0 0.0
    %2251 = vmatpush1.msra.mxu0 0.0
    %2252 = vmatprep.subr.mxu0 0.0
    %2253 = vmatpush1.msra.mxu0 0.0
    %2254 = vmatprep.subr.mxu0 0.0
    %2255 = vmatpush1.msra.mxu0 0.0
    %2256 = vmatprep.subr.mxu0 0.0
    %2257 = vmatpush1.msra.mxu0 0.0
    %2258 = vmatprep.subr.mxu0 0.0
    %2259 = vmatpush1.msra.mxu0 0.0
    %2260 = vmatprep.subr.mxu0 0.0
    %2261 = vmatpush1.msra.mxu0 0.0
    %2262 = vmatprep.subr.mxu0 0.0
    %2263 = vmatpush1.msra.mxu0 0.0
    %2264 = vmatprep.subr.mxu0 0.0
    %2265 = vmatpush1.msra.mxu0 0.0
    %2266 = vmatprep.subr.mxu0 0.0
    %2267 = vmatpush1.msra.mxu0 0.0
    %2268 = vmatprep.subr.mxu0 0.0
    %2269 = vmatpush1.msra.mxu0 0.0
    %2270 = vmatprep.subr.mxu0 0.0
    %2271 = vmatpush1.msra.mxu0 0.0
    %2272 = vmatprep.subr.mxu0 0.0
    %2273 = vmatpush1.msra.mxu0 0.0
    %2274 = vmatprep.subr.mxu0 0.0
    %2275 = vmatpush1.msra.mxu0 0.0
    %2276 = vmatprep.subr.mxu0 0.0
    %2277 = vmatpush1.msra.mxu0 0.0
    %2278 = vmatprep.mubr.f32.mxu0 0.0
    %v2279 = vand.u32 %v891, 4294901760
    %2280 = vmatmul.mubr.f32.gmra.mrb[0].mxu0 %v2279
    %v2281 = vpop.f32.mrb[0].mxu0
    %v2282 = vadd.f32 %v2149, %v2281
    %v2283 = vpop.f32.mrb[0].mxu0
    %2284 = vmatprep.mubr.f32.mxu0 0.0
    %v2285 = vand.u32 %v894, 4294901760
    %2286 = vmatmul.mubr.f32.gmra.mrb[0].mxu0 %v2285
    %v2287 = vpop.f32.mrb[0].mxu0
    %v2288 = vadd.f32 %v2157, %v2287
    %v2289 = vpop.f32.mrb[0].mxu0
    %2290 = vmatprep.mubr.f32.mxu0 0.0
    %v2291 = vand.u32 %v897, 4294901760
    %2292 = vmatmul.mubr.f32.gmra.mrb[0].mxu0 %v2291
    %v2293 = vpop.f32.mrb[0].mxu0
    %v2294 = vadd.f32 %v2165, %v2293
    %v2295 = vpop.f32.mrb[0].mxu0
    %2296 = vmatprep.mubr.f32.mxu0 0.0
    %v2297 = vand.u32 %v900, 4294901760
    %2298 = vmatmul.mubr.f32.gmra.mrb[0].mxu0 %v2297
    %v2299 = vpop.f32.mrb[0].mxu0
    %v2300 = vadd.f32 %v2173, %v2299
    %v2301 = vpop.f32.mrb[0].mxu0
    %2302 = vmatprep.mubr.f32.mxu0 0.0
    %v2303 = vand.u32 %v903, 4294901760
    %2304 = vmatmul.mubr.f32.gmra.mrb[0].mxu0 %v2303
    %v2305 = vpop.f32.mrb[0].mxu0
    %v2306 = vadd.f32 %v2181, %v2305
    %v2307 = vpop.f32.mrb[0].mxu0
    %2308 = vmatprep.mubr.f32.mxu0 0.0
    %v2309 = vand.u32 %v906, 4294901760
    %2310 = vmatmul.mubr.f32.gmra.mrb[0].mxu0 %v2309
    %v2311 = vpop.f32.mrb[0].mxu0
    %v2312 = vadd.f32 %v2189, %v2311
    %v2313 = vpop.f32.mrb[0].mxu0
    %2314 = vmatprep.mubr.f32.mxu0 0.0
    %v2315 = vand.u32 %v909, 4294901760
    %2316 = vmatmul.mubr.f32.gmra.mrb[0].mxu0 %v2315
    %v2317 = vpop.f32.mrb[0].mxu0
    %v2318 = vadd.f32 %v2197, %v2317
    %v2319 = vpop.f32.mrb[0].mxu0
    %2320 = vmatprep.mubr.f32.mxu0 0.0
    %v2321 = vand.u32 %v912, 4294901760
    %2322 = vmatmul.mubr.f32.gmra.mrb[0].mxu0 %v2321
    %v2323 = vpop.f32.mrb[0].mxu0
    %v2324 = vadd.f32 %v2205, %v2323
    %v2325 = vpop.f32.mrb[0].mxu0
    %2326 = vdwg.mxu0
    %2327 = vmatprep.subr.mxu0 0.0
    %v2328 = vand.u32 %v100, 4294901760
    %2329 = vmatpush1.msra.mxu0 %v2328
    %2330 = vmatprep.subr.mxu0 0.0
    %v2331 = vand.u32 %v101, 4294901760
    %2332 = vmatpush1.msra.mxu0 %v2331
    %2333 = vmatprep.subr.mxu0 0.0
    %2334 = vmatpush1.msra.mxu0 0.0
    %2335 = vmatprep.subr.mxu0 0.0
    %2336 = vmatpush1.msra.mxu0 0.0
    %2337 = vmatprep.subr.mxu0 0.0
    %2338 = vmatpush1.msra.mxu0 0.0
    %2339 = vmatprep.subr.mxu0 0.0
    %2340 = vmatpush1.msra.mxu0 0.0
    %2341 = vmatprep.subr.mxu0 0.0
    %2342 = vmatpush1.msra.mxu0 0.0
    %2343 = vmatprep.subr.mxu0 0.0
    %2344 = vmatpush1.msra.mxu0 0.0
    %2345 = vmatprep.subr.mxu0 0.0
    %2346 = vmatpush1.msra.mxu0 0.0
    %2347 = vmatprep.subr.mxu0 0.0
    %2348 = vmatpush1.msra.mxu0 0.0
    %2349 = vmatprep.subr.mxu0 0.0
    %2350 = vmatpush1.msra.mxu0 0.0
    %2351 = vmatprep.subr.mxu0 0.0
    %2352 = vmatpush1.msra.mxu0 0.0
    %2353 = vmatprep.subr.mxu0 0.0
    %2354 = vmatpush1.msra.mxu0 0.0
    %2355 = vmatprep.subr.mxu0 0.0
    %2356 = vmatpush1.msra.mxu0 0.0
    %2357 = vmatprep.subr.mxu0 0.0
    %2358 = vmatpush1.msra.mxu0 0.0
    %2359 = vmatprep.subr.mxu0 0.0
    %2360 = vmatpush1.msra.mxu0 0.0
    %2361 = vmatprep.subr.mxu0 0.0
    %2362 = vmatpush1.msra.mxu0 0.0
    %2363 = vmatprep.subr.mxu0 0.0
    %2364 = vmatpush1.msra.mxu0 0.0
    %2365 = vmatprep.subr.mxu0 0.0
    %2366 = vmatpush1.msra.mxu0 0.0
    %2367 = vmatprep.subr.mxu0 0.0
    %2368 = vmatpush1.msra.mxu0 0.0
    %2369 = vmatprep.subr.mxu0 0.0
    %2370 = vmatpush1.msra.mxu0 0.0
    %2371 = vmatprep.subr.mxu0 0.0
    %2372 = vmatpush1.msra.mxu0 0.0
    %2373 = vmatprep.subr.mxu0 0.0
    %2374 = vmatpush1.msra.mxu0 0.0
    %2375 = vmatprep.subr.mxu0 0.0
    %2376 = vmatpush1.msra.mxu0 0.0
    %2377 = vmatprep.subr.mxu0 0.0
    %2378 = vmatpush1.msra.mxu0 0.0
    %2379 = vmatprep.subr.mxu0 0.0
    %2380 = vmatpush1.msra.mxu0 0.0
    %2381 = vmatprep.subr.mxu0 0.0
    %2382 = vmatpush1.msra.mxu0 0.0
    %2383 = vmatprep.subr.mxu0 0.0
    %2384 = vmatpush1.msra.mxu0 0.0
    %2385 = vmatprep.subr.mxu0 0.0
    %2386 = vmatpush1.msra.mxu0 0.0
    %2387 = vmatprep.subr.mxu0 0.0
    %2388 = vmatpush1.msra.mxu0 0.0
    %2389 = vmatprep.subr.mxu0 0.0
    %2390 = vmatpush1.msra.mxu0 0.0
    %2391 = vmatprep.subr.mxu0 0.0
    %2392 = vmatpush1.msra.mxu0 0.0
    %2393 = vmatprep.mubr.f32.mxu0 0.0
    %v2394 = vand.u32 %v891, 4294901760
    %2395 = vmatmul.mubr.f32.gmra.mrb[0].mxu0 %v2394
    %v2396 = vpop.f32.mrb[0].mxu0
    %v2397 = vadd.f32 %v2282, %v2396
    %v2398 = vpop.f32.mrb[0].mxu0
    %2399 = vmatprep.mubr.f32.mxu0 0.0
    %v2400 = vand.u32 %v894, 4294901760
    %2401 = vmatmul.mubr.f32.gmra.mrb[0].mxu0 %v2400
    %v2402 = vpop.f32.mrb[0].mxu0
    %v2403 = vadd.f32 %v2288, %v2402
    %v2404 = vpop.f32.mrb[0].mxu0
    %2405 = vmatprep.mubr.f32.mxu0 0.0
    %v2406 = vand.u32 %v897, 4294901760
    %2407 = vmatmul.mubr.f32.gmra.mrb[0].mxu0 %v2406
    %v2408 = vpop.f32.mrb[0].mxu0
    %v2409 = vadd.f32 %v2294, %v2408
    %v2410 = vpop.f32.mrb[0].mxu0
    %2411 = vmatprep.mubr.f32.mxu0 0.0
    %v2412 = vand.u32 %v900, 4294901760
    %2413 = vmatmul.mubr.f32.gmra.mrb[0].mxu0 %v2412
    %v2414 = vpop.f32.mrb[0].mxu0
    %v2415 = vadd.f32 %v2300, %v2414
    %v2416 = vpop.f32.mrb[0].mxu0
    %2417 = vmatprep.mubr.f32.mxu0 0.0
    %v2418 = vand.u32 %v903, 4294901760
    %2419 = vmatmul.mubr.f32.gmra.mrb[0].mxu0 %v2418
    %v2420 = vpop.f32.mrb[0].mxu0
    %v2421 = vadd.f32 %v2306, %v2420
    %v2422 = vpop.f32.mrb[0].mxu0
    %2423 = vmatprep.mubr.f32.mxu0 0.0
    %v2424 = vand.u32 %v906, 4294901760
    %2425 = vmatmul.mubr.f32.gmra.mrb[0].mxu0 %v2424
    %v2426 = vpop.f32.mrb[0].mxu0
    %v2427 = vadd.f32 %v2312, %v2426
    %v2428 = vpop.f32.mrb[0].mxu0
    %2429 = vmatprep.mubr.f32.mxu0 0.0
    %v2430 = vand.u32 %v909, 4294901760
    %2431 = vmatmul.mubr.f32.gmra.mrb[0].mxu0 %v2430
    %v2432 = vpop.f32.mrb[0].mxu0
    %v2433 = vadd.f32 %v2318, %v2432
    %v2434 = vpop.f32.mrb[0].mxu0
    %2435 = vmatprep.mubr.f32.mxu0 0.0
    %v2436 = vand.u32 %v912, 4294901760
    %2437 = vmatmul.mubr.f32.gmra.mrb[0].mxu0 %v2436
    %v2438 = vpop.f32.mrb[0].mxu0
    %v2439 = vadd.f32 %v2324, %v2438
    %v2440 = vpop.f32.mrb[0].mxu0
    %2441 = vdwg.mxu0
    %2442 = vmatprep.subr.mxu0 0.0
    %v2443 = vand.u32 %v103, 4294901760
    %2444 = vmatpush1.msra.mxu0 %v2443
    %2445 = vmatprep.subr.mxu0 0.0
    %v2446 = vand.u32 %v104, 4294901760
    %2447 = vmatpush1.msra.mxu0 %v2446
    %2448 = vmatprep.subr.mxu0 0.0
    %2449 = vmatpush1.msra.mxu0 0.0
    %2450 = vmatprep.subr.mxu0 0.0
    %2451 = vmatpush1.msra.mxu0 0.0
    %2452 = vmatprep.subr.mxu0 0.0
    %2453 = vmatpush1.msra.mxu0 0.0
    %2454 = vmatprep.subr.mxu0 0.0
    %2455 = vmatpush1.msra.mxu0 0.0
    %2456 = vmatprep.subr.mxu0 0.0
    %2457 = vmatpush1.msra.mxu0 0.0
    %2458 = vmatprep.subr.mxu0 0.0
    %2459 = vmatpush1.msra.mxu0 0.0
    %2460 = vmatprep.subr.mxu0 0.0
    %2461 = vmatpush1.msra.mxu0 0.0
    %2462 = vmatprep.subr.mxu0 0.0
    %2463 = vmatpush1.msra.mxu0 0.0
    %2464 = vmatprep.subr.mxu0 0.0
    %2465 = vmatpush1.msra.mxu0 0.0
    %2466 = vmatprep.subr.mxu0 0.0
    %2467 = vmatpush1.msra.mxu0 0.0
    %2468 = vmatprep.subr.mxu0 0.0
    %2469 = vmatpush1.msra.mxu0 0.0
    %2470 = vmatprep.subr.mxu0 0.0
    %2471 = vmatpush1.msra.mxu0 0.0
    %2472 = vmatprep.subr.mxu0 0.0
    %2473 = vmatpush1.msra.mxu0 0.0
    %2474 = vmatprep.subr.mxu0 0.0
    %2475 = vmatpush1.msra.mxu0 0.0
    %2476 = vmatprep.subr.mxu0 0.0
    %2477 = vmatpush1.msra.mxu0 0.0
    %2478 = vmatprep.subr.mxu0 0.0
    %2479 = vmatpush1.msra.mxu0 0.0
    %2480 = vmatprep.subr.mxu0 0.0
    %2481 = vmatpush1.msra.mxu0 0.0
    %2482 = vmatprep.subr.mxu0 0.0
    %2483 = vmatpush1.msra.mxu0 0.0
    %2484 = vmatprep.subr.mxu0 0.0
    %2485 = vmatpush1.msra.mxu0 0.0
    %2486 = vmatprep.subr.mxu0 0.0
    %2487 = vmatpush1.msra.mxu0 0.0
    %2488 = vmatprep.subr.mxu0 0.0
    %2489 = vmatpush1.msra.mxu0 0.0
    %2490 = vmatprep.subr.mxu0 0.0
    %2491 = vmatpush1.msra.mxu0 0.0
    %2492 = vmatprep.subr.mxu0 0.0
    %2493 = vmatpush1.msra.mxu0 0.0
    %2494 = vmatprep.subr.mxu0 0.0
    %2495 = vmatpush1.msra.mxu0 0.0
    %2496 = vmatprep.subr.mxu0 0.0
    %2497 = vmatpush1.msra.mxu0 0.0
    %2498 = vmatprep.subr.mxu0 0.0
    %2499 = vmatpush1.msra.mxu0 0.0
    %2500 = vmatprep.subr.mxu0 0.0
    %2501 = vmatpush1.msra.mxu0 0.0
    %2502 = vmatprep.subr.mxu0 0.0
    %2503 = vmatpush1.msra.mxu0 0.0
    %2504 = vmatprep.subr.mxu0 0.0
    %2505 = vmatpush1.msra.mxu0 0.0
    %2506 = vmatprep.subr.mxu0 0.0
    %2507 = vmatpush1.msra.mxu0 0.0
    %2508 = vmatprep.mubr.f32.mxu0 0.0
    %v2509 = vand.u32 %v107, 4294901760
    %v2510 = vsub.f32 %v107, %v2509
    %v2511 = vand.u32 %v2510, 4294901760
    %v2512 = vsub.f32 %v2510, %v2511
    %v2513 = vand.u32 %v2512, 4294901760
    %2514 = vmatmul.mubr.f32.gmra.mrb[0].mxu0 %v2513
    %v2515 = vpop.f32.mrb[0].mxu0
    %v2516 = vadd.f32 %v2397, %v2515
    %v2517 = vpop.f32.mrb[0].mxu0
    %2518 = vmatprep.mubr.f32.mxu0 0.0
    %v2519 = vand.u32 %v110, 4294901760
    %v2520 = vsub.f32 %v110, %v2519
    %v2521 = vand.u32 %v2520, 4294901760
    %v2522 = vsub.f32 %v2520, %v2521
    %v2523 = vand.u32 %v2522, 4294901760
    %2524 = vmatmul.mubr.f32.gmra.mrb[0].mxu0 %v2523
    %v2525 = vpop.f32.mrb[0].mxu0
    %v2526 = vadd.f32 %v2403, %v2525
    %v2527 = vpop.f32.mrb[0].mxu0
    %2528 = vmatprep.mubr.f32.mxu0 0.0
    %v2529 = vand.u32 %v113, 4294901760
    %v2530 = vsub.f32 %v113, %v2529
    %v2531 = vand.u32 %v2530, 4294901760
    %v2532 = vsub.f32 %v2530, %v2531
    %v2533 = vand.u32 %v2532, 4294901760
    %2534 = vmatmul.mubr.f32.gmra.mrb[0].mxu0 %v2533
    %v2535 = vpop.f32.mrb[0].mxu0
    %v2536 = vadd.f32 %v2409, %v2535
    %v2537 = vpop.f32.mrb[0].mxu0
    %2538 = vmatprep.mubr.f32.mxu0 0.0
    %v2539 = vand.u32 %v116, 4294901760
    %v2540 = vsub.f32 %v116, %v2539
    %v2541 = vand.u32 %v2540, 4294901760
    %v2542 = vsub.f32 %v2540, %v2541
    %v2543 = vand.u32 %v2542, 4294901760
    %2544 = vmatmul.mubr.f32.gmra.mrb[0].mxu0 %v2543
    %v2545 = vpop.f32.mrb[0].mxu0
    %v2546 = vadd.f32 %v2415, %v2545
    %v2547 = vpop.f32.mrb[0].mxu0
    %2548 = vmatprep.mubr.f32.mxu0 0.0
    %v2549 = vand.u32 %v119, 4294901760
    %v2550 = vsub.f32 %v119, %v2549
    %v2551 = vand.u32 %v2550, 4294901760
    %v2552 = vsub.f32 %v2550, %v2551
    %v2553 = vand.u32 %v2552, 4294901760
    %2554 = vmatmul.mubr.f32.gmra.mrb[0].mxu0 %v2553
    %v2555 = vpop.f32.mrb[0].mxu0
    %v2556 = vadd.f32 %v2421, %v2555
    %v2557 = vpop.f32.mrb[0].mxu0
    %2558 = vmatprep.mubr.f32.mxu0 0.0
    %v2559 = vand.u32 %v122, 4294901760
    %v2560 = vsub.f32 %v122, %v2559
    %v2561 = vand.u32 %v2560, 4294901760
    %v2562 = vsub.f32 %v2560, %v2561
    %v2563 = vand.u32 %v2562, 4294901760
    %2564 = vmatmul.mubr.f32.gmra.mrb[0].mxu0 %v2563
    %v2565 = vpop.f32.mrb[0].mxu0
    %v2566 = vadd.f32 %v2427, %v2565
    %v2567 = vpop.f32.mrb[0].mxu0
    %2568 = vmatprep.mubr.f32.mxu0 0.0
    %v2569 = vand.u32 %v125, 4294901760
    %v2570 = vsub.f32 %v125, %v2569
    %v2571 = vand.u32 %v2570, 4294901760
    %v2572 = vsub.f32 %v2570, %v2571
    %v2573 = vand.u32 %v2572, 4294901760
    %2574 = vmatmul.mubr.f32.gmra.mrb[0].mxu0 %v2573
    %v2575 = vpop.f32.mrb[0].mxu0
    %v2576 = vadd.f32 %v2433, %v2575
    %v2577 = vpop.f32.mrb[0].mxu0
    %2578 = vmatprep.mubr.f32.mxu0 0.0
    %v2579 = vand.u32 %v128, 4294901760
    %v2580 = vsub.f32 %v128, %v2579
    %v2581 = vand.u32 %v2580, 4294901760
    %v2582 = vsub.f32 %v2580, %v2581
    %v2583 = vand.u32 %v2582, 4294901760
    %2584 = vmatmul.mubr.f32.gmra.mrb[0].mxu0 %v2583
    %v2585 = vpop.f32.mrb[0].mxu0
    %v2586 = vadd.f32 %v2439, %v2585
    %v2587 = vpop.f32.mrb[0].mxu0
    %2588 = vdwg.mxu0
    %2589 = vmatprep.subr.mxu0 0.0
    %v2590 = vand.u32 %v103, 4294901760
    %v2591 = vsub.f32 %v103, %v2590
    %v2592 = vand.u32 %v2591, 4294901760
    %v2593 = vsub.f32 %v2591, %v2592
    %v2594 = vand.u32 %v2593, 4294901760
    %2595 = vmatpush1.msra.mxu0 %v2594
    %2596 = vmatprep.subr.mxu0 0.0
    %v2597 = vand.u32 %v104, 4294901760
    %v2598 = vsub.f32 %v104, %v2597
    %v2599 = vand.u32 %v2598, 4294901760
    %v2600 = vsub.f32 %v2598, %v2599
    %v2601 = vand.u32 %v2600, 4294901760
    %2602 = vmatpush1.msra.mxu0 %v2601
    %2603 = vmatprep.subr.mxu0 0.0
    %2604 = vmatpush1.msra.mxu0 0.0
    %2605 = vmatprep.subr.mxu0 0.0
    %2606 = vmatpush1.msra.mxu0 0.0
    %2607 = vmatprep.subr.mxu0 0.0
    %2608 = vmatpush1.msra.mxu0 0.0
    %2609 = vmatprep.subr.mxu0 0.0
    %2610 = vmatpush1.msra.mxu0 0.0
    %2611 = vmatprep.subr.mxu0 0.0
    %2612 = vmatpush1.msra.mxu0 0.0
    %2613 = vmatprep.subr.mxu0 0.0
    %2614 = vmatpush1.msra.mxu0 0.0
    %2615 = vmatprep.subr.mxu0 0.0
    %2616 = vmatpush1.msra.mxu0 0.0
    %2617 = vmatprep.subr.mxu0 0.0
    %2618 = vmatpush1.msra.mxu0 0.0
    %2619 = vmatprep.subr.mxu0 0.0
    %2620 = vmatpush1.msra.mxu0 0.0
    %2621 = vmatprep.subr.mxu0 0.0
    %2622 = vmatpush1.msra.mxu0 0.0
    %2623 = vmatprep.subr.mxu0 0.0
    %2624 = vmatpush1.msra.mxu0 0.0
    %2625 = vmatprep.subr.mxu0 0.0
    %2626 = vmatpush1.msra.mxu0 0.0
    %2627 = vmatprep.subr.mxu0 0.0
    %2628 = vmatpush1.msra.mxu0 0.0
    %2629 = vmatprep.subr.mxu0 0.0
    %2630 = vmatpush1.msra.mxu0 0.0
    %2631 = vmatprep.subr.mxu0 0.0
    %2632 = vmatpush1.msra.mxu0 0.0
    %2633 = vmatprep.subr.mxu0 0.0
    %2634 = vmatpush1.msra.mxu0 0.0
    %2635 = vmatprep.subr.mxu0 0.0
    %2636 = vmatpush1.msra.mxu0 0.0
    %2637 = vmatprep.subr.mxu0 0.0
    %2638 = vmatpush1.msra.mxu0 0.0
    %2639 = vmatprep.subr.mxu0 0.0
    %2640 = vmatpush1.msra.mxu0 0.0
    %2641 = vmatprep.subr.mxu0 0.0
    %2642 = vmatpush1.msra.mxu0 0.0
    %2643 = vmatprep.subr.mxu0 0.0
    %2644 = vmatpush1.msra.mxu0 0.0
    %2645 = vmatprep.subr.mxu0 0.0
    %2646 = vmatpush1.msra.mxu0 0.0
    %2647 = vmatprep.subr.mxu0 0.0
    %2648 = vmatpush1.msra.mxu0 0.0
    %2649 = vmatprep.subr.mxu0 0.0
    %2650 = vmatpush1.msra.mxu0 0.0
    %2651 = vmatprep.subr.mxu0 0.0
    %2652 = vmatpush1.msra.mxu0 0.0
    %2653 = vmatprep.subr.mxu0 0.0
    %2654 = vmatpush1.msra.mxu0 0.0
    %2655 = vmatprep.subr.mxu0 0.0
    %2656 = vmatpush1.msra.mxu0 0.0
    %2657 = vmatprep.subr.mxu0 0.0
    %2658 = vmatpush1.msra.mxu0 0.0
    %2659 = vmatprep.subr.mxu0 0.0
    %2660 = vmatpush1.msra.mxu0 0.0
    %2661 = vmatprep.subr.mxu0 0.0
    %2662 = vmatpush1.msra.mxu0 0.0
    %2663 = vmatprep.mubr.f32.mxu0 0.0
    %v2664 = vand.u32 %v107, 4294901760
    %2665 = vmatmul.mubr.f32.gmra.mrb[0].mxu0 %v2664
    %v2666 = vpop.f32.mrb[0].mxu0
    %v2667 = vadd.f32 %v2516, %v2666
    %v2668 = vpop.f32.mrb[0].mxu0
    %2669 = vmatprep.mubr.f32.mxu0 0.0
    %v2670 = vand.u32 %v110, 4294901760
    %2671 = vmatmul.mubr.f32.gmra.mrb[0].mxu0 %v2670
    %v2672 = vpop.f32.mrb[0].mxu0
    %v2673 = vadd.f32 %v2526, %v2672
    %v2674 = vpop.f32.mrb[0].mxu0
    %2675 = vmatprep.mubr.f32.mxu0 0.0
    %v2676 = vand.u32 %v113, 4294901760
    %2677 = vmatmul.mubr.f32.gmra.mrb[0].mxu0 %v2676
    %v2678 = vpop.f32.mrb[0].mxu0
    %v2679 = vadd.f32 %v2536, %v2678
    %v2680 = vpop.f32.mrb[0].mxu0
    %2681 = vmatprep.mubr.f32.mxu0 0.0
    %v2682 = vand.u32 %v116, 4294901760
    %2683 = vmatmul.mubr.f32.gmra.mrb[0].mxu0 %v2682
    %v2684 = vpop.f32.mrb[0].mxu0
    %v2685 = vadd.f32 %v2546, %v2684
    %v2686 = vpop.f32.mrb[0].mxu0
    %2687 = vmatprep.mubr.f32.mxu0 0.0
    %v2688 = vand.u32 %v119, 4294901760
    %2689 = vmatmul.mubr.f32.gmra.mrb[0].mxu0 %v2688
    %v2690 = vpop.f32.mrb[0].mxu0
    %v2691 = vadd.f32 %v2556, %v2690
    %v2692 = vpop.f32.mrb[0].mxu0
    %2693 = vmatprep.mubr.f32.mxu0 0.0
    %v2694 = vand.u32 %v122, 4294901760
    %2695 = vmatmul.mubr.f32.gmra.mrb[0].mxu0 %v2694
    %v2696 = vpop.f32.mrb[0].mxu0
    %v2697 = vadd.f32 %v2566, %v2696
    %v2698 = vpop.f32.mrb[0].mxu0
    %2699 = vmatprep.mubr.f32.mxu0 0.0
    %v2700 = vand.u32 %v125, 4294901760
    %2701 = vmatmul.mubr.f32.gmra.mrb[0].mxu0 %v2700
    %v2702 = vpop.f32.mrb[0].mxu0
    %v2703 = vadd.f32 %v2576, %v2702
    %v2704 = vpop.f32.mrb[0].mxu0
    %2705 = vmatprep.mubr.f32.mxu0 0.0
    %v2706 = vand.u32 %v128, 4294901760
    %2707 = vmatmul.mubr.f32.gmra.mrb[0].mxu0 %v2706
    %v2708 = vpop.f32.mrb[0].mxu0
    %v2709 = vadd.f32 %v2586, %v2708
    %v2710 = vpop.f32.mrb[0].mxu0
    %2711 = vdwg.mxu0
    %2712 = vmatprep.subr.mxu0 0.0
    %v2713 = vand.u32 %v103, 4294901760
    %v2714 = vsub.f32 %v103, %v2713
    %2715 = vmatpush1.msra.mxu0 %v2714
    %2716 = vmatprep.subr.mxu0 0.0
    %v2717 = vand.u32 %v104, 4294901760
    %v2718 = vsub.f32 %v104, %v2717
    %2719 = vmatpush1.msra.mxu0 %v2718
    %2720 = vmatprep.subr.mxu0 0.0
    %2721 = vmatpush1.msra.mxu0 0.0
    %2722 = vmatprep.subr.mxu0 0.0
    %2723 = vmatpush1.msra.mxu0 0.0
    %2724 = vmatprep.subr.mxu0 0.0
    %2725 = vmatpush1.msra.mxu0 0.0
    %2726 = vmatprep.subr.mxu0 0.0
    %2727 = vmatpush1.msra.mxu0 0.0
    %2728 = vmatprep.subr.mxu0 0.0
    %2729 = vmatpush1.msra.mxu0 0.0
    %2730 = vmatprep.subr.mxu0 0.0
    %2731 = vmatpush1.msra.mxu0 0.0
    %2732 = vmatprep.subr.mxu0 0.0
    %2733 = vmatpush1.msra.mxu0 0.0
    %2734 = vmatprep.subr.mxu0 0.0
    %2735 = vmatpush1.msra.mxu0 0.0
    %2736 = vmatprep.subr.mxu0 0.0
    %2737 = vmatpush1.msra.mxu0 0.0
    %2738 = vmatprep.subr.mxu0 0.0
    %2739 = vmatpush1.msra.mxu0 0.0
    %2740 = vmatprep.subr.mxu0 0.0
    %2741 = vmatpush1.msra.mxu0 0.0
    %2742 = vmatprep.subr.mxu0 0.0
    %2743 = vmatpush1.msra.mxu0 0.0
    %2744 = vmatprep.subr.mxu0 0.0
    %2745 = vmatpush1.msra.mxu0 0.0
    %2746 = vmatprep.subr.mxu0 0.0
    %2747 = vmatpush1.msra.mxu0 0.0
    %2748 = vmatprep.subr.mxu0 0.0
    %2749 = vmatpush1.msra.mxu0 0.0
    %2750 = vmatprep.subr.mxu0 0.0
    %2751 = vmatpush1.msra.mxu0 0.0
    %2752 = vmatprep.subr.mxu0 0.0
    %2753 = vmatpush1.msra.mxu0 0.0
    %2754 = vmatprep.subr.mxu0 0.0
    %2755 = vmatpush1.msra.mxu0 0.0
    %2756 = vmatprep.subr.mxu0 0.0
    %2757 = vmatpush1.msra.mxu0 0.0
    %2758 = vmatprep.subr.mxu0 0.0
    %2759 = vmatpush1.msra.mxu0 0.0
    %2760 = vmatprep.subr.mxu0 0.0
    %2761 = vmatpush1.msra.mxu0 0.0
    %2762 = vmatprep.subr.mxu0 0.0
    %2763 = vmatpush1.msra.mxu0 0.0
    %2764 = vmatprep.subr.mxu0 0.0
    %2765 = vmatpush1.msra.mxu0 0.0
    %2766 = vmatprep.subr.mxu0 0.0
    %2767 = vmatpush1.msra.mxu0 0.0
    %2768 = vmatprep.subr.mxu0 0.0
    %2769 = vmatpush1.msra.mxu0 0.0
    %2770 = vmatprep.subr.mxu0 0.0
    %2771 = vmatpush1.msra.mxu0 0.0
    %2772 = vmatprep.subr.mxu0 0.0
    %2773 = vmatpush1.msra.mxu0 0.0
    %2774 = vmatprep.subr.mxu0 0.0
    %2775 = vmatpush1.msra.mxu0 0.0
    %2776 = vmatprep.subr.mxu0 0.0
    %2777 = vmatpush1.msra.mxu0 0.0
    %2778 = vmatprep.subr.mxu0 0.0
    %2779 = vmatpush1.msra.mxu0 0.0
    %2780 = vmatprep.mubr.f32.mxu0 0.0
    %v2781 = vand.u32 %v107, 4294901760
    %v2782 = vsub.f32 %v107, %v2781
    %2783 = vmatmul.mubr.f32.gmra.mrb[0].mxu0 %v2782
    %v2784 = vpop.f32.mrb[0].mxu0
    %v2785 = vadd.f32 %v2667, %v2784
    %v2786 = vpop.f32.mrb[0].mxu0
    %2787 = vmatprep.mubr.f32.mxu0 0.0
    %v2788 = vand.u32 %v110, 4294901760
    %v2789 = vsub.f32 %v110, %v2788
    %2790 = vmatmul.mubr.f32.gmra.mrb[0].mxu0 %v2789
    %v2791 = vpop.f32.mrb[0].mxu0
    %v2792 = vadd.f32 %v2673, %v2791
    %v2793 = vpop.f32.mrb[0].mxu0
    %2794 = vmatprep.mubr.f32.mxu0 0.0
    %v2795 = vand.u32 %v113, 4294901760
    %v2796 = vsub.f32 %v113, %v2795
    %2797 = vmatmul.mubr.f32.gmra.mrb[0].mxu0 %v2796
    %v2798 = vpop.f32.mrb[0].mxu0
    %v2799 = vadd.f32 %v2679, %v2798
    %v2800 = vpop.f32.mrb[0].mxu0
    %2801 = vmatprep.mubr.f32.mxu0 0.0
    %v2802 = vand.u32 %v116, 4294901760
    %v2803 = vsub.f32 %v116, %v2802
    %2804 = vmatmul.mubr.f32.gmra.mrb[0].mxu0 %v2803
    %v2805 = vpop.f32.mrb[0].mxu0
    %v2806 = vadd.f32 %v2685, %v2805
    %v2807 = vpop.f32.mrb[0].mxu0
    %2808 = vmatprep.mubr.f32.mxu0 0.0
    %v2809 = vand.u32 %v119, 4294901760
    %v2810 = vsub.f32 %v119, %v2809
    %2811 = vmatmul.mubr.f32.gmra.mrb[0].mxu0 %v2810
    %v2812 = vpop.f32.mrb[0].mxu0
    %v2813 = vadd.f32 %v2691, %v2812
    %v2814 = vpop.f32.mrb[0].mxu0
    %2815 = vmatprep.mubr.f32.mxu0 0.0
    %v2816 = vand.u32 %v122, 4294901760
    %v2817 = vsub.f32 %v122, %v2816
    %2818 = vmatmul.mubr.f32.gmra.mrb[0].mxu0 %v2817
    %v2819 = vpop.f32.mrb[0].mxu0
    %v2820 = vadd.f32 %v2697, %v2819
    %v2821 = vpop.f32.mrb[0].mxu0
    %2822 = vmatprep.mubr.f32.mxu0 0.0
    %v2823 = vand.u32 %v125, 4294901760
    %v2824 = vsub.f32 %v125, %v2823
    %2825 = vmatmul.mubr.f32.gmra.mrb[0].mxu0 %v2824
    %v2826 = vpop.f32.mrb[0].mxu0
    %v2827 = vadd.f32 %v2703, %v2826
    %v2828 = vpop.f32.mrb[0].mxu0
    %2829 = vmatprep.mubr.f32.mxu0 0.0
    %v2830 = vand.u32 %v128, 4294901760
    %v2831 = vsub.f32 %v128, %v2830
    %2832 = vmatmul.mubr.f32.gmra.mrb[0].mxu0 %v2831
    %v2833 = vpop.f32.mrb[0].mxu0
    %v2834 = vadd.f32 %v2709, %v2833
    %v2835 = vpop.f32.mrb[0].mxu0
    %2836 = vdwg.mxu0
    %2837 = vmatprep.subr.mxu0 0.0
    %v2838 = vand.u32 %v103, 4294901760
    %2839 = vmatpush1.msra.mxu0 %v2838
    %2840 = vmatprep.subr.mxu0 0.0
    %v2841 = vand.u32 %v104, 4294901760
    %2842 = vmatpush1.msra.mxu0 %v2841
    %2843 = vmatprep.subr.mxu0 0.0
    %2844 = vmatpush1.msra.mxu0 0.0
    %2845 = vmatprep.subr.mxu0 0.0
    %2846 = vmatpush1.msra.mxu0 0.0
    %2847 = vmatprep.subr.mxu0 0.0
    %2848 = vmatpush1.msra.mxu0 0.0
    %2849 = vmatprep.subr.mxu0 0.0
    %2850 = vmatpush1.msra.mxu0 0.0
    %2851 = vmatprep.subr.mxu0 0.0
    %2852 = vmatpush1.msra.mxu0 0.0
    %2853 = vmatprep.subr.mxu0 0.0
    %2854 = vmatpush1.msra.mxu0 0.0
    %2855 = vmatprep.subr.mxu0 0.0
    %2856 = vmatpush1.msra.mxu0 0.0
    %2857 = vmatprep.subr.mxu0 0.0
    %2858 = vmatpush1.msra.mxu0 0.0
    %2859 = vmatprep.subr.mxu0 0.0
    %2860 = vmatpush1.msra.mxu0 0.0
    %2861 = vmatprep.subr.mxu0 0.0
    %2862 = vmatpush1.msra.mxu0 0.0
    %2863 = vmatprep.subr.mxu0 0.0
    %2864 = vmatpush1.msra.mxu0 0.0
    %2865 = vmatprep.subr.mxu0 0.0
    %2866 = vmatpush1.msra.mxu0 0.0
    %2867 = vmatprep.subr.mxu0 0.0
    %2868 = vmatpush1.msra.mxu0 0.0
    %2869 = vmatprep.subr.mxu0 0.0
    %2870 = vmatpush1.msra.mxu0 0.0
    %2871 = vmatprep.subr.mxu0 0.0
    %2872 = vmatpush1.msra.mxu0 0.0
    %2873 = vmatprep.subr.mxu0 0.0
    %2874 = vmatpush1.msra.mxu0 0.0
    %2875 = vmatprep.subr.mxu0 0.0
    %2876 = vmatpush1.msra.mxu0 0.0
    %2877 = vmatprep.subr.mxu0 0.0
    %2878 = vmatpush1.msra.mxu0 0.0
    %2879 = vmatprep.subr.mxu0 0.0
    %2880 = vmatpush1.msra.mxu0 0.0
    %2881 = vmatprep.subr.mxu0 0.0
    %2882 = vmatpush1.msra.mxu0 0.0
    %2883 = vmatprep.subr.mxu0 0.0
    %2884 = vmatpush1.msra.mxu0 0.0
    %2885 = vmatprep.subr.mxu0 0.0
    %2886 = vmatpush1.msra.mxu0 0.0
    %2887 = vmatprep.subr.mxu0 0.0
    %2888 = vmatpush1.msra.mxu0 0.0
    %2889 = vmatprep.subr.mxu0 0.0
    %2890 = vmatpush1.msra.mxu0 0.0
    %2891 = vmatprep.subr.mxu0 0.0
    %2892 = vmatpush1.msra.mxu0 0.0
    %2893 = vmatprep.subr.mxu0 0.0
    %2894 = vmatpush1.msra.mxu0 0.0
    %2895 = vmatprep.subr.mxu0 0.0
    %2896 = vmatpush1.msra.mxu0 0.0
    %2897 = vmatprep.subr.mxu0 0.0
    %2898 = vmatpush1.msra.mxu0 0.0
    %2899 = vmatprep.subr.mxu0 0.0
    %2900 = vmatpush1.msra.mxu0 0.0
    %2901 = vmatprep.subr.mxu0 0.0
    %2902 = vmatpush1.msra.mxu0 0.0
    %2903 = vmatprep.mubr.f32.mxu0 0.0
    %v2904 = vand.u32 %v107, 4294901760
    %v2905 = vsub.f32 %v107, %v2904
    %v2906 = vand.u32 %v2905, 4294901760
    %2907 = vmatmul.mubr.f32.gmra.mrb[0].mxu0 %v2906
    %v2908 = vpop.f32.mrb[0].mxu0
    %v2909 = vadd.f32 %v2785, %v2908
    %v2910 = vpop.f32.mrb[0].mxu0
    %2911 = vmatprep.mubr.f32.mxu0 0.0
    %v2912 = vand.u32 %v110, 4294901760
    %v2913 = vsub.f32 %v110, %v2912
    %v2914 = vand.u32 %v2913, 4294901760
    %2915 = vmatmul.mubr.f32.gmra.mrb[0].mxu0 %v2914
    %v2916 = vpop.f32.mrb[0].mxu0
    %v2917 = vadd.f32 %v2792, %v2916
    %v2918 = vpop.f32.mrb[0].mxu0
    %2919 = vmatprep.mubr.f32.mxu0 0.0
    %v2920 = vand.u32 %v113, 4294901760
    %v2921 = vsub.f32 %v113, %v2920
    %v2922 = vand.u32 %v2921, 4294901760
    %2923 = vmatmul.mubr.f32.gmra.mrb[0].mxu0 %v2922
    %v2924 = vpop.f32.mrb[0].mxu0
    %v2925 = vadd.f32 %v2799, %v2924
    %v2926 = vpop.f32.mrb[0].mxu0
    %2927 = vmatprep.mubr.f32.mxu0 0.0
    %v2928 = vand.u32 %v116, 4294901760
    %v2929 = vsub.f32 %v116, %v2928
    %v2930 = vand.u32 %v2929, 4294901760
    %2931 = vmatmul.mubr.f32.gmra.mrb[0].mxu0 %v2930
    %v2932 = vpop.f32.mrb[0].mxu0
    %v2933 = vadd.f32 %v2806, %v2932
    %v2934 = vpop.f32.mrb[0].mxu0
    %2935 = vmatprep.mubr.f32.mxu0 0.0
    %v2936 = vand.u32 %v119, 4294901760
    %v2937 = vsub.f32 %v119, %v2936
    %v2938 = vand.u32 %v2937, 4294901760
    %2939 = vmatmul.mubr.f32.gmra.mrb[0].mxu0 %v2938
    %v2940 = vpop.f32.mrb[0].mxu0
    %v2941 = vadd.f32 %v2813, %v2940
    %v2942 = vpop.f32.mrb[0].mxu0
    %2943 = vmatprep.mubr.f32.mxu0 0.0
    %v2944 = vand.u32 %v122, 4294901760
    %v2945 = vsub.f32 %v122, %v2944
    %v2946 = vand.u32 %v2945, 4294901760
    %2947 = vmatmul.mubr.f32.gmra.mrb[0].mxu0 %v2946
    %v2948 = vpop.f32.mrb[0].mxu0
    %v2949 = vadd.f32 %v2820, %v2948
    %v2950 = vpop.f32.mrb[0].mxu0
    %2951 = vmatprep.mubr.f32.mxu0 0.0
    %v2952 = vand.u32 %v125, 4294901760
    %v2953 = vsub.f32 %v125, %v2952
    %v2954 = vand.u32 %v2953, 4294901760
    %2955 = vmatmul.mubr.f32.gmra.mrb[0].mxu0 %v2954
    %v2956 = vpop.f32.mrb[0].mxu0
    %v2957 = vadd.f32 %v2827, %v2956
    %v2958 = vpop.f32.mrb[0].mxu0
    %2959 = vmatprep.mubr.f32.mxu0 0.0
    %v2960 = vand.u32 %v128, 4294901760
    %v2961 = vsub.f32 %v128, %v2960
    %v2962 = vand.u32 %v2961, 4294901760
    %2963 = vmatmul.mubr.f32.gmra.mrb[0].mxu0 %v2962
    %v2964 = vpop.f32.mrb[0].mxu0
    %v2965 = vadd.f32 %v2834, %v2964
    %v2966 = vpop.f32.mrb[0].mxu0
    %2967 = vdwg.mxu0
    %2968 = vmatprep.subr.mxu0 0.0
    %v2969 = vand.u32 %v103, 4294901760
    %v2970 = vsub.f32 %v103, %v2969
    %v2971 = vand.u32 %v2970, 4294901760
    %2972 = vmatpush1.msra.mxu0 %v2971
    %2973 = vmatprep.subr.mxu0 0.0
    %v2974 = vand.u32 %v104, 4294901760
    %v2975 = vsub.f32 %v104, %v2974
    %v2976 = vand.u32 %v2975, 4294901760
    %2977 = vmatpush1.msra.mxu0 %v2976
    %2978 = vmatprep.subr.mxu0 0.0
    %2979 = vmatpush1.msra.mxu0 0.0
    %2980 = vmatprep.subr.mxu0 0.0
    %2981 = vmatpush1.msra.mxu0 0.0
    %2982 = vmatprep.subr.mxu0 0.0
    %2983 = vmatpush1.msra.mxu0 0.0
    %2984 = vmatprep.subr.mxu0 0.0
    %2985 = vmatpush1.msra.mxu0 0.0
    %2986 = vmatprep.subr.mxu0 0.0
    %2987 = vmatpush1.msra.mxu0 0.0
    %2988 = vmatprep.subr.mxu0 0.0
    %2989 = vmatpush1.msra.mxu0 0.0
    %2990 = vmatprep.subr.mxu0 0.0
    %2991 = vmatpush1.msra.mxu0 0.0
    %2992 = vmatprep.subr.mxu0 0.0
    %2993 = vmatpush1.msra.mxu0 0.0
    %2994 = vmatprep.subr.mxu0 0.0
    %2995 = vmatpush1.msra.mxu0 0.0
    %2996 = vmatprep.subr.mxu0 0.0
    %2997 = vmatpush1.msra.mxu0 0.0
    %2998 = vmatprep.subr.mxu0 0.0
    %2999 = vmatpush1.msra.mxu0 0.0
    %3000 = vmatprep.subr.mxu0 0.0
    %3001 = vmatpush1.msra.mxu0 0.0
    %3002 = vmatprep.subr.mxu0 0.0
    %3003 = vmatpush1.msra.mxu0 0.0
    %3004 = vmatprep.subr.mxu0 0.0
    %3005 = vmatpush1.msra.mxu0 0.0
    %3006 = vmatprep.subr.mxu0 0.0
    %3007 = vmatpush1.msra.mxu0 0.0
    %3008 = vmatprep.subr.mxu0 0.0
    %3009 = vmatpush1.msra.mxu0 0.0
    %3010 = vmatprep.subr.mxu0 0.0
    %3011 = vmatpush1.msra.mxu0 0.0
    %3012 = vmatprep.subr.mxu0 0.0
    %3013 = vmatpush1.msra.mxu0 0.0
    %3014 = vmatprep.subr.mxu0 0.0
    %3015 = vmatpush1.msra.mxu0 0.0
    %3016 = vmatprep.subr.mxu0 0.0
    %3017 = vmatpush1.msra.mxu0 0.0
    %3018 = vmatprep.subr.mxu0 0.0
    %3019 = vmatpush1.msra.mxu0 0.0
    %3020 = vmatprep.subr.mxu0 0.0
    %3021 = vmatpush1.msra.mxu0 0.0
    %3022 = vmatprep.subr.mxu0 0.0
    %3023 = vmatpush1.msra.mxu0 0.0
    %3024 = vmatprep.subr.mxu0 0.0
    %3025 = vmatpush1.msra.mxu0 0.0
    %3026 = vmatprep.subr.mxu0 0.0
    %3027 = vmatpush1.msra.mxu0 0.0
    %3028 = vmatprep.subr.mxu0 0.0
    %3029 = vmatpush1.msra.mxu0 0.0
    %3030 = vmatprep.subr.mxu0 0.0
    %3031 = vmatpush1.msra.mxu0 0.0
    %3032 = vmatprep.subr.mxu0 0.0
    %3033 = vmatpush1.msra.mxu0 0.0
    %3034 = vmatprep.subr.mxu0 0.0
    %3035 = vmatpush1.msra.mxu0 0.0
    %3036 = vmatprep.subr.mxu0 0.0
    %3037 = vmatpush1.msra.mxu0 0.0
    %3038 = vmatprep.mubr.f32.mxu0 0.0
    %v3039 = vand.u32 %v107, 4294901760
    %3040 = vmatmul.mubr.f32.gmra.mrb[0].mxu0 %v3039
    %v3041 = vpop.f32.mrb[0].mxu0
    %v3042 = vadd.f32 %v2909, %v3041
    %v3043 = vpop.f32.mrb[0].mxu0
    %3044 = vmatprep.mubr.f32.mxu0 0.0
    %v3045 = vand.u32 %v110, 4294901760
    %3046 = vmatmul.mubr.f32.gmra.mrb[0].mxu0 %v3045
    %v3047 = vpop.f32.mrb[0].mxu0
    %v3048 = vadd.f32 %v2917, %v3047
    %v3049 = vpop.f32.mrb[0].mxu0
    %3050 = vmatprep.mubr.f32.mxu0 0.0
    %v3051 = vand.u32 %v113, 4294901760
    %3052 = vmatmul.mubr.f32.gmra.mrb[0].mxu0 %v3051
    %v3053 = vpop.f32.mrb[0].mxu0
    %v3054 = vadd.f32 %v2925, %v3053
    %v3055 = vpop.f32.mrb[0].mxu0
    %3056 = vmatprep.mubr.f32.mxu0 0.0
    %v3057 = vand.u32 %v116, 4294901760
    %3058 = vmatmul.mubr.f32.gmra.mrb[0].mxu0 %v3057
    %v3059 = vpop.f32.mrb[0].mxu0
    %v3060 = vadd.f32 %v2933, %v3059
    %v3061 = vpop.f32.mrb[0].mxu0
    %3062 = vmatprep.mubr.f32.mxu0 0.0
    %v3063 = vand.u32 %v119, 4294901760
    %3064 = vmatmul.mubr.f32.gmra.mrb[0].mxu0 %v3063
    %v3065 = vpop.f32.mrb[0].mxu0
    %v3066 = vadd.f32 %v2941, %v3065
    %v3067 = vpop.f32.mrb[0].mxu0
    %3068 = vmatprep.mubr.f32.mxu0 0.0
    %v3069 = vand.u32 %v122, 4294901760
    %3070 = vmatmul.mubr.f32.gmra.mrb[0].mxu0 %v3069
    %v3071 = vpop.f32.mrb[0].mxu0
    %v3072 = vadd.f32 %v2949, %v3071
    %v3073 = vpop.f32.mrb[0].mxu0
    %3074 = vmatprep.mubr.f32.mxu0 0.0
    %v3075 = vand.u32 %v125, 4294901760
    %3076 = vmatmul.mubr.f32.gmra.mrb[0].mxu0 %v3075
    %v3077 = vpop.f32.mrb[0].mxu0
    %v3078 = vadd.f32 %v2957, %v3077
    %v3079 = vpop.f32.mrb[0].mxu0
    %3080 = vmatprep.mubr.f32.mxu0 0.0
    %v3081 = vand.u32 %v128, 4294901760
    %3082 = vmatmul.mubr.f32.gmra.mrb[0].mxu0 %v3081
    %v3083 = vpop.f32.mrb[0].mxu0
    %v3084 = vadd.f32 %v2965, %v3083
    %v3085 = vpop.f32.mrb[0].mxu0
    %3086 = vdwg.mxu0
    %3087 = vmatprep.subr.mxu0 0.0
    %v3088 = vand.u32 %v103, 4294901760
    %3089 = vmatpush1.msra.mxu0 %v3088
    %3090 = vmatprep.subr.mxu0 0.0
    %v3091 = vand.u32 %v104, 4294901760
    %3092 = vmatpush1.msra.mxu0 %v3091
    %3093 = vmatprep.subr.mxu0 0.0
    %3094 = vmatpush1.msra.mxu0 0.0
    %3095 = vmatprep.subr.mxu0 0.0
    %3096 = vmatpush1.msra.mxu0 0.0
    %3097 = vmatprep.subr.mxu0 0.0
    %3098 = vmatpush1.msra.mxu0 0.0
    %3099 = vmatprep.subr.mxu0 0.0
    %3100 = vmatpush1.msra.mxu0 0.0
    %3101 = vmatprep.subr.mxu0 0.0
    %3102 = vmatpush1.msra.mxu0 0.0
    %3103 = vmatprep.subr.mxu0 0.0
    %3104 = vmatpush1.msra.mxu0 0.0
    %3105 = vmatprep.subr.mxu0 0.0
    %3106 = vmatpush1.msra.mxu0 0.0
    %3107 = vmatprep.subr.mxu0 0.0
    %3108 = vmatpush1.msra.mxu0 0.0
    %3109 = vmatprep.subr.mxu0 0.0
    %3110 = vmatpush1.msra.mxu0 0.0
    %3111 = vmatprep.subr.mxu0 0.0
    %3112 = vmatpush1.msra.mxu0 0.0
    %3113 = vmatprep.subr.mxu0 0.0
    %3114 = vmatpush1.msra.mxu0 0.0
    %3115 = vmatprep.subr.mxu0 0.0
    %3116 = vmatpush1.msra.mxu0 0.0
    %3117 = vmatprep.subr.mxu0 0.0
    %3118 = vmatpush1.msra.mxu0 0.0
    %3119 = vmatprep.subr.mxu0 0.0
    %3120 = vmatpush1.msra.mxu0 0.0
    %3121 = vmatprep.subr.mxu0 0.0
    %3122 = vmatpush1.msra.mxu0 0.0
    %3123 = vmatprep.subr.mxu0 0.0
    %3124 = vmatpush1.msra.mxu0 0.0
    %3125 = vmatprep.subr.mxu0 0.0
    %3126 = vmatpush1.msra.mxu0 0.0
    %3127 = vmatprep.subr.mxu0 0.0
    %3128 = vmatpush1.msra.mxu0 0.0
    %3129 = vmatprep.subr.mxu0 0.0
    %3130 = vmatpush1.msra.mxu0 0.0
    %3131 = vmatprep.subr.mxu0 0.0
    %3132 = vmatpush1.msra.mxu0 0.0
    %3133 = vmatprep.subr.mxu0 0.0
    %3134 = vmatpush1.msra.mxu0 0.0
    %3135 = vmatprep.subr.mxu0 0.0
    %3136 = vmatpush1.msra.mxu0 0.0
    %3137 = vmatprep.subr.mxu0 0.0
    %3138 = vmatpush1.msra.mxu0 0.0
    %3139 = vmatprep.subr.mxu0 0.0
    %3140 = vmatpush1.msra.mxu0 0.0
    %3141 = vmatprep.subr.mxu0 0.0
    %3142 = vmatpush1.msra.mxu0 0.0
    %3143 = vmatprep.subr.mxu0 0.0
    %3144 = vmatpush1.msra.mxu0 0.0
    %3145 = vmatprep.subr.mxu0 0.0
    %3146 = vmatpush1.msra.mxu0 0.0
    %3147 = vmatprep.subr.mxu0 0.0
    %3148 = vmatpush1.msra.mxu0 0.0
    %3149 = vmatprep.subr.mxu0 0.0
    %3150 = vmatpush1.msra.mxu0 0.0
    %3151 = vmatprep.subr.mxu0 0.0
    %3152 = vmatpush1.msra.mxu0 0.0
    %3153 = vmatprep.mubr.f32.mxu0 0.0
    %v3154 = vand.u32 %v107, 4294901760
    %3155 = vmatmul.mubr.f32.gmra.mrb[0].mxu0 %v3154
    %v3156 = vpop.f32.mrb[0].mxu0
    %v3157 = vadd.f32 %v3042, %v3156
    %v3158 = vpop.f32.mrb[0].mxu0
    %3159 = vmatprep.mubr.f32.mxu0 0.0
    %v3160 = vand.u32 %v110, 4294901760
    %3161 = vmatmul.mubr.f32.gmra.mrb[0].mxu0 %v3160
    %v3162 = vpop.f32.mrb[0].mxu0
    %v3163 = vadd.f32 %v3048, %v3162
    %v3164 = vpop.f32.mrb[0].mxu0
    %3165 = vmatprep.mubr.f32.mxu0 0.0
    %v3166 = vand.u32 %v113, 4294901760
    %3167 = vmatmul.mubr.f32.gmra.mrb[0].mxu0 %v3166
    %v3168 = vpop.f32.mrb[0].mxu0
    %v3169 = vadd.f32 %v3054, %v3168
    %v3170 = vpop.f32.mrb[0].mxu0
    %3171 = vmatprep.mubr.f32.mxu0 0.0
    %v3172 = vand.u32 %v116, 4294901760
    %3173 = vmatmul.mubr.f32.gmra.mrb[0].mxu0 %v3172
    %v3174 = vpop.f32.mrb[0].mxu0
    %v3175 = vadd.f32 %v3060, %v3174
    %v3176 = vpop.f32.mrb[0].mxu0
    %3177 = vmatprep.mubr.f32.mxu0 0.0
    %v3178 = vand.u32 %v119, 4294901760
    %3179 = vmatmul.mubr.f32.gmra.mrb[0].mxu0 %v3178
    %v3180 = vpop.f32.mrb[0].mxu0
    %v3181 = vadd.f32 %v3066, %v3180
    %v3182 = vpop.f32.mrb[0].mxu0
    %3183 = vmatprep.mubr.f32.mxu0 0.0
    %v3184 = vand.u32 %v122, 4294901760
    %3185 = vmatmul.mubr.f32.gmra.mrb[0].mxu0 %v3184
    %v3186 = vpop.f32.mrb[0].mxu0
    %v3187 = vadd.f32 %v3072, %v3186
    %v3188 = vpop.f32.mrb[0].mxu0
    %3189 = vmatprep.mubr.f32.mxu0 0.0
    %v3190 = vand.u32 %v125, 4294901760
    %3191 = vmatmul.mubr.f32.gmra.mrb[0].mxu0 %v3190
    %v3192 = vpop.f32.mrb[0].mxu0
    %v3193 = vadd.f32 %v3078, %v3192
    %v3194 = vpop.f32.mrb[0].mxu0
    %3195 = vmatprep.mubr.f32.mxu0 0.0
    %v3196 = vand.u32 %v128, 4294901760
    %3197 = vmatmul.mubr.f32.gmra.mrb[0].mxu0 %v3196
    %v3198 = vpop.f32.mrb[0].mxu0
    %v3199 = vadd.f32 %v3084, %v3198
    %v3200 = vpop.f32.mrb[0].mxu0
    %3201 = vdwg.mxu0
    %v3202 = vld [vmem:[%s2] sm:$0xff]
    %v3203 = vld [vmem:[%s2 + $0x8] sm:$0xff]
    %v3204 = vld [vmem:[%s2 + $0x10] sm:$0xff]
    %v3205 = vld [vmem:[%s2 + $0x18] sm:$0xff]
    %v3206 = vld [vmem:[%s2 + $0x20] sm:$0xff]
    %v3207 = vld [vmem:[%s2 + $0x28] sm:$0xff]
    %v3208 = vld [vmem:[%s2 + $0x30] sm:$0xff]
    %v3209 = vld [vmem:[%s2 + $0x38] sm:$0xff]
    %s3210 = scalar_lea.vmem %s2, 64
    %v3211 = vld [vmem:[%s3210] sm:$0xff]
    %v3212 = vld [vmem:[%s3210 + $0x8] sm:$0xff]
    %v3213 = vld [vmem:[%s3210 + $0x10] sm:$0xff]
    %v3214 = vld [vmem:[%s3210 + $0x18] sm:$0xff]
    %v3215 = vld [vmem:[%s3210 + $0x20] sm:$0xff]
    %v3216 = vld [vmem:[%s3210 + $0x28] sm:$0xff]
    %v3217 = vld [vmem:[%s3210 + $0x30] sm:$0xff]
    %v3218 = vld [vmem:[%s3210 + $0x38] sm:$0xff]
    %vm3219 = vcmask 523264
    %v3221 = vsel %vm3219, %v3202, 0
    %v3224 = vsel %vm3219, %v3203, 0
    %v3227 = vsel %vm3219, %v3204, 0
    %v3230 = vsel %vm3219, %v3205, 0
    %v3233 = vsel %vm3219, %v3206, 0
    %v3236 = vsel %vm3219, %v3207, 0
    %v3239 = vsel %vm3219, %v3208, 0
    %v3242 = vsel %vm3219, %v3209, 0
    %3244 = vmatprep.subr.mxu0 0.0
    %v3245 = vand.u32 %v1674, 4294901760
    %3246 = vmatpush1.msra.mxu0 %v3245
    %3247 = vmatprep.subr.mxu0 0.0
    %v3248 = vand.u32 %v1675, 4294901760
    %3249 = vmatpush1.msra.mxu0 %v3248
    %3250 = vmatprep.subr.mxu0 0.0
    %v3251 = vand.u32 %v1676, 4294901760
    %3252 = vmatpush1.msra.mxu0 %v3251
    %3253 = vmatprep.subr.mxu0 0.0
    %v3254 = vand.u32 %v1677, 4294901760
    %3255 = vmatpush1.msra.mxu0 %v3254
    %3256 = vmatprep.subr.mxu0 0.0
    %v3257 = vand.u32 %v1678, 4294901760
    %3258 = vmatpush1.msra.mxu0 %v3257
    %3259 = vmatprep.subr.mxu0 0.0
    %v3260 = vand.u32 %v1679, 4294901760
    %3261 = vmatpush1.msra.mxu0 %v3260
    %3262 = vmatprep.subr.mxu0 0.0
    %v3263 = vand.u32 %v1680, 4294901760
    %3264 = vmatpush1.msra.mxu0 %v3263
    %3265 = vmatprep.subr.mxu0 0.0
    %v3266 = vand.u32 %v1681, 4294901760
    %3267 = vmatpush1.msra.mxu0 %v3266
    %3268 = vmatprep.subr.mxu0 0.0
    %3269 = vmatpush1.msra.mxu0 0.0
    %3270 = vmatprep.subr.mxu0 0.0
    %3271 = vmatpush1.msra.mxu0 0.0
    %3272 = vmatprep.subr.mxu0 0.0
    %3273 = vmatpush1.msra.mxu0 0.0
    %3274 = vmatprep.subr.mxu0 0.0
    %3275 = vmatpush1.msra.mxu0 0.0
    %3276 = vmatprep.subr.mxu0 0.0
    %3277 = vmatpush1.msra.mxu0 0.0
    %3278 = vmatprep.subr.mxu0 0.0
    %3279 = vmatpush1.msra.mxu0 0.0
    %3280 = vmatprep.subr.mxu0 0.0
    %3281 = vmatpush1.msra.mxu0 0.0
    %3282 = vmatprep.subr.mxu0 0.0
    %3283 = vmatpush1.msra.mxu0 0.0
    %3284 = vmatprep.subr.mxu0 0.0
    %3285 = vmatpush1.msra.mxu0 0.0
    %3286 = vmatprep.subr.mxu0 0.0
    %3287 = vmatpush1.msra.mxu0 0.0
    %3288 = vmatprep.subr.mxu0 0.0
    %3289 = vmatpush1.msra.mxu0 0.0
    %3290 = vmatprep.subr.mxu0 0.0
    %3291 = vmatpush1.msra.mxu0 0.0
    %3292 = vmatprep.subr.mxu0 0.0
    %3293 = vmatpush1.msra.mxu0 0.0
    %3294 = vmatprep.subr.mxu0 0.0
    %3295 = vmatpush1.msra.mxu0 0.0
    %3296 = vmatprep.subr.mxu0 0.0
    %3297 = vmatpush1.msra.mxu0 0.0
    %3298 = vmatprep.subr.mxu0 0.0
    %3299 = vmatpush1.msra.mxu0 0.0
    %3300 = vmatprep.subr.mxu0 0.0
    %3301 = vmatpush1.msra.mxu0 0.0
    %3302 = vmatprep.subr.mxu0 0.0
    %3303 = vmatpush1.msra.mxu0 0.0
    %3304 = vmatprep.subr.mxu0 0.0
    %3305 = vmatpush1.msra.mxu0 0.0
    %3306 = vmatprep.subr.mxu0 0.0
    %3307 = vmatpush1.msra.mxu0 0.0
    %3308 = vmatprep.subr.mxu0 0.0
    %3309 = vmatpush1.msra.mxu0 0.0
    %3310 = vmatprep.subr.mxu0 0.0
    %3311 = vmatpush1.msra.mxu0 0.0
    %3312 = vmatprep.subr.mxu0 0.0
    %3313 = vmatpush1.msra.mxu0 0.0
    %3314 = vmatprep.subr.mxu0 0.0
    %3315 = vmatpush1.msra.mxu0 0.0
    %3316 = vmatprep.mubr.f32.mxu0 0.0
    %v3317 = vand.u32 %v3221, 4294901760
    %v3318 = vsub.f32 %v3221, %v3317
    %v3319 = vand.u32 %v3318, 4294901760
    %v3320 = vsub.f32 %v3318, %v3319
    %v3321 = vand.u32 %v3320, 4294901760
    %3322 = vmatmul.mubr.f32.gmra.mrb[0].mxu0 %v3321
    %v3323 = vpop.f32.mrb[0].mxu0
    %v3324 = vadd.f32 0.0, %v3323
    %v3325 = vpop.f32.mrb[0].mxu0
    %3326 = vmatprep.mubr.f32.mxu0 0.0
    %v3327 = vand.u32 %v3224, 4294901760
    %v3328 = vsub.f32 %v3224, %v3327
    %v3329 = vand.u32 %v3328, 4294901760
    %v3330 = vsub.f32 %v3328, %v3329
    %v3331 = vand.u32 %v3330, 4294901760
    %3332 = vmatmul.mubr.f32.gmra.mrb[0].mxu0 %v3331
    %v3333 = vpop.f32.mrb[0].mxu0
    %v3334 = vadd.f32 0.0, %v3333
    %v3335 = vpop.f32.mrb[0].mxu0
    %3336 = vmatprep.mubr.f32.mxu0 0.0
    %v3337 = vand.u32 %v3227, 4294901760
    %v3338 = vsub.f32 %v3227, %v3337
    %v3339 = vand.u32 %v3338, 4294901760
    %v3340 = vsub.f32 %v3338, %v3339
    %v3341 = vand.u32 %v3340, 4294901760
    %3342 = vmatmul.mubr.f32.gmra.mrb[0].mxu0 %v3341
    %v3343 = vpop.f32.mrb[0].mxu0
    %v3344 = vadd.f32 0.0, %v3343
    %v3345 = vpop.f32.mrb[0].mxu0
    %3346 = vmatprep.mubr.f32.mxu0 0.0
    %v3347 = vand.u32 %v3230, 4294901760
    %v3348 = vsub.f32 %v3230, %v3347
    %v3349 = vand.u32 %v3348, 4294901760
    %v3350 = vsub.f32 %v3348, %v3349
    %v3351 = vand.u32 %v3350, 4294901760
    %3352 = vmatmul.mubr.f32.gmra.mrb[0].mxu0 %v3351
    %v3353 = vpop.f32.mrb[0].mxu0
    %v3354 = vadd.f32 0.0, %v3353
    %v3355 = vpop.f32.mrb[0].mxu0
    %3356 = vmatprep.mubr.f32.mxu0 0.0
    %v3357 = vand.u32 %v3233, 4294901760
    %v3358 = vsub.f32 %v3233, %v3357
    %v3359 = vand.u32 %v3358, 4294901760
    %v3360 = vsub.f32 %v3358, %v3359
    %v3361 = vand.u32 %v3360, 4294901760
    %3362 = vmatmul.mubr.f32.gmra.mrb[0].mxu0 %v3361
    %v3363 = vpop.f32.mrb[0].mxu0
    %v3364 = vadd.f32 0.0, %v3363
    %v3365 = vpop.f32.mrb[0].mxu0
    %3366 = vmatprep.mubr.f32.mxu0 0.0
    %v3367 = vand.u32 %v3236, 4294901760
    %v3368 = vsub.f32 %v3236, %v3367
    %v3369 = vand.u32 %v3368, 4294901760
    %v3370 = vsub.f32 %v3368, %v3369
    %v3371 = vand.u32 %v3370, 4294901760
    %3372 = vmatmul.mubr.f32.gmra.mrb[0].mxu0 %v3371
    %v3373 = vpop.f32.mrb[0].mxu0
    %v3374 = vadd.f32 0.0, %v3373
    %v3375 = vpop.f32.mrb[0].mxu0
    %3376 = vmatprep.mubr.f32.mxu0 0.0
    %v3377 = vand.u32 %v3239, 4294901760
    %v3378 = vsub.f32 %v3239, %v3377
    %v3379 = vand.u32 %v3378, 4294901760
    %v3380 = vsub.f32 %v3378, %v3379
    %v3381 = vand.u32 %v3380, 4294901760
    %3382 = vmatmul.mubr.f32.gmra.mrb[0].mxu0 %v3381
    %v3383 = vpop.f32.mrb[0].mxu0
    %v3384 = vadd.f32 0.0, %v3383
    %v3385 = vpop.f32.mrb[0].mxu0
    %3386 = vmatprep.mubr.f32.mxu0 0.0
    %v3387 = vand.u32 %v3242, 4294901760
    %v3388 = vsub.f32 %v3242, %v3387
    %v3389 = vand.u32 %v3388, 4294901760
    %v3390 = vsub.f32 %v3388, %v3389
    %v3391 = vand.u32 %v3390, 4294901760
    %3392 = vmatmul.mubr.f32.gmra.mrb[0].mxu0 %v3391
    %v3393 = vpop.f32.mrb[0].mxu0
    %v3394 = vadd.f32 0.0, %v3393
    %v3395 = vpop.f32.mrb[0].mxu0
    %3396 = vdwg.mxu0
    %3397 = vmatprep.subr.mxu0 0.0
    %v3398 = vand.u32 %v1674, 4294901760
    %v3399 = vsub.f32 %v1674, %v3398
    %v3400 = vand.u32 %v3399, 4294901760
    %v3401 = vsub.f32 %v3399, %v3400
    %v3402 = vand.u32 %v3401, 4294901760
    %3403 = vmatpush1.msra.mxu0 %v3402
    %3404 = vmatprep.subr.mxu0 0.0
    %v3405 = vand.u32 %v1675, 4294901760
    %v3406 = vsub.f32 %v1675, %v3405
    %v3407 = vand.u32 %v3406, 4294901760
    %v3408 = vsub.f32 %v3406, %v3407
    %v3409 = vand.u32 %v3408, 4294901760
    %3410 = vmatpush1.msra.mxu0 %v3409
    %3411 = vmatprep.subr.mxu0 0.0
    %v3412 = vand.u32 %v1676, 4294901760
    %v3413 = vsub.f32 %v1676, %v3412
    %v3414 = vand.u32 %v3413, 4294901760
    %v3415 = vsub.f32 %v3413, %v3414
    %v3416 = vand.u32 %v3415, 4294901760
    %3417 = vmatpush1.msra.mxu0 %v3416
    %3418 = vmatprep.subr.mxu0 0.0
    %v3419 = vand.u32 %v1677, 4294901760
    %v3420 = vsub.f32 %v1677, %v3419
    %v3421 = vand.u32 %v3420, 4294901760
    %v3422 = vsub.f32 %v3420, %v3421
    %v3423 = vand.u32 %v3422, 4294901760
    %3424 = vmatpush1.msra.mxu0 %v3423
    %3425 = vmatprep.subr.mxu0 0.0
    %v3426 = vand.u32 %v1678, 4294901760
    %v3427 = vsub.f32 %v1678, %v3426
    %v3428 = vand.u32 %v3427, 4294901760
    %v3429 = vsub.f32 %v3427, %v3428
    %v3430 = vand.u32 %v3429, 4294901760
    %3431 = vmatpush1.msra.mxu0 %v3430
    %3432 = vmatprep.subr.mxu0 0.0
    %v3433 = vand.u32 %v1679, 4294901760
    %v3434 = vsub.f32 %v1679, %v3433
    %v3435 = vand.u32 %v3434, 4294901760
    %v3436 = vsub.f32 %v3434, %v3435
    %v3437 = vand.u32 %v3436, 4294901760
    %3438 = vmatpush1.msra.mxu0 %v3437
    %3439 = vmatprep.subr.mxu0 0.0
    %v3440 = vand.u32 %v1680, 4294901760
    %v3441 = vsub.f32 %v1680, %v3440
    %v3442 = vand.u32 %v3441, 4294901760
    %v3443 = vsub.f32 %v3441, %v3442
    %v3444 = vand.u32 %v3443, 4294901760
    %3445 = vmatpush1.msra.mxu0 %v3444
    %3446 = vmatprep.subr.mxu0 0.0
    %v3447 = vand.u32 %v1681, 4294901760
    %v3448 = vsub.f32 %v1681, %v3447
    %v3449 = vand.u32 %v3448, 4294901760
    %v3450 = vsub.f32 %v3448, %v3449
    %v3451 = vand.u32 %v3450, 4294901760
    %3452 = vmatpush1.msra.mxu0 %v3451
    %3453 = vmatprep.subr.mxu0 0.0
    %3454 = vmatpush1.msra.mxu0 0.0
    %3455 = vmatprep.subr.mxu0 0.0
    %3456 = vmatpush1.msra.mxu0 0.0
    %3457 = vmatprep.subr.mxu0 0.0
    %3458 = vmatpush1.msra.mxu0 0.0
    %3459 = vmatprep.subr.mxu0 0.0
    %3460 = vmatpush1.msra.mxu0 0.0
    %3461 = vmatprep.subr.mxu0 0.0
    %3462 = vmatpush1.msra.mxu0 0.0
    %3463 = vmatprep.subr.mxu0 0.0
    %3464 = vmatpush1.msra.mxu0 0.0
    %3465 = vmatprep.subr.mxu0 0.0
    %3466 = vmatpush1.msra.mxu0 0.0
    %3467 = vmatprep.subr.mxu0 0.0
    %3468 = vmatpush1.msra.mxu0 0.0
    %3469 = vmatprep.subr.mxu0 0.0
    %3470 = vmatpush1.msra.mxu0 0.0
    %3471 = vmatprep.subr.mxu0 0.0
    %3472 = vmatpush1.msra.mxu0 0.0
    %3473 = vmatprep.subr.mxu0 0.0
    %3474 = vmatpush1.msra.mxu0 0.0
    %3475 = vmatprep.subr.mxu0 0.0
    %3476 = vmatpush1.msra.mxu0 0.0
    %3477 = vmatprep.subr.mxu0 0.0
    %3478 = vmatpush1.msra.mxu0 0.0
    %3479 = vmatprep.subr.mxu0 0.0
    %3480 = vmatpush1.msra.mxu0 0.0
    %3481 = vmatprep.subr.mxu0 0.0
    %3482 = vmatpush1.msra.mxu0 0.0
    %3483 = vmatprep.subr.mxu0 0.0
    %3484 = vmatpush1.msra.mxu0 0.0
    %3485 = vmatprep.subr.mxu0 0.0
    %3486 = vmatpush1.msra.mxu0 0.0
    %3487 = vmatprep.subr.mxu0 0.0
    %3488 = vmatpush1.msra.mxu0 0.0
    %3489 = vmatprep.subr.mxu0 0.0
    %3490 = vmatpush1.msra.mxu0 0.0
    %3491 = vmatprep.subr.mxu0 0.0
    %3492 = vmatpush1.msra.mxu0 0.0
    %3493 = vmatprep.subr.mxu0 0.0
    %3494 = vmatpush1.msra.mxu0 0.0
    %3495 = vmatprep.subr.mxu0 0.0
    %3496 = vmatpush1.msra.mxu0 0.0
    %3497 = vmatprep.subr.mxu0 0.0
    %3498 = vmatpush1.msra.mxu0 0.0
    %3499 = vmatprep.subr.mxu0 0.0
    %3500 = vmatpush1.msra.mxu0 0.0
    %3501 = vmatprep.mubr.f32.mxu0 0.0
    %v3502 = vand.u32 %v3221, 4294901760
    %3503 = vmatmul.mubr.f32.gmra.mrb[0].mxu0 %v3502
    %v3504 = vpop.f32.mrb[0].mxu0
    %v3505 = vadd.f32 %v3324, %v3504
    %v3506 = vpop.f32.mrb[0].mxu0
    %3507 = vmatprep.mubr.f32.mxu0 0.0
    %v3508 = vand.u32 %v3224, 4294901760
    %3509 = vmatmul.mubr.f32.gmra.mrb[0].mxu0 %v3508
    %v3510 = vpop.f32.mrb[0].mxu0
    %v3511 = vadd.f32 %v3334, %v3510
    %v3512 = vpop.f32.mrb[0].mxu0
    %3513 = vmatprep.mubr.f32.mxu0 0.0
    %v3514 = vand.u32 %v3227, 4294901760
    %3515 = vmatmul.mubr.f32.gmra.mrb[0].mxu0 %v3514
    %v3516 = vpop.f32.mrb[0].mxu0
    %v3517 = vadd.f32 %v3344, %v3516
    %v3518 = vpop.f32.mrb[0].mxu0
    %3519 = vmatprep.mubr.f32.mxu0 0.0
    %v3520 = vand.u32 %v3230, 4294901760
    %3521 = vmatmul.mubr.f32.gmra.mrb[0].mxu0 %v3520
    %v3522 = vpop.f32.mrb[0].mxu0
    %v3523 = vadd.f32 %v3354, %v3522
    %v3524 = vpop.f32.mrb[0].mxu0
    %3525 = vmatprep.mubr.f32.mxu0 0.0
    %v3526 = vand.u32 %v3233, 4294901760
    %3527 = vmatmul.mubr.f32.gmra.mrb[0].mxu0 %v3526
    %v3528 = vpop.f32.mrb[0].mxu0
    %v3529 = vadd.f32 %v3364, %v3528
    %v3530 = vpop.f32.mrb[0].mxu0
    %3531 = vmatprep.mubr.f32.mxu0 0.0
    %v3532 = vand.u32 %v3236, 4294901760
    %3533 = vmatmul.mubr.f32.gmra.mrb[0].mxu0 %v3532
    %v3534 = vpop.f32.mrb[0].mxu0
    %v3535 = vadd.f32 %v3374, %v3534
    %v3536 = vpop.f32.mrb[0].mxu0
    %3537 = vmatprep.mubr.f32.mxu0 0.0
    %v3538 = vand.u32 %v3239, 4294901760
    %3539 = vmatmul.mubr.f32.gmra.mrb[0].mxu0 %v3538
    %v3540 = vpop.f32.mrb[0].mxu0
    %v3541 = vadd.f32 %v3384, %v3540
    %v3542 = vpop.f32.mrb[0].mxu0
    %3543 = vmatprep.mubr.f32.mxu0 0.0
    %v3544 = vand.u32 %v3242, 4294901760
    %3545 = vmatmul.mubr.f32.gmra.mrb[0].mxu0 %v3544
    %v3546 = vpop.f32.mrb[0].mxu0
    %v3547 = vadd.f32 %v3394, %v3546
    %v3548 = vpop.f32.mrb[0].mxu0
    %3549 = vdwg.mxu0
    %3550 = vmatprep.subr.mxu0 0.0
    %v3551 = vand.u32 %v1674, 4294901760
    %v3552 = vsub.f32 %v1674, %v3551
    %3553 = vmatpush1.msra.mxu0 %v3552
    %3554 = vmatprep.subr.mxu0 0.0
    %v3555 = vand.u32 %v1675, 4294901760
    %v3556 = vsub.f32 %v1675, %v3555
    %3557 = vmatpush1.msra.mxu0 %v3556
    %3558 = vmatprep.subr.mxu0 0.0
    %v3559 = vand.u32 %v1676, 4294901760
    %v3560 = vsub.f32 %v1676, %v3559
    %3561 = vmatpush1.msra.mxu0 %v3560
    %3562 = vmatprep.subr.mxu0 0.0
    %v3563 = vand.u32 %v1677, 4294901760
    %v3564 = vsub.f32 %v1677, %v3563
    %3565 = vmatpush1.msra.mxu0 %v3564
    %3566 = vmatprep.subr.mxu0 0.0
    %v3567 = vand.u32 %v1678, 4294901760
    %v3568 = vsub.f32 %v1678, %v3567
    %3569 = vmatpush1.msra.mxu0 %v3568
    %3570 = vmatprep.subr.mxu0 0.0
    %v3571 = vand.u32 %v1679, 4294901760
    %v3572 = vsub.f32 %v1679, %v3571
    %3573 = vmatpush1.msra.mxu0 %v3572
    %3574 = vmatprep.subr.mxu0 0.0
    %v3575 = vand.u32 %v1680, 4294901760
    %v3576 = vsub.f32 %v1680, %v3575
    %3577 = vmatpush1.msra.mxu0 %v3576
    %3578 = vmatprep.subr.mxu0 0.0
    %v3579 = vand.u32 %v1681, 4294901760
    %v3580 = vsub.f32 %v1681, %v3579
    %3581 = vmatpush1.msra.mxu0 %v3580
    %3582 = vmatprep.subr.mxu0 0.0
    %3583 = vmatpush1.msra.mxu0 0.0
    %3584 = vmatprep.subr.mxu0 0.0
    %3585 = vmatpush1.msra.mxu0 0.0
    %3586 = vmatprep.subr.mxu0 0.0
    %3587 = vmatpush1.msra.mxu0 0.0
    %3588 = vmatprep.subr.mxu0 0.0
    %3589 = vmatpush1.msra.mxu0 0.0
    %3590 = vmatprep.subr.mxu0 0.0
    %3591 = vmatpush1.msra.mxu0 0.0
    %3592 = vmatprep.subr.mxu0 0.0
    %3593 = vmatpush1.msra.mxu0 0.0
    %3594 = vmatprep.subr.mxu0 0.0
    %3595 = vmatpush1.msra.mxu0 0.0
    %3596 = vmatprep.subr.mxu0 0.0
    %3597 = vmatpush1.msra.mxu0 0.0
    %3598 = vmatprep.subr.mxu0 0.0
    %3599 = vmatpush1.msra.mxu0 0.0
    %3600 = vmatprep.subr.mxu0 0.0
    %3601 = vmatpush1.msra.mxu0 0.0
    %3602 = vmatprep.subr.mxu0 0.0
    %3603 = vmatpush1.msra.mxu0 0.0
    %3604 = vmatprep.subr.mxu0 0.0
    %3605 = vmatpush1.msra.mxu0 0.0
    %3606 = vmatprep.subr.mxu0 0.0
    %3607 = vmatpush1.msra.mxu0 0.0
    %3608 = vmatprep.subr.mxu0 0.0
    %3609 = vmatpush1.msra.mxu0 0.0
    %3610 = vmatprep.subr.mxu0 0.0
    %3611 = vmatpush1.msra.mxu0 0.0
    %3612 = vmatprep.subr.mxu0 0.0
    %3613 = vmatpush1.msra.mxu0 0.0
    %3614 = vmatprep.subr.mxu0 0.0
    %3615 = vmatpush1.msra.mxu0 0.0
    %3616 = vmatprep.subr.mxu0 0.0
    %3617 = vmatpush1.msra.mxu0 0.0
    %3618 = vmatprep.subr.mxu0 0.0
    %3619 = vmatpush1.msra.mxu0 0.0
    %3620 = vmatprep.subr.mxu0 0.0
    %3621 = vmatpush1.msra.mxu0 0.0
    %3622 = vmatprep.subr.mxu0 0.0
    %3623 = vmatpush1.msra.mxu0 0.0
    %3624 = vmatprep.subr.mxu0 0.0
    %3625 = vmatpush1.msra.mxu0 0.0
    %3626 = vmatprep.subr.mxu0 0.0
    %3627 = vmatpush1.msra.mxu0 0.0
    %3628 = vmatprep.subr.mxu0 0.0
    %3629 = vmatpush1.msra.mxu0 0.0
    %3630 = vmatprep.mubr.f32.mxu0 0.0
    %v3631 = vand.u32 %v3221, 4294901760
    %v3632 = vsub.f32 %v3221, %v3631
    %3633 = vmatmul.mubr.f32.gmra.mrb[0].mxu0 %v3632
    %v3634 = vpop.f32.mrb[0].mxu0
    %v3635 = vadd.f32 %v3505, %v3634
    %v3636 = vpop.f32.mrb[0].mxu0
    %3637 = vmatprep.mubr.f32.mxu0 0.0
    %v3638 = vand.u32 %v3224, 4294901760
    %v3639 = vsub.f32 %v3224, %v3638
    %3640 = vmatmul.mubr.f32.gmra.mrb[0].mxu0 %v3639
    %v3641 = vpop.f32.mrb[0].mxu0
    %v3642 = vadd.f32 %v3511, %v3641
    %v3643 = vpop.f32.mrb[0].mxu0
    %3644 = vmatprep.mubr.f32.mxu0 0.0
    %v3645 = vand.u32 %v3227, 4294901760
    %v3646 = vsub.f32 %v3227, %v3645
    %3647 = vmatmul.mubr.f32.gmra.mrb[0].mxu0 %v3646
    %v3648 = vpop.f32.mrb[0].mxu0
    %v3649 = vadd.f32 %v3517, %v3648
    %v3650 = vpop.f32.mrb[0].mxu0
    %3651 = vmatprep.mubr.f32.mxu0 0.0
    %v3652 = vand.u32 %v3230, 4294901760
    %v3653 = vsub.f32 %v3230, %v3652
    %3654 = vmatmul.mubr.f32.gmra.mrb[0].mxu0 %v3653
    %v3655 = vpop.f32.mrb[0].mxu0
    %v3656 = vadd.f32 %v3523, %v3655
    %v3657 = vpop.f32.mrb[0].mxu0
    %3658 = vmatprep.mubr.f32.mxu0 0.0
    %v3659 = vand.u32 %v3233, 4294901760
    %v3660 = vsub.f32 %v3233, %v3659
    %3661 = vmatmul.mubr.f32.gmra.mrb[0].mxu0 %v3660
    %v3662 = vpop.f32.mrb[0].mxu0
    %v3663 = vadd.f32 %v3529, %v3662
    %v3664 = vpop.f32.mrb[0].mxu0
    %3665 = vmatprep.mubr.f32.mxu0 0.0
    %v3666 = vand.u32 %v3236, 4294901760
    %v3667 = vsub.f32 %v3236, %v3666
    %3668 = vmatmul.mubr.f32.gmra.mrb[0].mxu0 %v3667
    %v3669 = vpop.f32.mrb[0].mxu0
    %v3670 = vadd.f32 %v3535, %v3669
    %v3671 = vpop.f32.mrb[0].mxu0
    %3672 = vmatprep.mubr.f32.mxu0 0.0
    %v3673 = vand.u32 %v3239, 4294901760
    %v3674 = vsub.f32 %v3239, %v3673
    %3675 = vmatmul.mubr.f32.gmra.mrb[0].mxu0 %v3674
    %v3676 = vpop.f32.mrb[0].mxu0
    %v3677 = vadd.f32 %v3541, %v3676
    %v3678 = vpop.f32.mrb[0].mxu0
    %3679 = vmatprep.mubr.f32.mxu0 0.0
    %v3680 = vand.u32 %v3242, 4294901760
    %v3681 = vsub.f32 %v3242, %v3680
    %3682 = vmatmul.mubr.f32.gmra.mrb[0].mxu0 %v3681
    %v3683 = vpop.f32.mrb[0].mxu0
    %v3684 = vadd.f32 %v3547, %v3683
    %v3685 = vpop.f32.mrb[0].mxu0
    %3686 = vdwg.mxu0
    %3687 = vmatprep.subr.mxu0 0.0
    %v3688 = vand.u32 %v1674, 4294901760
    %3689 = vmatpush1.msra.mxu0 %v3688
    %3690 = vmatprep.subr.mxu0 0.0
    %v3691 = vand.u32 %v1675, 4294901760
    %3692 = vmatpush1.msra.mxu0 %v3691
    %3693 = vmatprep.subr.mxu0 0.0
    %v3694 = vand.u32 %v1676, 4294901760
    %3695 = vmatpush1.msra.mxu0 %v3694
    %3696 = vmatprep.subr.mxu0 0.0
    %v3697 = vand.u32 %v1677, 4294901760
    %3698 = vmatpush1.msra.mxu0 %v3697
    %3699 = vmatprep.subr.mxu0 0.0
    %v3700 = vand.u32 %v1678, 4294901760
    %3701 = vmatpush1.msra.mxu0 %v3700
    %3702 = vmatprep.subr.mxu0 0.0
    %v3703 = vand.u32 %v1679, 4294901760
    %3704 = vmatpush1.msra.mxu0 %v3703
    %3705 = vmatprep.subr.mxu0 0.0
    %v3706 = vand.u32 %v1680, 4294901760
    %3707 = vmatpush1.msra.mxu0 %v3706
    %3708 = vmatprep.subr.mxu0 0.0
    %v3709 = vand.u32 %v1681, 4294901760
    %3710 = vmatpush1.msra.mxu0 %v3709
    %3711 = vmatprep.subr.mxu0 0.0
    %3712 = vmatpush1.msra.mxu0 0.0
    %3713 = vmatprep.subr.mxu0 0.0
    %3714 = vmatpush1.msra.mxu0 0.0
    %3715 = vmatprep.subr.mxu0 0.0
    %3716 = vmatpush1.msra.mxu0 0.0
    %3717 = vmatprep.subr.mxu0 0.0
    %3718 = vmatpush1.msra.mxu0 0.0
    %3719 = vmatprep.subr.mxu0 0.0
    %3720 = vmatpush1.msra.mxu0 0.0
    %3721 = vmatprep.subr.mxu0 0.0
    %3722 = vmatpush1.msra.mxu0 0.0
    %3723 = vmatprep.subr.mxu0 0.0
    %3724 = vmatpush1.msra.mxu0 0.0
    %3725 = vmatprep.subr.mxu0 0.0
    %3726 = vmatpush1.msra.mxu0 0.0
    %3727 = vmatprep.subr.mxu0 0.0
    %3728 = vmatpush1.msra.mxu0 0.0
    %3729 = vmatprep.subr.mxu0 0.0
    %3730 = vmatpush1.msra.mxu0 0.0
    %3731 = vmatprep.subr.mxu0 0.0
    %3732 = vmatpush1.msra.mxu0 0.0
    %3733 = vmatprep.subr.mxu0 0.0
    %3734 = vmatpush1.msra.mxu0 0.0
    %3735 = vmatprep.subr.mxu0 0.0
    %3736 = vmatpush1.msra.mxu0 0.0
    %3737 = vmatprep.subr.mxu0 0.0
    %3738 = vmatpush1.msra.mxu0 0.0
    %3739 = vmatprep.subr.mxu0 0.0
    %3740 = vmatpush1.msra.mxu0 0.0
    %3741 = vmatprep.subr.mxu0 0.0
    %3742 = vmatpush1.msra.mxu0 0.0
    %3743 = vmatprep.subr.mxu0 0.0
    %3744 = vmatpush1.msra.mxu0 0.0
    %3745 = vmatprep.subr.mxu0 0.0
    %3746 = vmatpush1.msra.mxu0 0.0
    %3747 = vmatprep.subr.mxu0 0.0
    %3748 = vmatpush1.msra.mxu0 0.0
    %3749 = vmatprep.subr.mxu0 0.0
    %3750 = vmatpush1.msra.mxu0 0.0
    %3751 = vmatprep.subr.mxu0 0.0
    %3752 = vmatpush1.msra.mxu0 0.0
    %3753 = vmatprep.subr.mxu0 0.0
    %3754 = vmatpush1.msra.mxu0 0.0
    %3755 = vmatprep.subr.mxu0 0.0
    %3756 = vmatpush1.msra.mxu0 0.0
    %3757 = vmatprep.subr.mxu0 0.0
    %3758 = vmatpush1.msra.mxu0 0.0
    %3759 = vmatprep.mubr.f32.mxu0 0.0
    %v3760 = vand.u32 %v3221, 4294901760
    %v3761 = vsub.f32 %v3221, %v3760
    %v3762 = vand.u32 %v3761, 4294901760
    %3763 = vmatmul.mubr.f32.gmra.mrb[0].mxu0 %v3762
    %v3764 = vpop.f32.mrb[0].mxu0
    %v3765 = vadd.f32 %v3635, %v3764
    %v3766 = vpop.f32.mrb[0].mxu0
    %3767 = vmatprep.mubr.f32.mxu0 0.0
    %v3768 = vand.u32 %v3224, 4294901760
    %v3769 = vsub.f32 %v3224, %v3768
    %v3770 = vand.u32 %v3769, 4294901760
    %3771 = vmatmul.mubr.f32.gmra.mrb[0].mxu0 %v3770
    %v3772 = vpop.f32.mrb[0].mxu0
    %v3773 = vadd.f32 %v3642, %v3772
    %v3774 = vpop.f32.mrb[0].mxu0
    %3775 = vmatprep.mubr.f32.mxu0 0.0
    %v3776 = vand.u32 %v3227, 4294901760
    %v3777 = vsub.f32 %v3227, %v3776
    %v3778 = vand.u32 %v3777, 4294901760
    %3779 = vmatmul.mubr.f32.gmra.mrb[0].mxu0 %v3778
    %v3780 = vpop.f32.mrb[0].mxu0
    %v3781 = vadd.f32 %v3649, %v3780
    %v3782 = vpop.f32.mrb[0].mxu0
    %3783 = vmatprep.mubr.f32.mxu0 0.0
    %v3784 = vand.u32 %v3230, 4294901760
    %v3785 = vsub.f32 %v3230, %v3784
    %v3786 = vand.u32 %v3785, 4294901760
    %3787 = vmatmul.mubr.f32.gmra.mrb[0].mxu0 %v3786
    %v3788 = vpop.f32.mrb[0].mxu0
    %v3789 = vadd.f32 %v3656, %v3788
    %v3790 = vpop.f32.mrb[0].mxu0
    %3791 = vmatprep.mubr.f32.mxu0 0.0
    %v3792 = vand.u32 %v3233, 4294901760
    %v3793 = vsub.f32 %v3233, %v3792
    %v3794 = vand.u32 %v3793, 4294901760
    %3795 = vmatmul.mubr.f32.gmra.mrb[0].mxu0 %v3794
    %v3796 = vpop.f32.mrb[0].mxu0
    %v3797 = vadd.f32 %v3663, %v3796
    %v3798 = vpop.f32.mrb[0].mxu0
    %3799 = vmatprep.mubr.f32.mxu0 0.0
    %v3800 = vand.u32 %v3236, 4294901760
    %v3801 = vsub.f32 %v3236, %v3800
    %v3802 = vand.u32 %v3801, 4294901760
    %3803 = vmatmul.mubr.f32.gmra.mrb[0].mxu0 %v3802
    %v3804 = vpop.f32.mrb[0].mxu0
    %v3805 = vadd.f32 %v3670, %v3804
    %v3806 = vpop.f32.mrb[0].mxu0
    %3807 = vmatprep.mubr.f32.mxu0 0.0
    %v3808 = vand.u32 %v3239, 4294901760
    %v3809 = vsub.f32 %v3239, %v3808
    %v3810 = vand.u32 %v3809, 4294901760
    %3811 = vmatmul.mubr.f32.gmra.mrb[0].mxu0 %v3810
    %v3812 = vpop.f32.mrb[0].mxu0
    %v3813 = vadd.f32 %v3677, %v3812
    %v3814 = vpop.f32.mrb[0].mxu0
    %3815 = vmatprep.mubr.f32.mxu0 0.0
    %v3816 = vand.u32 %v3242, 4294901760
    %v3817 = vsub.f32 %v3242, %v3816
    %v3818 = vand.u32 %v3817, 4294901760
    %3819 = vmatmul.mubr.f32.gmra.mrb[0].mxu0 %v3818
    %v3820 = vpop.f32.mrb[0].mxu0
    %v3821 = vadd.f32 %v3684, %v3820
    %v3822 = vpop.f32.mrb[0].mxu0
    %3823 = vdwg.mxu0
    %3824 = vmatprep.subr.mxu0 0.0
    %v3825 = vand.u32 %v1674, 4294901760
    %v3826 = vsub.f32 %v1674, %v3825
    %v3827 = vand.u32 %v3826, 4294901760
    %3828 = vmatpush1.msra.mxu0 %v3827
    %3829 = vmatprep.subr.mxu0 0.0
    %v3830 = vand.u32 %v1675, 4294901760
    %v3831 = vsub.f32 %v1675, %v3830
    %v3832 = vand.u32 %v3831, 4294901760
    %3833 = vmatpush1.msra.mxu0 %v3832
    %3834 = vmatprep.subr.mxu0 0.0
    %v3835 = vand.u32 %v1676, 4294901760
    %v3836 = vsub.f32 %v1676, %v3835
    %v3837 = vand.u32 %v3836, 4294901760
    %3838 = vmatpush1.msra.mxu0 %v3837
    %3839 = vmatprep.subr.mxu0 0.0
    %v3840 = vand.u32 %v1677, 4294901760
    %v3841 = vsub.f32 %v1677, %v3840
    %v3842 = vand.u32 %v3841, 4294901760
    %3843 = vmatpush1.msra.mxu0 %v3842
    %3844 = vmatprep.subr.mxu0 0.0
    %v3845 = vand.u32 %v1678, 4294901760
    %v3846 = vsub.f32 %v1678, %v3845
    %v3847 = vand.u32 %v3846, 4294901760
    %3848 = vmatpush1.msra.mxu0 %v3847
    %3849 = vmatprep.subr.mxu0 0.0
    %v3850 = vand.u32 %v1679, 4294901760
    %v3851 = vsub.f32 %v1679, %v3850
    %v3852 = vand.u32 %v3851, 4294901760
    %3853 = vmatpush1.msra.mxu0 %v3852
    %3854 = vmatprep.subr.mxu0 0.0
    %v3855 = vand.u32 %v1680, 4294901760
    %v3856 = vsub.f32 %v1680, %v3855
    %v3857 = vand.u32 %v3856, 4294901760
    %3858 = vmatpush1.msra.mxu0 %v3857
    %3859 = vmatprep.subr.mxu0 0.0
    %v3860 = vand.u32 %v1681, 4294901760
    %v3861 = vsub.f32 %v1681, %v3860
    %v3862 = vand.u32 %v3861, 4294901760
    %3863 = vmatpush1.msra.mxu0 %v3862
    %3864 = vmatprep.subr.mxu0 0.0
    %3865 = vmatpush1.msra.mxu0 0.0
    %3866 = vmatprep.subr.mxu0 0.0
    %3867 = vmatpush1.msra.mxu0 0.0
    %3868 = vmatprep.subr.mxu0 0.0
    %3869 = vmatpush1.msra.mxu0 0.0
    %3870 = vmatprep.subr.mxu0 0.0
    %3871 = vmatpush1.msra.mxu0 0.0
    %3872 = vmatprep.subr.mxu0 0.0
    %3873 = vmatpush1.msra.mxu0 0.0
    %3874 = vmatprep.subr.mxu0 0.0
    %3875 = vmatpush1.msra.mxu0 0.0
    %3876 = vmatprep.subr.mxu0 0.0
    %3877 = vmatpush1.msra.mxu0 0.0
    %3878 = vmatprep.subr.mxu0 0.0
    %3879 = vmatpush1.msra.mxu0 0.0
    %3880 = vmatprep.subr.mxu0 0.0
    %3881 = vmatpush1.msra.mxu0 0.0
    %3882 = vmatprep.subr.mxu0 0.0
    %3883 = vmatpush1.msra.mxu0 0.0
    %3884 = vmatprep.subr.mxu0 0.0
    %3885 = vmatpush1.msra.mxu0 0.0
    %3886 = vmatprep.subr.mxu0 0.0
    %3887 = vmatpush1.msra.mxu0 0.0
    %3888 = vmatprep.subr.mxu0 0.0
    %3889 = vmatpush1.msra.mxu0 0.0
    %3890 = vmatprep.subr.mxu0 0.0
    %3891 = vmatpush1.msra.mxu0 0.0
    %3892 = vmatprep.subr.mxu0 0.0
    %3893 = vmatpush1.msra.mxu0 0.0
    %3894 = vmatprep.subr.mxu0 0.0
    %3895 = vmatpush1.msra.mxu0 0.0
    %3896 = vmatprep.subr.mxu0 0.0
    %3897 = vmatpush1.msra.mxu0 0.0
    %3898 = vmatprep.subr.mxu0 0.0
    %3899 = vmatpush1.msra.mxu0 0.0
    %3900 = vmatprep.subr.mxu0 0.0
    %3901 = vmatpush1.msra.mxu0 0.0
    %3902 = vmatprep.subr.mxu0 0.0
    %3903 = vmatpush1.msra.mxu0 0.0
    %3904 = vmatprep.subr.mxu0 0.0
    %3905 = vmatpush1.msra.mxu0 0.0
    %3906 = vmatprep.subr.mxu0 0.0
    %3907 = vmatpush1.msra.mxu0 0.0
    %3908 = vmatprep.subr.mxu0 0.0
    %3909 = vmatpush1.msra.mxu0 0.0
    %3910 = vmatprep.subr.mxu0 0.0
    %3911 = vmatpush1.msra.mxu0 0.0
    %3912 = vmatprep.mubr.f32.mxu0 0.0
    %v3913 = vand.u32 %v3221, 4294901760
    %3914 = vmatmul.mubr.f32.gmra.mrb[0].mxu0 %v3913
    %v3915 = vpop.f32.mrb[0].mxu0
    %v3916 = vadd.f32 %v3765, %v3915
    %v3917 = vpop.f32.mrb[0].mxu0
    %3918 = vmatprep.mubr.f32.mxu0 0.0
    %v3919 = vand.u32 %v3224, 4294901760
    %3920 = vmatmul.mubr.f32.gmra.mrb[0].mxu0 %v3919
    %v3921 = vpop.f32.mrb[0].mxu0
    %v3922 = vadd.f32 %v3773, %v3921
    %v3923 = vpop.f32.mrb[0].mxu0
    %3924 = vmatprep.mubr.f32.mxu0 0.0
    %v3925 = vand.u32 %v3227, 4294901760
    %3926 = vmatmul.mubr.f32.gmra.mrb[0].mxu0 %v3925
    %v3927 = vpop.f32.mrb[0].mxu0
    %v3928 = vadd.f32 %v3781, %v3927
    %v3929 = vpop.f32.mrb[0].mxu0
    %3930 = vmatprep.mubr.f32.mxu0 0.0
    %v3931 = vand.u32 %v3230, 4294901760
    %3932 = vmatmul.mubr.f32.gmra.mrb[0].mxu0 %v3931
    %v3933 = vpop.f32.mrb[0].mxu0
    %v3934 = vadd.f32 %v3789, %v3933
    %v3935 = vpop.f32.mrb[0].mxu0
    %3936 = vmatprep.mubr.f32.mxu0 0.0
    %v3937 = vand.u32 %v3233, 4294901760
    %3938 = vmatmul.mubr.f32.gmra.mrb[0].mxu0 %v3937
    %v3939 = vpop.f32.mrb[0].mxu0
    %v3940 = vadd.f32 %v3797, %v3939
    %v3941 = vpop.f32.mrb[0].mxu0
    %3942 = vmatprep.mubr.f32.mxu0 0.0
    %v3943 = vand.u32 %v3236, 4294901760
    %3944 = vmatmul.mubr.f32.gmra.mrb[0].mxu0 %v3943
    %v3945 = vpop.f32.mrb[0].mxu0
    %v3946 = vadd.f32 %v3805, %v3945
    %v3947 = vpop.f32.mrb[0].mxu0
    %3948 = vmatprep.mubr.f32.mxu0 0.0
    %v3949 = vand.u32 %v3239, 4294901760
    %3950 = vmatmul.mubr.f32.gmra.mrb[0].mxu0 %v3949
    %v3951 = vpop.f32.mrb[0].mxu0
    %v3952 = vadd.f32 %v3813, %v3951
    %v3953 = vpop.f32.mrb[0].mxu0
    %3954 = vmatprep.mubr.f32.mxu0 0.0
    %v3955 = vand.u32 %v3242, 4294901760
    %3956 = vmatmul.mubr.f32.gmra.mrb[0].mxu0 %v3955
    %v3957 = vpop.f32.mrb[0].mxu0
    %v3958 = vadd.f32 %v3821, %v3957
    %v3959 = vpop.f32.mrb[0].mxu0
    %3960 = vdwg.mxu0
    %3961 = vmatprep.subr.mxu0 0.0
    %v3962 = vand.u32 %v1674, 4294901760
    %3963 = vmatpush1.msra.mxu0 %v3962
    %3964 = vmatprep.subr.mxu0 0.0
    %v3965 = vand.u32 %v1675, 4294901760
    %3966 = vmatpush1.msra.mxu0 %v3965
    %3967 = vmatprep.subr.mxu0 0.0
    %v3968 = vand.u32 %v1676, 4294901760
    %3969 = vmatpush1.msra.mxu0 %v3968
    %3970 = vmatprep.subr.mxu0 0.0
    %v3971 = vand.u32 %v1677, 4294901760
    %3972 = vmatpush1.msra.mxu0 %v3971
    %3973 = vmatprep.subr.mxu0 0.0
    %v3974 = vand.u32 %v1678, 4294901760
    %3975 = vmatpush1.msra.mxu0 %v3974
    %3976 = vmatprep.subr.mxu0 0.0
    %v3977 = vand.u32 %v1679, 4294901760
    %3978 = vmatpush1.msra.mxu0 %v3977
    %3979 = vmatprep.subr.mxu0 0.0
    %v3980 = vand.u32 %v1680, 4294901760
    %3981 = vmatpush1.msra.mxu0 %v3980
    %3982 = vmatprep.subr.mxu0 0.0
    %v3983 = vand.u32 %v1681, 4294901760
    %3984 = vmatpush1.msra.mxu0 %v3983
    %3985 = vmatprep.subr.mxu0 0.0
    %3986 = vmatpush1.msra.mxu0 0.0
    %3987 = vmatprep.subr.mxu0 0.0
    %3988 = vmatpush1.msra.mxu0 0.0
    %3989 = vmatprep.subr.mxu0 0.0
    %3990 = vmatpush1.msra.mxu0 0.0
    %3991 = vmatprep.subr.mxu0 0.0
    %3992 = vmatpush1.msra.mxu0 0.0
    %3993 = vmatprep.subr.mxu0 0.0
    %3994 = vmatpush1.msra.mxu0 0.0
    %3995 = vmatprep.subr.mxu0 0.0
    %3996 = vmatpush1.msra.mxu0 0.0
    %3997 = vmatprep.subr.mxu0 0.0
    %3998 = vmatpush1.msra.mxu0 0.0
    %3999 = vmatprep.subr.mxu0 0.0
    %4000 = vmatpush1.msra.mxu0 0.0
    %4001 = vmatprep.subr.mxu0 0.0
    %4002 = vmatpush1.msra.mxu0 0.0
    %4003 = vmatprep.subr.mxu0 0.0
    %4004 = vmatpush1.msra.mxu0 0.0
    %4005 = vmatprep.subr.mxu0 0.0
    %4006 = vmatpush1.msra.mxu0 0.0
    %4007 = vmatprep.subr.mxu0 0.0
    %4008 = vmatpush1.msra.mxu0 0.0
    %4009 = vmatprep.subr.mxu0 0.0
    %4010 = vmatpush1.msra.mxu0 0.0
    %4011 = vmatprep.subr.mxu0 0.0
    %4012 = vmatpush1.msra.mxu0 0.0
    %4013 = vmatprep.subr.mxu0 0.0
    %4014 = vmatpush1.msra.mxu0 0.0
    %4015 = vmatprep.subr.mxu0 0.0
    %4016 = vmatpush1.msra.mxu0 0.0
    %4017 = vmatprep.subr.mxu0 0.0
    %4018 = vmatpush1.msra.mxu0 0.0
    %4019 = vmatprep.subr.mxu0 0.0
    %4020 = vmatpush1.msra.mxu0 0.0
    %4021 = vmatprep.subr.mxu0 0.0
    %4022 = vmatpush1.msra.mxu0 0.0
    %4023 = vmatprep.subr.mxu0 0.0
    %4024 = vmatpush1.msra.mxu0 0.0
    %4025 = vmatprep.subr.mxu0 0.0
    %4026 = vmatpush1.msra.mxu0 0.0
    %4027 = vmatprep.subr.mxu0 0.0
    %4028 = vmatpush1.msra.mxu0 0.0
    %4029 = vmatprep.subr.mxu0 0.0
    %4030 = vmatpush1.msra.mxu0 0.0
    %4031 = vmatprep.subr.mxu0 0.0
    %4032 = vmatpush1.msra.mxu0 0.0
    %4033 = vmatprep.mubr.f32.mxu0 0.0
    %v4034 = vand.u32 %v3221, 4294901760
    %4035 = vmatmul.mubr.f32.gmra.mrb[0].mxu0 %v4034
    %v4036 = vpop.f32.mrb[0].mxu0
    %v4037 = vadd.f32 %v3916, %v4036
    %v4038 = vpop.f32.mrb[0].mxu0
    %4039 = vmatprep.mubr.f32.mxu0 0.0
    %v4040 = vand.u32 %v3224, 4294901760
    %4041 = vmatmul.mubr.f32.gmra.mrb[0].mxu0 %v4040
    %v4042 = vpop.f32.mrb[0].mxu0
    %v4043 = vadd.f32 %v3922, %v4042
    %v4044 = vpop.f32.mrb[0].mxu0
    %4045 = vmatprep.mubr.f32.mxu0 0.0
    %v4046 = vand.u32 %v3227, 4294901760
    %4047 = vmatmul.mubr.f32.gmra.mrb[0].mxu0 %v4046
    %v4048 = vpop.f32.mrb[0].mxu0
    %v4049 = vadd.f32 %v3928, %v4048
    %v4050 = vpop.f32.mrb[0].mxu0
    %4051 = vmatprep.mubr.f32.mxu0 0.0
    %v4052 = vand.u32 %v3230, 4294901760
    %4053 = vmatmul.mubr.f32.gmra.mrb[0].mxu0 %v4052
    %v4054 = vpop.f32.mrb[0].mxu0
    %v4055 = vadd.f32 %v3934, %v4054
    %v4056 = vpop.f32.mrb[0].mxu0
    %4057 = vmatprep.mubr.f32.mxu0 0.0
    %v4058 = vand.u32 %v3233, 4294901760
    %4059 = vmatmul.mubr.f32.gmra.mrb[0].mxu0 %v4058
    %v4060 = vpop.f32.mrb[0].mxu0
    %v4061 = vadd.f32 %v3940, %v4060
    %v4062 = vpop.f32.mrb[0].mxu0
    %4063 = vmatprep.mubr.f32.mxu0 0.0
    %v4064 = vand.u32 %v3236, 4294901760
    %4065 = vmatmul.mubr.f32.gmra.mrb[0].mxu0 %v4064
    %v4066 = vpop.f32.mrb[0].mxu0
    %v4067 = vadd.f32 %v3946, %v4066
    %v4068 = vpop.f32.mrb[0].mxu0
    %4069 = vmatprep.mubr.f32.mxu0 0.0
    %v4070 = vand.u32 %v3239, 4294901760
    %4071 = vmatmul.mubr.f32.gmra.mrb[0].mxu0 %v4070
    %v4072 = vpop.f32.mrb[0].mxu0
    %v4073 = vadd.f32 %v3952, %v4072
    %v4074 = vpop.f32.mrb[0].mxu0
    %4075 = vmatprep.mubr.f32.mxu0 0.0
    %v4076 = vand.u32 %v3242, 4294901760
    %4077 = vmatmul.mubr.f32.gmra.mrb[0].mxu0 %v4076
    %v4078 = vpop.f32.mrb[0].mxu0
    %v4079 = vadd.f32 %v3958, %v4078
    %v4080 = vpop.f32.mrb[0].mxu0
    %4081 = vdwg.mxu0
    %v4083 = vsel %vm3219, %v3211, 0
    %v4086 = vsel %vm3219, %v3212, 0
    %v4089 = vsel %vm3219, %v3213, 0
    %v4092 = vsel %vm3219, %v3214, 0
    %v4095 = vsel %vm3219, %v3215, 0
    %v4098 = vsel %vm3219, %v3216, 0
    %v4101 = vsel %vm3219, %v3217, 0
    %v4104 = vsel %vm3219, %v3218, 0
    %4106 = vmatprep.subr.mxu0 0.0
    %v4107 = vand.u32 %v3157, 4294901760
    %4108 = vmatpush1.msra.mxu0 %v4107
    %4109 = vmatprep.subr.mxu0 0.0
    %v4110 = vand.u32 %v3163, 4294901760
    %4111 = vmatpush1.msra.mxu0 %v4110
    %4112 = vmatprep.subr.mxu0 0.0
    %v4113 = vand.u32 %v3169, 4294901760
    %4114 = vmatpush1.msra.mxu0 %v4113
    %4115 = vmatprep.subr.mxu0 0.0
    %v4116 = vand.u32 %v3175, 4294901760
    %4117 = vmatpush1.msra.mxu0 %v4116
    %4118 = vmatprep.subr.mxu0 0.0
    %v4119 = vand.u32 %v3181, 4294901760
    %4120 = vmatpush1.msra.mxu0 %v4119
    %4121 = vmatprep.subr.mxu0 0.0
    %v4122 = vand.u32 %v3187, 4294901760
    %4123 = vmatpush1.msra.mxu0 %v4122
    %4124 = vmatprep.subr.mxu0 0.0
    %v4125 = vand.u32 %v3193, 4294901760
    %4126 = vmatpush1.msra.mxu0 %v4125
    %4127 = vmatprep.subr.mxu0 0.0
    %v4128 = vand.u32 %v3199, 4294901760
    %4129 = vmatpush1.msra.mxu0 %v4128
    %4130 = vmatprep.subr.mxu0 0.0
    %4131 = vmatpush1.msra.mxu0 0.0
    %4132 = vmatprep.subr.mxu0 0.0
    %4133 = vmatpush1.msra.mxu0 0.0
    %4134 = vmatprep.subr.mxu0 0.0
    %4135 = vmatpush1.msra.mxu0 0.0
    %4136 = vmatprep.subr.mxu0 0.0
    %4137 = vmatpush1.msra.mxu0 0.0
    %4138 = vmatprep.subr.mxu0 0.0
    %4139 = vmatpush1.msra.mxu0 0.0
    %4140 = vmatprep.subr.mxu0 0.0
    %4141 = vmatpush1.msra.mxu0 0.0
    %4142 = vmatprep.subr.mxu0 0.0
    %4143 = vmatpush1.msra.mxu0 0.0
    %4144 = vmatprep.subr.mxu0 0.0
    %4145 = vmatpush1.msra.mxu0 0.0
    %4146 = vmatprep.subr.mxu0 0.0
    %4147 = vmatpush1.msra.mxu0 0.0
    %4148 = vmatprep.subr.mxu0 0.0
    %4149 = vmatpush1.msra.mxu0 0.0
    %4150 = vmatprep.subr.mxu0 0.0
    %4151 = vmatpush1.msra.mxu0 0.0
    %4152 = vmatprep.subr.mxu0 0.0
    %4153 = vmatpush1.msra.mxu0 0.0
    %4154 = vmatprep.subr.mxu0 0.0
    %4155 = vmatpush1.msra.mxu0 0.0
    %4156 = vmatprep.subr.mxu0 0.0
    %4157 = vmatpush1.msra.mxu0 0.0
    %4158 = vmatprep.subr.mxu0 0.0
    %4159 = vmatpush1.msra.mxu0 0.0
    %4160 = vmatprep.subr.mxu0 0.0
    %4161 = vmatpush1.msra.mxu0 0.0
    %4162 = vmatprep.subr.mxu0 0.0
    %4163 = vmatpush1.msra.mxu0 0.0
    %4164 = vmatprep.subr.mxu0 0.0
    %4165 = vmatpush1.msra.mxu0 0.0
    %4166 = vmatprep.subr.mxu0 0.0
    %4167 = vmatpush1.msra.mxu0 0.0
    %4168 = vmatprep.subr.mxu0 0.0
    %4169 = vmatpush1.msra.mxu0 0.0
    %4170 = vmatprep.subr.mxu0 0.0
    %4171 = vmatpush1.msra.mxu0 0.0
    %4172 = vmatprep.subr.mxu0 0.0
    %4173 = vmatpush1.msra.mxu0 0.0
    %4174 = vmatprep.subr.mxu0 0.0
    %4175 = vmatpush1.msra.mxu0 0.0
    %4176 = vmatprep.subr.mxu0 0.0
    %4177 = vmatpush1.msra.mxu0 0.0
    %4178 = vmatprep.mubr.f32.mxu0 0.0
    %v4179 = vand.u32 %v4083, 4294901760
    %v4180 = vsub.f32 %v4083, %v4179
    %v4181 = vand.u32 %v4180, 4294901760
    %v4182 = vsub.f32 %v4180, %v4181
    %v4183 = vand.u32 %v4182, 4294901760
    %4184 = vmatmul.mubr.f32.gmra.mrb[0].mxu0 %v4183
    %v4185 = vpop.f32.mrb[0].mxu0
    %v4186 = vadd.f32 0.0, %v4185
    %v4187 = vpop.f32.mrb[0].mxu0
    %4188 = vmatprep.mubr.f32.mxu0 0.0
    %v4189 = vand.u32 %v4086, 4294901760
    %v4190 = vsub.f32 %v4086, %v4189
    %v4191 = vand.u32 %v4190, 4294901760
    %v4192 = vsub.f32 %v4190, %v4191
    %v4193 = vand.u32 %v4192, 4294901760
    %4194 = vmatmul.mubr.f32.gmra.mrb[0].mxu0 %v4193
    %v4195 = vpop.f32.mrb[0].mxu0
    %v4196 = vadd.f32 0.0, %v4195
    %v4197 = vpop.f32.mrb[0].mxu0
    %4198 = vmatprep.mubr.f32.mxu0 0.0
    %v4199 = vand.u32 %v4089, 4294901760
    %v4200 = vsub.f32 %v4089, %v4199
    %v4201 = vand.u32 %v4200, 4294901760
    %v4202 = vsub.f32 %v4200, %v4201
    %v4203 = vand.u32 %v4202, 4294901760
    %4204 = vmatmul.mubr.f32.gmra.mrb[0].mxu0 %v4203
    %v4205 = vpop.f32.mrb[0].mxu0
    %v4206 = vadd.f32 0.0, %v4205
    %v4207 = vpop.f32.mrb[0].mxu0
    %4208 = vmatprep.mubr.f32.mxu0 0.0
    %v4209 = vand.u32 %v4092, 4294901760
    %v4210 = vsub.f32 %v4092, %v4209
    %v4211 = vand.u32 %v4210, 4294901760
    %v4212 = vsub.f32 %v4210, %v4211
    %v4213 = vand.u32 %v4212, 4294901760
    %4214 = vmatmul.mubr.f32.gmra.mrb[0].mxu0 %v4213
    %v4215 = vpop.f32.mrb[0].mxu0
    %v4216 = vadd.f32 0.0, %v4215
    %v4217 = vpop.f32.mrb[0].mxu0
    %4218 = vmatprep.mubr.f32.mxu0 0.0
    %v4219 = vand.u32 %v4095, 4294901760
    %v4220 = vsub.f32 %v4095, %v4219
    %v4221 = vand.u32 %v4220, 4294901760
    %v4222 = vsub.f32 %v4220, %v4221
    %v4223 = vand.u32 %v4222, 4294901760
    %4224 = vmatmul.mubr.f32.gmra.mrb[0].mxu0 %v4223
    %v4225 = vpop.f32.mrb[0].mxu0
    %v4226 = vadd.f32 0.0, %v4225
    %v4227 = vpop.f32.mrb[0].mxu0
    %4228 = vmatprep.mubr.f32.mxu0 0.0
    %v4229 = vand.u32 %v4098, 4294901760
    %v4230 = vsub.f32 %v4098, %v4229
    %v4231 = vand.u32 %v4230, 4294901760
    %v4232 = vsub.f32 %v4230, %v4231
    %v4233 = vand.u32 %v4232, 4294901760
    %4234 = vmatmul.mubr.f32.gmra.mrb[0].mxu0 %v4233
    %v4235 = vpop.f32.mrb[0].mxu0
    %v4236 = vadd.f32 0.0, %v4235
    %v4237 = vpop.f32.mrb[0].mxu0
    %4238 = vmatprep.mubr.f32.mxu0 0.0
    %v4239 = vand.u32 %v4101, 4294901760
    %v4240 = vsub.f32 %v4101, %v4239
    %v4241 = vand.u32 %v4240, 4294901760
    %v4242 = vsub.f32 %v4240, %v4241
    %v4243 = vand.u32 %v4242, 4294901760
    %4244 = vmatmul.mubr.f32.gmra.mrb[0].mxu0 %v4243
    %v4245 = vpop.f32.mrb[0].mxu0
    %v4246 = vadd.f32 0.0, %v4245
    %v4247 = vpop.f32.mrb[0].mxu0
    %4248 = vmatprep.mubr.f32.mxu0 0.0
    %v4249 = vand.u32 %v4104, 4294901760
    %v4250 = vsub.f32 %v4104, %v4249
    %v4251 = vand.u32 %v4250, 4294901760
    %v4252 = vsub.f32 %v4250, %v4251
    %v4253 = vand.u32 %v4252, 4294901760
    %4254 = vmatmul.mubr.f32.gmra.mrb[0].mxu0 %v4253
    %v4255 = vpop.f32.mrb[0].mxu0
    %v4256 = vadd.f32 0.0, %v4255
    %v4257 = vpop.f32.mrb[0].mxu0
    %4258 = vdwg.mxu0
    %4259 = vmatprep.subr.mxu0 0.0
    %v4260 = vand.u32 %v3157, 4294901760
    %v4261 = vsub.f32 %v3157, %v4260
    %v4262 = vand.u32 %v4261, 4294901760
    %v4263 = vsub.f32 %v4261, %v4262
    %v4264 = vand.u32 %v4263, 4294901760
    %4265 = vmatpush1.msra.mxu0 %v4264
    %4266 = vmatprep.subr.mxu0 0.0
    %v4267 = vand.u32 %v3163, 4294901760
    %v4268 = vsub.f32 %v3163, %v4267
    %v4269 = vand.u32 %v4268, 4294901760
    %v4270 = vsub.f32 %v4268, %v4269
    %v4271 = vand.u32 %v4270, 4294901760
    %4272 = vmatpush1.msra.mxu0 %v4271
    %4273 = vmatprep.subr.mxu0 0.0
    %v4274 = vand.u32 %v3169, 4294901760
    %v4275 = vsub.f32 %v3169, %v4274
    %v4276 = vand.u32 %v4275, 4294901760
    %v4277 = vsub.f32 %v4275, %v4276
    %v4278 = vand.u32 %v4277, 4294901760
    %4279 = vmatpush1.msra.mxu0 %v4278
    %4280 = vmatprep.subr.mxu0 0.0
    %v4281 = vand.u32 %v3175, 4294901760
    %v4282 = vsub.f32 %v3175, %v4281
    %v4283 = vand.u32 %v4282, 4294901760
    %v4284 = vsub.f32 %v4282, %v4283
    %v4285 = vand.u32 %v4284, 4294901760
    %4286 = vmatpush1.msra.mxu0 %v4285
    %4287 = vmatprep.subr.mxu0 0.0
    %v4288 = vand.u32 %v3181, 4294901760
    %v4289 = vsub.f32 %v3181, %v4288
    %v4290 = vand.u32 %v4289, 4294901760
    %v4291 = vsub.f32 %v4289, %v4290
    %v4292 = vand.u32 %v4291, 4294901760
    %4293 = vmatpush1.msra.mxu0 %v4292
    %4294 = vmatprep.subr.mxu0 0.0
    %v4295 = vand.u32 %v3187, 4294901760
    %v4296 = vsub.f32 %v3187, %v4295
    %v4297 = vand.u32 %v4296, 4294901760
    %v4298 = vsub.f32 %v4296, %v4297
    %v4299 = vand.u32 %v4298, 4294901760
    %4300 = vmatpush1.msra.mxu0 %v4299
    %4301 = vmatprep.subr.mxu0 0.0
    %v4302 = vand.u32 %v3193, 4294901760
    %v4303 = vsub.f32 %v3193, %v4302
    %v4304 = vand.u32 %v4303, 4294901760
    %v4305 = vsub.f32 %v4303, %v4304
    %v4306 = vand.u32 %v4305, 4294901760
    %4307 = vmatpush1.msra.mxu0 %v4306
    %4308 = vmatprep.subr.mxu0 0.0
    %v4309 = vand.u32 %v3199, 4294901760
    %v4310 = vsub.f32 %v3199, %v4309
    %v4311 = vand.u32 %v4310, 4294901760
    %v4312 = vsub.f32 %v4310, %v4311
    %v4313 = vand.u32 %v4312, 4294901760
    %4314 = vmatpush1.msra.mxu0 %v4313
    %4315 = vmatprep.subr.mxu0 0.0
    %4316 = vmatpush1.msra.mxu0 0.0
    %4317 = vmatprep.subr.mxu0 0.0
    %4318 = vmatpush1.msra.mxu0 0.0
    %4319 = vmatprep.subr.mxu0 0.0
    %4320 = vmatpush1.msra.mxu0 0.0
    %4321 = vmatprep.subr.mxu0 0.0
    %4322 = vmatpush1.msra.mxu0 0.0
    %4323 = vmatprep.subr.mxu0 0.0
    %4324 = vmatpush1.msra.mxu0 0.0
    %4325 = vmatprep.subr.mxu0 0.0
    %4326 = vmatpush1.msra.mxu0 0.0
    %4327 = vmatprep.subr.mxu0 0.0
    %4328 = vmatpush1.msra.mxu0 0.0
    %4329 = vmatprep.subr.mxu0 0.0
    %4330 = vmatpush1.msra.mxu0 0.0
    %4331 = vmatprep.subr.mxu0 0.0
    %4332 = vmatpush1.msra.mxu0 0.0
    %4333 = vmatprep.subr.mxu0 0.0
    %4334 = vmatpush1.msra.mxu0 0.0
    %4335 = vmatprep.subr.mxu0 0.0
    %4336 = vmatpush1.msra.mxu0 0.0
    %4337 = vmatprep.subr.mxu0 0.0
    %4338 = vmatpush1.msra.mxu0 0.0
    %4339 = vmatprep.subr.mxu0 0.0
    %4340 = vmatpush1.msra.mxu0 0.0
    %4341 = vmatprep.subr.mxu0 0.0
    %4342 = vmatpush1.msra.mxu0 0.0
    %4343 = vmatprep.subr.mxu0 0.0
    %4344 = vmatpush1.msra.mxu0 0.0
    %4345 = vmatprep.subr.mxu0 0.0
    %4346 = vmatpush1.msra.mxu0 0.0
    %4347 = vmatprep.subr.mxu0 0.0
    %4348 = vmatpush1.msra.mxu0 0.0
    %4349 = vmatprep.subr.mxu0 0.0
    %4350 = vmatpush1.msra.mxu0 0.0
    %4351 = vmatprep.subr.mxu0 0.0
    %4352 = vmatpush1.msra.mxu0 0.0
    %4353 = vmatprep.subr.mxu0 0.0
    %4354 = vmatpush1.msra.mxu0 0.0
    %4355 = vmatprep.subr.mxu0 0.0
    %4356 = vmatpush1.msra.mxu0 0.0
    %4357 = vmatprep.subr.mxu0 0.0
    %4358 = vmatpush1.msra.mxu0 0.0
    %4359 = vmatprep.subr.mxu0 0.0
    %4360 = vmatpush1.msra.mxu0 0.0
    %4361 = vmatprep.subr.mxu0 0.0
    %4362 = vmatpush1.msra.mxu0 0.0
    %4363 = vmatprep.mubr.f32.mxu0 0.0
    %v4364 = vand.u32 %v4083, 4294901760
    %4365 = vmatmul.mubr.f32.gmra.mrb[0].mxu0 %v4364
    %v4366 = vpop.f32.mrb[0].mxu0
    %v4367 = vadd.f32 %v4186, %v4366
    %v4368 = vpop.f32.mrb[0].mxu0
    %4369 = vmatprep.mubr.f32.mxu0 0.0
    %v4370 = vand.u32 %v4086, 4294901760
    %4371 = vmatmul.mubr.f32.gmra.mrb[0].mxu0 %v4370
    %v4372 = vpop.f32.mrb[0].mxu0
    %v4373 = vadd.f32 %v4196, %v4372
    %v4374 = vpop.f32.mrb[0].mxu0
    %4375 = vmatprep.mubr.f32.mxu0 0.0
    %v4376 = vand.u32 %v4089, 4294901760
    %4377 = vmatmul.mubr.f32.gmra.mrb[0].mxu0 %v4376
    %v4378 = vpop.f32.mrb[0].mxu0
    %v4379 = vadd.f32 %v4206, %v4378
    %v4380 = vpop.f32.mrb[0].mxu0
    %4381 = vmatprep.mubr.f32.mxu0 0.0
    %v4382 = vand.u32 %v4092, 4294901760
    %4383 = vmatmul.mubr.f32.gmra.mrb[0].mxu0 %v4382
    %v4384 = vpop.f32.mrb[0].mxu0
    %v4385 = vadd.f32 %v4216, %v4384
    %v4386 = vpop.f32.mrb[0].mxu0
    %4387 = vmatprep.mubr.f32.mxu0 0.0
    %v4388 = vand.u32 %v4095, 4294901760
    %4389 = vmatmul.mubr.f32.gmra.mrb[0].mxu0 %v4388
    %v4390 = vpop.f32.mrb[0].mxu0
    %v4391 = vadd.f32 %v4226, %v4390
    %v4392 = vpop.f32.mrb[0].mxu0
    %4393 = vmatprep.mubr.f32.mxu0 0.0
    %v4394 = vand.u32 %v4098, 4294901760
    %4395 = vmatmul.mubr.f32.gmra.mrb[0].mxu0 %v4394
    %v4396 = vpop.f32.mrb[0].mxu0
    %v4397 = vadd.f32 %v4236, %v4396
    %v4398 = vpop.f32.mrb[0].mxu0
    %4399 = vmatprep.mubr.f32.mxu0 0.0
    %v4400 = vand.u32 %v4101, 4294901760
    %4401 = vmatmul.mubr.f32.gmra.mrb[0].mxu0 %v4400
    %v4402 = vpop.f32.mrb[0].mxu0
    %v4403 = vadd.f32 %v4246, %v4402
    %v4404 = vpop.f32.mrb[0].mxu0
    %4405 = vmatprep.mubr.f32.mxu0 0.0
    %v4406 = vand.u32 %v4104, 4294901760
    %4407 = vmatmul.mubr.f32.gmra.mrb[0].mxu0 %v4406
    %v4408 = vpop.f32.mrb[0].mxu0
    %v4409 = vadd.f32 %v4256, %v4408
    %v4410 = vpop.f32.mrb[0].mxu0
    %4411 = vdwg.mxu0
    %4412 = vmatprep.subr.mxu0 0.0
    %v4413 = vand.u32 %v3157, 4294901760
    %v4414 = vsub.f32 %v3157, %v4413
    %4415 = vmatpush1.msra.mxu0 %v4414
    %4416 = vmatprep.subr.mxu0 0.0
    %v4417 = vand.u32 %v3163, 4294901760
    %v4418 = vsub.f32 %v3163, %v4417
    %4419 = vmatpush1.msra.mxu0 %v4418
    %4420 = vmatprep.subr.mxu0 0.0
    %v4421 = vand.u32 %v3169, 4294901760
    %v4422 = vsub.f32 %v3169, %v4421
    %4423 = vmatpush1.msra.mxu0 %v4422
    %4424 = vmatprep.subr.mxu0 0.0
    %v4425 = vand.u32 %v3175, 4294901760
    %v4426 = vsub.f32 %v3175, %v4425
    %4427 = vmatpush1.msra.mxu0 %v4426
    %4428 = vmatprep.subr.mxu0 0.0
    %v4429 = vand.u32 %v3181, 4294901760
    %v4430 = vsub.f32 %v3181, %v4429
    %4431 = vmatpush1.msra.mxu0 %v4430
    %4432 = vmatprep.subr.mxu0 0.0
    %v4433 = vand.u32 %v3187, 4294901760
    %v4434 = vsub.f32 %v3187, %v4433
    %4435 = vmatpush1.msra.mxu0 %v4434
    %4436 = vmatprep.subr.mxu0 0.0
    %v4437 = vand.u32 %v3193, 4294901760
    %v4438 = vsub.f32 %v3193, %v4437
    %4439 = vmatpush1.msra.mxu0 %v4438
    %4440 = vmatprep.subr.mxu0 0.0
    %v4441 = vand.u32 %v3199, 4294901760
    %v4442 = vsub.f32 %v3199, %v4441
    %4443 = vmatpush1.msra.mxu0 %v4442
    %4444 = vmatprep.subr.mxu0 0.0
    %4445 = vmatpush1.msra.mxu0 0.0
    %4446 = vmatprep.subr.mxu0 0.0
    %4447 = vmatpush1.msra.mxu0 0.0
    %4448 = vmatprep.subr.mxu0 0.0
    %4449 = vmatpush1.msra.mxu0 0.0
    %4450 = vmatprep.subr.mxu0 0.0
    %4451 = vmatpush1.msra.mxu0 0.0
    %4452 = vmatprep.subr.mxu0 0.0
    %4453 = vmatpush1.msra.mxu0 0.0
    %4454 = vmatprep.subr.mxu0 0.0
    %4455 = vmatpush1.msra.mxu0 0.0
    %4456 = vmatprep.subr.mxu0 0.0
    %4457 = vmatpush1.msra.mxu0 0.0
    %4458 = vmatprep.subr.mxu0 0.0
    %4459 = vmatpush1.msra.mxu0 0.0
    %4460 = vmatprep.subr.mxu0 0.0
    %4461 = vmatpush1.msra.mxu0 0.0
    %4462 = vmatprep.subr.mxu0 0.0
    %4463 = vmatpush1.msra.mxu0 0.0
    %4464 = vmatprep.subr.mxu0 0.0
    %4465 = vmatpush1.msra.mxu0 0.0
    %4466 = vmatprep.subr.mxu0 0.0
    %4467 = vmatpush1.msra.mxu0 0.0
    %4468 = vmatprep.subr.mxu0 0.0
    %4469 = vmatpush1.msra.mxu0 0.0
    %4470 = vmatprep.subr.mxu0 0.0
    %4471 = vmatpush1.msra.mxu0 0.0
    %4472 = vmatprep.subr.mxu0 0.0
    %4473 = vmatpush1.msra.mxu0 0.0
    %4474 = vmatprep.subr.mxu0 0.0
    %4475 = vmatpush1.msra.mxu0 0.0
    %4476 = vmatprep.subr.mxu0 0.0
    %4477 = vmatpush1.msra.mxu0 0.0
    %4478 = vmatprep.subr.mxu0 0.0
    %4479 = vmatpush1.msra.mxu0 0.0
    %4480 = vmatprep.subr.mxu0 0.0
    %4481 = vmatpush1.msra.mxu0 0.0
    %4482 = vmatprep.subr.mxu0 0.0
    %4483 = vmatpush1.msra.mxu0 0.0
    %4484 = vmatprep.subr.mxu0 0.0
    %4485 = vmatpush1.msra.mxu0 0.0
    %4486 = vmatprep.subr.mxu0 0.0
    %4487 = vmatpush1.msra.mxu0 0.0
    %4488 = vmatprep.subr.mxu0 0.0
    %4489 = vmatpush1.msra.mxu0 0.0
    %4490 = vmatprep.subr.mxu0 0.0
    %4491 = vmatpush1.msra.mxu0 0.0
    %4492 = vmatprep.mubr.f32.mxu0 0.0
    %v4493 = vand.u32 %v4083, 4294901760
    %v4494 = vsub.f32 %v4083, %v4493
    %4495 = vmatmul.mubr.f32.gmra.mrb[0].mxu0 %v4494
    %v4496 = vpop.f32.mrb[0].mxu0
    %v4497 = vadd.f32 %v4367, %v4496
    %v4498 = vpop.f32.mrb[0].mxu0
    %4499 = vmatprep.mubr.f32.mxu0 0.0
    %v4500 = vand.u32 %v4086, 4294901760
    %v4501 = vsub.f32 %v4086, %v4500
    %4502 = vmatmul.mubr.f32.gmra.mrb[0].mxu0 %v4501
    %v4503 = vpop.f32.mrb[0].mxu0
    %v4504 = vadd.f32 %v4373, %v4503
    %v4505 = vpop.f32.mrb[0].mxu0
    %4506 = vmatprep.mubr.f32.mxu0 0.0
    %v4507 = vand.u32 %v4089, 4294901760
    %v4508 = vsub.f32 %v4089, %v4507
    %4509 = vmatmul.mubr.f32.gmra.mrb[0].mxu0 %v4508
    %v4510 = vpop.f32.mrb[0].mxu0
    %v4511 = vadd.f32 %v4379, %v4510
    %v4512 = vpop.f32.mrb[0].mxu0
    %4513 = vmatprep.mubr.f32.mxu0 0.0
    %v4514 = vand.u32 %v4092, 4294901760
    %v4515 = vsub.f32 %v4092, %v4514
    %4516 = vmatmul.mubr.f32.gmra.mrb[0].mxu0 %v4515
    %v4517 = vpop.f32.mrb[0].mxu0
    %v4518 = vadd.f32 %v4385, %v4517
    %v4519 = vpop.f32.mrb[0].mxu0
    %4520 = vmatprep.mubr.f32.mxu0 0.0
    %v4521 = vand.u32 %v4095, 4294901760
    %v4522 = vsub.f32 %v4095, %v4521
    %4523 = vmatmul.mubr.f32.gmra.mrb[0].mxu0 %v4522
    %v4524 = vpop.f32.mrb[0].mxu0
    %v4525 = vadd.f32 %v4391, %v4524
    %v4526 = vpop.f32.mrb[0].mxu0
    %4527 = vmatprep.mubr.f32.mxu0 0.0
    %v4528 = vand.u32 %v4098, 4294901760
    %v4529 = vsub.f32 %v4098, %v4528
    %4530 = vmatmul.mubr.f32.gmra.mrb[0].mxu0 %v4529
    %v4531 = vpop.f32.mrb[0].mxu0
    %v4532 = vadd.f32 %v4397, %v4531
    %v4533 = vpop.f32.mrb[0].mxu0
    %4534 = vmatprep.mubr.f32.mxu0 0.0
    %v4535 = vand.u32 %v4101, 4294901760
    %v4536 = vsub.f32 %v4101, %v4535
    %4537 = vmatmul.mubr.f32.gmra.mrb[0].mxu0 %v4536
    %v4538 = vpop.f32.mrb[0].mxu0
    %v4539 = vadd.f32 %v4403, %v4538
    %v4540 = vpop.f32.mrb[0].mxu0
    %4541 = vmatprep.mubr.f32.mxu0 0.0
    %v4542 = vand.u32 %v4104, 4294901760
    %v4543 = vsub.f32 %v4104, %v4542
    %4544 = vmatmul.mubr.f32.gmra.mrb[0].mxu0 %v4543
    %v4545 = vpop.f32.mrb[0].mxu0
    %v4546 = vadd.f32 %v4409, %v4545
    %v4547 = vpop.f32.mrb[0].mxu0
    %4548 = vdwg.mxu0
    %4549 = vmatprep.subr.mxu0 0.0
    %v4550 = vand.u32 %v3157, 4294901760
    %4551 = vmatpush1.msra.mxu0 %v4550
    %4552 = vmatprep.subr.mxu0 0.0
    %v4553 = vand.u32 %v3163, 4294901760
    %4554 = vmatpush1.msra.mxu0 %v4553
    %4555 = vmatprep.subr.mxu0 0.0
    %v4556 = vand.u32 %v3169, 4294901760
    %4557 = vmatpush1.msra.mxu0 %v4556
    %4558 = vmatprep.subr.mxu0 0.0
    %v4559 = vand.u32 %v3175, 4294901760
    %4560 = vmatpush1.msra.mxu0 %v4559
    %4561 = vmatprep.subr.mxu0 0.0
    %v4562 = vand.u32 %v3181, 4294901760
    %4563 = vmatpush1.msra.mxu0 %v4562
    %4564 = vmatprep.subr.mxu0 0.0
    %v4565 = vand.u32 %v3187, 4294901760
    %4566 = vmatpush1.msra.mxu0 %v4565
    %4567 = vmatprep.subr.mxu0 0.0
    %v4568 = vand.u32 %v3193, 4294901760
    %4569 = vmatpush1.msra.mxu0 %v4568
    %4570 = vmatprep.subr.mxu0 0.0
    %v4571 = vand.u32 %v3199, 4294901760
    %4572 = vmatpush1.msra.mxu0 %v4571
    %4573 = vmatprep.subr.mxu0 0.0
    %4574 = vmatpush1.msra.mxu0 0.0
    %4575 = vmatprep.subr.mxu0 0.0
    %4576 = vmatpush1.msra.mxu0 0.0
    %4577 = vmatprep.subr.mxu0 0.0
    %4578 = vmatpush1.msra.mxu0 0.0
    %4579 = vmatprep.subr.mxu0 0.0
    %4580 = vmatpush1.msra.mxu0 0.0
    %4581 = vmatprep.subr.mxu0 0.0
    %4582 = vmatpush1.msra.mxu0 0.0
    %4583 = vmatprep.subr.mxu0 0.0
    %4584 = vmatpush1.msra.mxu0 0.0
    %4585 = vmatprep.subr.mxu0 0.0
    %4586 = vmatpush1.msra.mxu0 0.0
    %4587 = vmatprep.subr.mxu0 0.0
    %4588 = vmatpush1.msra.mxu0 0.0
    %4589 = vmatprep.subr.mxu0 0.0
    %4590 = vmatpush1.msra.mxu0 0.0
    %4591 = vmatprep.subr.mxu0 0.0
    %4592 = vmatpush1.msra.mxu0 0.0
    %4593 = vmatprep.subr.mxu0 0.0
    %4594 = vmatpush1.msra.mxu0 0.0
    %4595 = vmatprep.subr.mxu0 0.0
    %4596 = vmatpush1.msra.mxu0 0.0
    %4597 = vmatprep.subr.mxu0 0.0
    %4598 = vmatpush1.msra.mxu0 0.0
    %4599 = vmatprep.subr.mxu0 0.0
    %4600 = vmatpush1.msra.mxu0 0.0
    %4601 = vmatprep.subr.mxu0 0.0
    %4602 = vmatpush1.msra.mxu0 0.0
    %4603 = vmatprep.subr.mxu0 0.0
    %4604 = vmatpush1.msra.mxu0 0.0
    %4605 = vmatprep.subr.mxu0 0.0
    %4606 = vmatpush1.msra.mxu0 0.0
    %4607 = vmatprep.subr.mxu0 0.0
    %4608 = vmatpush1.msra.mxu0 0.0
    %4609 = vmatprep.subr.mxu0 0.0
    %4610 = vmatpush1.msra.mxu0 0.0
    %4611 = vmatprep.subr.mxu0 0.0
    %4612 = vmatpush1.msra.mxu0 0.0
    %4613 = vmatprep.subr.mxu0 0.0
    %4614 = vmatpush1.msra.mxu0 0.0
    %4615 = vmatprep.subr.mxu0 0.0
    %4616 = vmatpush1.msra.mxu0 0.0
    %4617 = vmatprep.subr.mxu0 0.0
    %4618 = vmatpush1.msra.mxu0 0.0
    %4619 = vmatprep.subr.mxu0 0.0
    %4620 = vmatpush1.msra.mxu0 0.0
    %4621 = vmatprep.mubr.f32.mxu0 0.0
    %v4622 = vand.u32 %v4083, 4294901760
    %v4623 = vsub.f32 %v4083, %v4622
    %v4624 = vand.u32 %v4623, 4294901760
    %4625 = vmatmul.mubr.f32.gmra.mrb[0].mxu0 %v4624
    %v4626 = vpop.f32.mrb[0].mxu0
    %v4627 = vadd.f32 %v4497, %v4626
    %v4628 = vpop.f32.mrb[0].mxu0
    %4629 = vmatprep.mubr.f32.mxu0 0.0
    %v4630 = vand.u32 %v4086, 4294901760
    %v4631 = vsub.f32 %v4086, %v4630
    %v4632 = vand.u32 %v4631, 4294901760
    %4633 = vmatmul.mubr.f32.gmra.mrb[0].mxu0 %v4632
    %v4634 = vpop.f32.mrb[0].mxu0
    %v4635 = vadd.f32 %v4504, %v4634
    %v4636 = vpop.f32.mrb[0].mxu0
    %4637 = vmatprep.mubr.f32.mxu0 0.0
    %v4638 = vand.u32 %v4089, 4294901760
    %v4639 = vsub.f32 %v4089, %v4638
    %v4640 = vand.u32 %v4639, 4294901760
    %4641 = vmatmul.mubr.f32.gmra.mrb[0].mxu0 %v4640
    %v4642 = vpop.f32.mrb[0].mxu0
    %v4643 = vadd.f32 %v4511, %v4642
    %v4644 = vpop.f32.mrb[0].mxu0
    %4645 = vmatprep.mubr.f32.mxu0 0.0
    %v4646 = vand.u32 %v4092, 4294901760
    %v4647 = vsub.f32 %v4092, %v4646
    %v4648 = vand.u32 %v4647, 4294901760
    %4649 = vmatmul.mubr.f32.gmra.mrb[0].mxu0 %v4648
    %v4650 = vpop.f32.mrb[0].mxu0
    %v4651 = vadd.f32 %v4518, %v4650
    %v4652 = vpop.f32.mrb[0].mxu0
    %4653 = vmatprep.mubr.f32.mxu0 0.0
    %v4654 = vand.u32 %v4095, 4294901760
    %v4655 = vsub.f32 %v4095, %v4654
    %v4656 = vand.u32 %v4655, 4294901760
    %4657 = vmatmul.mubr.f32.gmra.mrb[0].mxu0 %v4656
    %v4658 = vpop.f32.mrb[0].mxu0
    %v4659 = vadd.f32 %v4525, %v4658
    %v4660 = vpop.f32.mrb[0].mxu0
    %4661 = vmatprep.mubr.f32.mxu0 0.0
    %v4662 = vand.u32 %v4098, 4294901760
    %v4663 = vsub.f32 %v4098, %v4662
    %v4664 = vand.u32 %v4663, 4294901760
    %4665 = vmatmul.mubr.f32.gmra.mrb[0].mxu0 %v4664
    %v4666 = vpop.f32.mrb[0].mxu0
    %v4667 = vadd.f32 %v4532, %v4666
    %v4668 = vpop.f32.mrb[0].mxu0
    %4669 = vmatprep.mubr.f32.mxu0 0.0
    %v4670 = vand.u32 %v4101, 4294901760
    %v4671 = vsub.f32 %v4101, %v4670
    %v4672 = vand.u32 %v4671, 4294901760
    %4673 = vmatmul.mubr.f32.gmra.mrb[0].mxu0 %v4672
    %v4674 = vpop.f32.mrb[0].mxu0
    %v4675 = vadd.f32 %v4539, %v4674
    %v4676 = vpop.f32.mrb[0].mxu0
    %4677 = vmatprep.mubr.f32.mxu0 0.0
    %v4678 = vand.u32 %v4104, 4294901760
    %v4679 = vsub.f32 %v4104, %v4678
    %v4680 = vand.u32 %v4679, 4294901760
    %4681 = vmatmul.mubr.f32.gmra.mrb[0].mxu0 %v4680
    %v4682 = vpop.f32.mrb[0].mxu0
    %v4683 = vadd.f32 %v4546, %v4682
    %v4684 = vpop.f32.mrb[0].mxu0
    %4685 = vdwg.mxu0
    %4686 = vmatprep.subr.mxu0 0.0
    %v4687 = vand.u32 %v3157, 4294901760
    %v4688 = vsub.f32 %v3157, %v4687
    %v4689 = vand.u32 %v4688, 4294901760
    %4690 = vmatpush1.msra.mxu0 %v4689
    %4691 = vmatprep.subr.mxu0 0.0
    %v4692 = vand.u32 %v3163, 4294901760
    %v4693 = vsub.f32 %v3163, %v4692
    %v4694 = vand.u32 %v4693, 4294901760
    %4695 = vmatpush1.msra.mxu0 %v4694
    %4696 = vmatprep.subr.mxu0 0.0
    %v4697 = vand.u32 %v3169, 4294901760
    %v4698 = vsub.f32 %v3169, %v4697
    %v4699 = vand.u32 %v4698, 4294901760
    %4700 = vmatpush1.msra.mxu0 %v4699
    %4701 = vmatprep.subr.mxu0 0.0
    %v4702 = vand.u32 %v3175, 4294901760
    %v4703 = vsub.f32 %v3175, %v4702
    %v4704 = vand.u32 %v4703, 4294901760
    %4705 = vmatpush1.msra.mxu0 %v4704
    %4706 = vmatprep.subr.mxu0 0.0
    %v4707 = vand.u32 %v3181, 4294901760
    %v4708 = vsub.f32 %v3181, %v4707
    %v4709 = vand.u32 %v4708, 4294901760
    %4710 = vmatpush1.msra.mxu0 %v4709
    %4711 = vmatprep.subr.mxu0 0.0
    %v4712 = vand.u32 %v3187, 4294901760
    %v4713 = vsub.f32 %v3187, %v4712
    %v4714 = vand.u32 %v4713, 4294901760
    %4715 = vmatpush1.msra.mxu0 %v4714
    %4716 = vmatprep.subr.mxu0 0.0
    %v4717 = vand.u32 %v3193, 4294901760
    %v4718 = vsub.f32 %v3193, %v4717
    %v4719 = vand.u32 %v4718, 4294901760
    %4720 = vmatpush1.msra.mxu0 %v4719
    %4721 = vmatprep.subr.mxu0 0.0
    %v4722 = vand.u32 %v3199, 4294901760
    %v4723 = vsub.f32 %v3199, %v4722
    %v4724 = vand.u32 %v4723, 4294901760
    %4725 = vmatpush1.msra.mxu0 %v4724
    %4726 = vmatprep.subr.mxu0 0.0
    %4727 = vmatpush1.msra.mxu0 0.0
    %4728 = vmatprep.subr.mxu0 0.0
    %4729 = vmatpush1.msra.mxu0 0.0
    %4730 = vmatprep.subr.mxu0 0.0
    %4731 = vmatpush1.msra.mxu0 0.0
    %4732 = vmatprep.subr.mxu0 0.0
    %4733 = vmatpush1.msra.mxu0 0.0
    %4734 = vmatprep.subr.mxu0 0.0
    %4735 = vmatpush1.msra.mxu0 0.0
    %4736 = vmatprep.subr.mxu0 0.0
    %4737 = vmatpush1.msra.mxu0 0.0
    %4738 = vmatprep.subr.mxu0 0.0
    %4739 = vmatpush1.msra.mxu0 0.0
    %4740 = vmatprep.subr.mxu0 0.0
    %4741 = vmatpush1.msra.mxu0 0.0
    %4742 = vmatprep.subr.mxu0 0.0
    %4743 = vmatpush1.msra.mxu0 0.0
    %4744 = vmatprep.subr.mxu0 0.0
    %4745 = vmatpush1.msra.mxu0 0.0
    %4746 = vmatprep.subr.mxu0 0.0
    %4747 = vmatpush1.msra.mxu0 0.0
    %4748 = vmatprep.subr.mxu0 0.0
    %4749 = vmatpush1.msra.mxu0 0.0
    %4750 = vmatprep.subr.mxu0 0.0
    %4751 = vmatpush1.msra.mxu0 0.0
    %4752 = vmatprep.subr.mxu0 0.0
    %4753 = vmatpush1.msra.mxu0 0.0
    %4754 = vmatprep.subr.mxu0 0.0
    %4755 = vmatpush1.msra.mxu0 0.0
    %4756 = vmatprep.subr.mxu0 0.0
    %4757 = vmatpush1.msra.mxu0 0.0
    %4758 = vmatprep.subr.mxu0 0.0
    %4759 = vmatpush1.msra.mxu0 0.0
    %4760 = vmatprep.subr.mxu0 0.0
    %4761 = vmatpush1.msra.mxu0 0.0
    %4762 = vmatprep.subr.mxu0 0.0
    %4763 = vmatpush1.msra.mxu0 0.0
    %4764 = vmatprep.subr.mxu0 0.0
    %4765 = vmatpush1.msra.mxu0 0.0
    %4766 = vmatprep.subr.mxu0 0.0
    %4767 = vmatpush1.msra.mxu0 0.0
    %4768 = vmatprep.subr.mxu0 0.0
    %4769 = vmatpush1.msra.mxu0 0.0
    %4770 = vmatprep.subr.mxu0 0.0
    %4771 = vmatpush1.msra.mxu0 0.0
    %4772 = vmatprep.subr.mxu0 0.0
    %4773 = vmatpush1.msra.mxu0 0.0
    %4774 = vmatprep.mubr.f32.mxu0 0.0
    %v4775 = vand.u32 %v4083, 4294901760
    %4776 = vmatmul.mubr.f32.gmra.mrb[0].mxu0 %v4775
    %v4777 = vpop.f32.mrb[0].mxu0
    %v4778 = vadd.f32 %v4627, %v4777
    %v4779 = vpop.f32.mrb[0].mxu0
    %4780 = vmatprep.mubr.f32.mxu0 0.0
    %v4781 = vand.u32 %v4086, 4294901760
    %4782 = vmatmul.mubr.f32.gmra.mrb[0].mxu0 %v4781
    %v4783 = vpop.f32.mrb[0].mxu0
    %v4784 = vadd.f32 %v4635, %v4783
    %v4785 = vpop.f32.mrb[0].mxu0
    %4786 = vmatprep.mubr.f32.mxu0 0.0
    %v4787 = vand.u32 %v4089, 4294901760
    %4788 = vmatmul.mubr.f32.gmra.mrb[0].mxu0 %v4787
    %v4789 = vpop.f32.mrb[0].mxu0
    %v4790 = vadd.f32 %v4643, %v4789
    %v4791 = vpop.f32.mrb[0].mxu0
    %4792 = vmatprep.mubr.f32.mxu0 0.0
    %v4793 = vand.u32 %v4092, 4294901760
    %4794 = vmatmul.mubr.f32.gmra.mrb[0].mxu0 %v4793
    %v4795 = vpop.f32.mrb[0].mxu0
    %v4796 = vadd.f32 %v4651, %v4795
    %v4797 = vpop.f32.mrb[0].mxu0
    %4798 = vmatprep.mubr.f32.mxu0 0.0
    %v4799 = vand.u32 %v4095, 4294901760
    %4800 = vmatmul.mubr.f32.gmra.mrb[0].mxu0 %v4799
    %v4801 = vpop.f32.mrb[0].mxu0
    %v4802 = vadd.f32 %v4659, %v4801
    %v4803 = vpop.f32.mrb[0].mxu0
    %4804 = vmatprep.mubr.f32.mxu0 0.0
    %v4805 = vand.u32 %v4098, 4294901760
    %4806 = vmatmul.mubr.f32.gmra.mrb[0].mxu0 %v4805
    %v4807 = vpop.f32.mrb[0].mxu0
    %v4808 = vadd.f32 %v4667, %v4807
    %v4809 = vpop.f32.mrb[0].mxu0
    %4810 = vmatprep.mubr.f32.mxu0 0.0
    %v4811 = vand.u32 %v4101, 4294901760
    %4812 = vmatmul.mubr.f32.gmra.mrb[0].mxu0 %v4811
    %v4813 = vpop.f32.mrb[0].mxu0
    %v4814 = vadd.f32 %v4675, %v4813
    %v4815 = vpop.f32.mrb[0].mxu0
    %4816 = vmatprep.mubr.f32.mxu0 0.0
    %v4817 = vand.u32 %v4104, 4294901760
    %4818 = vmatmul.mubr.f32.gmra.mrb[0].mxu0 %v4817
    %v4819 = vpop.f32.mrb[0].mxu0
    %v4820 = vadd.f32 %v4683, %v4819
    %v4821 = vpop.f32.mrb[0].mxu0
    %4822 = vdwg.mxu0
    %4823 = vmatprep.subr.mxu0 0.0
    %v4824 = vand.u32 %v3157, 4294901760
    %4825 = vmatpush1.msra.mxu0 %v4824
    %4826 = vmatprep.subr.mxu0 0.0
    %v4827 = vand.u32 %v3163, 4294901760
    %4828 = vmatpush1.msra.mxu0 %v4827
    %4829 = vmatprep.subr.mxu0 0.0
    %v4830 = vand.u32 %v3169, 4294901760
    %4831 = vmatpush1.msra.mxu0 %v4830
    %4832 = vmatprep.subr.mxu0 0.0
    %v4833 = vand.u32 %v3175, 4294901760
    %4834 = vmatpush1.msra.mxu0 %v4833
    %4835 = vmatprep.subr.mxu0 0.0
    %v4836 = vand.u32 %v3181, 4294901760
    %4837 = vmatpush1.msra.mxu0 %v4836
    %4838 = vmatprep.subr.mxu0 0.0
    %v4839 = vand.u32 %v3187, 4294901760
    %4840 = vmatpush1.msra.mxu0 %v4839
    %4841 = vmatprep.subr.mxu0 0.0
    %v4842 = vand.u32 %v3193, 4294901760
    %4843 = vmatpush1.msra.mxu0 %v4842
    %4844 = vmatprep.subr.mxu0 0.0
    %v4845 = vand.u32 %v3199, 4294901760
    %4846 = vmatpush1.msra.mxu0 %v4845
    %4847 = vmatprep.subr.mxu0 0.0
    %4848 = vmatpush1.msra.mxu0 0.0
    %4849 = vmatprep.subr.mxu0 0.0
    %4850 = vmatpush1.msra.mxu0 0.0
    %4851 = vmatprep.subr.mxu0 0.0
    %4852 = vmatpush1.msra.mxu0 0.0
    %4853 = vmatprep.subr.mxu0 0.0
    %4854 = vmatpush1.msra.mxu0 0.0
    %4855 = vmatprep.subr.mxu0 0.0
    %4856 = vmatpush1.msra.mxu0 0.0
    %4857 = vmatprep.subr.mxu0 0.0
    %4858 = vmatpush1.msra.mxu0 0.0
    %4859 = vmatprep.subr.mxu0 0.0
    %4860 = vmatpush1.msra.mxu0 0.0
    %4861 = vmatprep.subr.mxu0 0.0
    %4862 = vmatpush1.msra.mxu0 0.0
    %4863 = vmatprep.subr.mxu0 0.0
    %4864 = vmatpush1.msra.mxu0 0.0
    %4865 = vmatprep.subr.mxu0 0.0
    %4866 = vmatpush1.msra.mxu0 0.0
    %4867 = vmatprep.subr.mxu0 0.0
    %4868 = vmatpush1.msra.mxu0 0.0
    %4869 = vmatprep.subr.mxu0 0.0
    %4870 = vmatpush1.msra.mxu0 0.0
    %4871 = vmatprep.subr.mxu0 0.0
    %4872 = vmatpush1.msra.mxu0 0.0
    %4873 = vmatprep.subr.mxu0 0.0
    %4874 = vmatpush1.msra.mxu0 0.0
    %4875 = vmatprep.subr.mxu0 0.0
    %4876 = vmatpush1.msra.mxu0 0.0
    %4877 = vmatprep.subr.mxu0 0.0
    %4878 = vmatpush1.msra.mxu0 0.0
    %4879 = vmatprep.subr.mxu0 0.0
    %4880 = vmatpush1.msra.mxu0 0.0
    %4881 = vmatprep.subr.mxu0 0.0
    %4882 = vmatpush1.msra.mxu0 0.0
    %4883 = vmatprep.subr.mxu0 0.0
    %4884 = vmatpush1.msra.mxu0 0.0
    %4885 = vmatprep.subr.mxu0 0.0
    %4886 = vmatpush1.msra.mxu0 0.0
    %4887 = vmatprep.subr.mxu0 0.0
    %4888 = vmatpush1.msra.mxu0 0.0
    %4889 = vmatprep.subr.mxu0 0.0
    %4890 = vmatpush1.msra.mxu0 0.0
    %4891 = vmatprep.subr.mxu0 0.0
    %4892 = vmatpush1.msra.mxu0 0.0
    %4893 = vmatprep.subr.mxu0 0.0
    %4894 = vmatpush1.msra.mxu0 0.0
    %4895 = vmatprep.mubr.f32.mxu0 0.0
    %v4896 = vand.u32 %v4083, 4294901760
    %4897 = vmatmul.mubr.f32.gmra.mrb[0].mxu0 %v4896
    %v4898 = vpop.f32.mrb[0].mxu0
    %v4899 = vadd.f32 %v4778, %v4898
    %v4900 = vpop.f32.mrb[0].mxu0
    %4901 = vmatprep.mubr.f32.mxu0 0.0
    %v4902 = vand.u32 %v4086, 4294901760
    %4903 = vmatmul.mubr.f32.gmra.mrb[0].mxu0 %v4902
    %v4904 = vpop.f32.mrb[0].mxu0
    %v4905 = vadd.f32 %v4784, %v4904
    %v4906 = vpop.f32.mrb[0].mxu0
    %4907 = vmatprep.mubr.f32.mxu0 0.0
    %v4908 = vand.u32 %v4089, 4294901760
    %4909 = vmatmul.mubr.f32.gmra.mrb[0].mxu0 %v4908
    %v4910 = vpop.f32.mrb[0].mxu0
    %v4911 = vadd.f32 %v4790, %v4910
    %v4912 = vpop.f32.mrb[0].mxu0
    %4913 = vmatprep.mubr.f32.mxu0 0.0
    %v4914 = vand.u32 %v4092, 4294901760
    %4915 = vmatmul.mubr.f32.gmra.mrb[0].mxu0 %v4914
    %v4916 = vpop.f32.mrb[0].mxu0
    %v4917 = vadd.f32 %v4796, %v4916
    %v4918 = vpop.f32.mrb[0].mxu0
    %4919 = vmatprep.mubr.f32.mxu0 0.0
    %v4920 = vand.u32 %v4095, 4294901760
    %4921 = vmatmul.mubr.f32.gmra.mrb[0].mxu0 %v4920
    %v4922 = vpop.f32.mrb[0].mxu0
    %v4923 = vadd.f32 %v4802, %v4922
    %v4924 = vpop.f32.mrb[0].mxu0
    %4925 = vmatprep.mubr.f32.mxu0 0.0
    %v4926 = vand.u32 %v4098, 4294901760
    %4927 = vmatmul.mubr.f32.gmra.mrb[0].mxu0 %v4926
    %v4928 = vpop.f32.mrb[0].mxu0
    %v4929 = vadd.f32 %v4808, %v4928
    %v4930 = vpop.f32.mrb[0].mxu0
    %4931 = vmatprep.mubr.f32.mxu0 0.0
    %v4932 = vand.u32 %v4101, 4294901760
    %4933 = vmatmul.mubr.f32.gmra.mrb[0].mxu0 %v4932
    %v4934 = vpop.f32.mrb[0].mxu0
    %v4935 = vadd.f32 %v4814, %v4934
    %v4936 = vpop.f32.mrb[0].mxu0
    %4937 = vmatprep.mubr.f32.mxu0 0.0
    %v4938 = vand.u32 %v4104, 4294901760
    %4939 = vmatmul.mubr.f32.gmra.mrb[0].mxu0 %v4938
    %v4940 = vpop.f32.mrb[0].mxu0
    %v4941 = vadd.f32 %v4820, %v4940
    %v4942 = vpop.f32.mrb[0].mxu0
    %4943 = vdwg.mxu0
    %v4944 = vsub.f32 %v4037, %v4899
    %v4945 = vsub.f32 %v4043, %v4905
    %v4946 = vsub.f32 %v4049, %v4911
    %v4947 = vsub.f32 %v4055, %v4917
    %v4948 = vsub.f32 %v4061, %v4923
    %v4949 = vsub.f32 %v4067, %v4929
    %v4950 = vsub.f32 %v4073, %v4935
    %v4951 = vsub.f32 %v4079, %v4941
    %4952 = vst.msk [vmem:[#allocation2] sm:$0xff] %vm105, %v4944
    %4953 = vst.msk [vmem:[#allocation2 + $0x8] sm:$0xff] %vm105, %v4945
    %4954 = vst.msk [vmem:[#allocation2 + $0x10] sm:$0xff] %vm105, %v4946
    %4955 = vst.msk [vmem:[#allocation2 + $0x18] sm:$0xff] %vm105, %v4947
    %4956 = vst.msk [vmem:[#allocation2 + $0x20] sm:$0xff] %vm105, %v4948
    %4957 = vst.msk [vmem:[#allocation2 + $0x28] sm:$0xff] %vm105, %v4949
    %4958 = vst.msk [vmem:[#allocation2 + $0x30] sm:$0xff] %vm105, %v4950
    %4959 = vst.msk [vmem:[#allocation2 + $0x38] sm:$0xff] %vm105, %v4951
    // Predicated region
    $region18: #{kernel_wall_forward.1} parent=1 // pred_check
      _
    $region19: #{kernel_wall_forward.1} parent=1 // pred_check_branch
      %4961 = sbr.rel (0) target = $region21
    $region20: #{kernel_wall_forward.1} parent=1 // pred_region
      %s4963 = ssub.s32 1024, 1024
      %4964 = vsyncadd [#allocation3], %s4963
      %s4965 = sshll.u32 [#allocation2], 4
      %s4966 = int_to_ptr.vmem [resolvable:$true] %s4965
      %4971 = dma.vmem_to_hbm [thread:$0]  %s4966, 1024, %s4, [#allocation3], 128, 128, 8
    $region21: #{kernel_wall_forward.1} parent=1 // pred_fallthru
      _
    // Predicated region
    $region22: #{kernel_wall_forward.1} parent=1 // pred_check
      _
    $region23: #{kernel_wall_forward.1} parent=1 // pred_check_branch
      %4973 = sbr.rel (0) target = $region25
    $region24: #{kernel_wall_forward.1} parent=1 // pred_region
      %4974 = dma.done [#allocation3], 1024
    $region25: #{kernel_wall_forward.1} parent=1 // pred_fallthru
      _
    %4975 = vsyncpa [#allocation3], 1

</llo_original>
